<compile_context>
chip_gen: v7x
topology: tpu7x:2x2x1
jax: 0.10.0
libtpu: 0.0.40
codegen_flags: <defaults>
</compile_context>

<pallas_src>
import math
from functools import partial

import jax
import jax.numpy as jnp
from jax.experimental import pallas as pl
from jax.experimental.pallas import tpu as pltpu


# ----------------------------- Pallas kernel -------------------------------

def _layernorm(t, gamma, beta, eps=1e-6):
    mu = jnp.mean(t, axis=-1, keepdims=True)
    var = jnp.mean((t - mu) ** 2, axis=-1, keepdims=True)
    return (t - mu) * jax.lax.rsqrt(var + eps) * gamma + beta


def _encoder_kernel(x_ref, pe_ref, wqkv_ref, wo_ref, w1_ref, w2_ref,
                    vecs_ref, lnf_ref, o_ref, *, batch, nhead):
    """Whole encoder (PE add + L pre-norm layers + final LN) in one invocation."""
    BS, D = x_ref.shape
    B = batch
    S = BS // B
    H = nhead
    dk = D // H
    L = wqkv_ref.shape[0]
    dff = w1_ref.shape[2]
    scale = 1.0 / math.sqrt(dk)

    # Positional-encoding add; residual stream carried in values (f32).
    xf = x_ref[...] + pe_ref[...]                                   # (B*S, D)

    for l in range(L):                       # static unroll: one straight-line region
        vecs = vecs_ref[l]                   # (8, P) packed per-layer vectors
        bqkv = vecs[0:1, :3 * D]
        b1 = vecs[1:2, :dff]
        bo = vecs[2:3, :D]
        b2 = vecs[3:4, :D]
        g1, be1 = vecs[4:5, :D], vecs[5:6, :D]
        g2, be2 = vecs[6:7, :D], vecs[7:8, :D]

        # ---- pre-norm multi-head self-attention sublayer ----
        xn = _layernorm(xf, g1, be1).astype(jnp.bfloat16)
        qkv = jnp.dot(xn, wqkv_ref[l],
                      preferred_element_type=jnp.float32) + bqkv    # (BS, 3D) f32
        qkv_b = qkv.astype(jnp.bfloat16).reshape(B, S, 3 * D)       # leading split (free)

        ctx_heads = []
        # Heads are static lane slices (no (S,H,dk) reshape relayout); batch is a
        # single dot_general batch dim, so there is no python-over-batch loop and
        # no row-wise concatenate.
        for h in range(H):
            qh = qkv_b[:, :, h * dk:(h + 1) * dk]                   # (B, S, dk)
            kh = qkv_b[:, :, D + h * dk:D + (h + 1) * dk]
            vh = qkv_b[:, :, 2 * D + h * dk:2 * D + (h + 1) * dk]
            s = jnp.einsum('bqd,bkd->bqk', qh, kh,
                           preferred_element_type=jnp.float32) * scale
            m = jnp.max(s, axis=-1, keepdims=True)
            p = jnp.exp(s - m)
            p = p * pl.reciprocal(jnp.sum(p, axis=-1, keepdims=True), approx=True)
            ctx_heads.append(jnp.einsum('bqk,bkd->bqd', p.astype(jnp.bfloat16), vh,
                                        preferred_element_type=jnp.float32))
        ctx = jnp.concatenate(ctx_heads, axis=-1)                   # (B, S, D) f32
        ctx = ctx.reshape(BS, D).astype(jnp.bfloat16)               # leading merge (free)

        attn = jnp.dot(ctx, wo_ref[l], preferred_element_type=jnp.float32) + bo
        xf = xf + attn

        # ---- pre-norm feed-forward sublayer (ReLU) ----
        xn2 = _layernorm(xf, g2, be2).astype(jnp.bfloat16)
        h1 = jnp.dot(xn2, w1_ref[l], preferred_element_type=jnp.float32) + b1
        h1 = jnp.maximum(h1, 0.0).astype(jnp.bfloat16)
        ff = jnp.dot(h1, w2_ref[l], preferred_element_type=jnp.float32) + b2
        xf = xf + ff

    # ---- final LayerNorm, single store ----
    y = _layernorm(xf, lnf_ref[0:1, :], lnf_ref[1:2, :])
    o_ref[...] = y


# ------------------------------ host wrapper --------------------------------

def personal_transformer_encoder(x, params, nhead):
    """Forward pass of PersonalTransformerEncoder. x: (B, S, D) float32."""
    B, S, D = x.shape
    assert D % nhead == 0 and D % 2 == 0
    L, _, dff = params['w1'].shape

    pe = sinusoidal_pe(S, D)
    pe_tiled = jnp.tile(pe, (B, 1))          # (B*S, D), PE broadcast over batch
    x2 = x.reshape(B * S, D)

    bf16 = lambda a: a.astype(jnp.bfloat16)  # params kept f32; MXU operands bf16
    vmem = lambda: pl.BlockSpec(memory_space=pltpu.MemorySpace.VMEM)

    out2 = pl.pallas_call(
        partial(_encoder_kernel, batch=B, nhead=nhead),
        out_shape=jax.ShapeDtypeStruct((B * S, D), jnp.float32),
        in_specs=[vmem() for _ in range(8)],   # everything whole-array VMEM-resident
        out_specs=vmem(),
    )(x2, pe_tiled,
      bf16(params['wqkv']), bf16(params['wo']),
      bf16(params['w1']), bf16(params['w2']),
      params['vecs'], params['ln_f'])

    return out2.reshape(B, S, D)


def sinusoidal_pe(seq_len, d_model):
    pos = jnp.arange(seq_len, dtype=jnp.float32)[:, None]
    i = jnp.arange(0, d_model, 2, dtype=jnp.float32)[None, :]
    div = jnp.exp(-math.log(10000.0) * i / d_model)
    pe = jnp.zeros((seq_len, d_model), dtype=jnp.float32)
    pe = pe.at[:, 0::2].set(jnp.sin(pos * div))
    pe = pe.at[:, 1::2].set(jnp.cos(pos * div))
    return pe


def init_params(key, d_model, d_ff, num_layers):
    D, F, L = d_model, d_ff, num_layers
    P = max(3 * D, F)

    def w(k, shape):
        return 0.02 * jax.random.normal(k, shape, dtype=jnp.float32)

    wqkv, wo, w1, w2, vecs = [], [], [], [], []
    ones = jnp.ones((D,), jnp.float32)
    for l in range(L):
        keys = jax.random.split(jax.random.fold_in(key, l), 10)
        wqkv.append(jnp.concatenate(
            [w(keys[0], (D, D)), w(keys[1], (D, D)), w(keys[2], (D, D))], axis=1))
        wo.append(w(keys[3], (D, D)))
        w1.append(w(keys[4], (D, F)))
        w2.append(w(keys[5], (F, D)))
        # packed per-layer vectors: rows = [bqkv, b1, bo, b2, g1, be1, g2, be2]
        v = jnp.zeros((8, P), jnp.float32)
        v = v.at[0, :3 * D].set(w(keys[6], (3 * D,)))
        v = v.at[1, :F].set(w(keys[7], (F,)))
        v = v.at[2, :D].set(w(keys[8], (D,)))
        v = v.at[3, :D].set(w(keys[9], (D,)))
        v = v.at[4, :D].set(ones)     # LN1 gamma (beta stays 0)
        v = v.at[6, :D].set(ones)     # LN2 gamma (beta stays 0)
        vecs.append(v)

    return dict(
        wqkv=jnp.stack(wqkv),                              # (L, D, 3D) f32
        wo=jnp.stack(wo),                                  # (L, D, D)
        w1=jnp.stack(w1),                                  # (L, D, F)
        w2=jnp.stack(w2),                                  # (L, F, D)
        vecs=jnp.stack(vecs),                              # (L, 8, max(3D, F))
        ln_f=jnp.stack([ones, jnp.zeros((D,), jnp.float32)], axis=0),   # (2, D)
    )


# ---------------------------------- main -------------------------------------

if __name__ == "__main__":
    # Small, module-consistent shapes: d_model=32, nhead=4, d_ff=64, N=2, S=8, B=2.
    d_model, nhead, d_ff, num_layers, src_seq_len = 32, 4, 64, 2, 8
    batch = 2

    key = jax.random.PRNGKey(0)
    kx, kp = jax.random.split(key)
    x = jax.random.normal(kx, (batch, src_seq_len, d_model), dtype=jnp.float32)
    params = init_params(kp, d_model, d_ff, num_layers)

    out = personal_transformer_encoder(x, params, nhead)
    out = jax.block_until_ready(out)
    assert out.shape == (batch, src_seq_len, d_model) and out.dtype == jnp.float32
    assert bool(jnp.all(jnp.isfinite(out)))
    print("KERNEL_OK")
</pallas_src>

<mosaic_0001>
module attributes {stable_mosaic.version = 11 : i64} {
  func.func @_encoder_kernel(%arg0: memref<16x32xf32, #tpu.memory_space<vmem>>, %arg1: memref<16x32xf32, #tpu.memory_space<vmem>>, %arg2: memref<2x32x96xbf16, #tpu.memory_space<vmem>>, %arg3: memref<2x32x32xbf16, #tpu.memory_space<vmem>>, %arg4: memref<2x32x64xbf16, #tpu.memory_space<vmem>>, %arg5: memref<2x64x32xbf16, #tpu.memory_space<vmem>>, %arg6: memref<2x8x96xf32, #tpu.memory_space<vmem>>, %arg7: memref<2x32xf32, #tpu.memory_space<vmem>>, %arg8: memref<16x32xf32, #tpu.memory_space<vmem>>) attributes {dimension_semantics = [], scalar_prefetch = 0 : i64, scratch_operands = 0 : i64, tpu.core_type = #tpu.core_type<tc>} {
    %c0 = arith.constant 0 : index
    %c0_0 = arith.constant 0 : index
    %0 = vector.load %arg0[%c0, %c0_0] : memref<16x32xf32, #tpu.memory_space<vmem>>, vector<16x32xf32>
    %c0_1 = arith.constant 0 : index
    %c0_2 = arith.constant 0 : index
    %1 = vector.load %arg1[%c0_1, %c0_2] : memref<16x32xf32, #tpu.memory_space<vmem>>, vector<16x32xf32>
    %2 = arith.addf %0, %1 : vector<16x32xf32>
    %c0_3 = arith.constant 0 : index
    %c0_4 = arith.constant 0 : index
    %c0_5 = arith.constant 0 : index
    %3 = vector.load %arg6[%c0_3, %c0_4, %c0_5] : memref<2x8x96xf32, #tpu.memory_space<vmem>>, vector<1x8x96xf32>
    %4 = vector.shape_cast %3 : vector<1x8x96xf32> to vector<8x96xf32>
    %5 = vector.extract_strided_slice %4 {offsets = [0, 0], sizes = [1, 96], strides = [1, 1]} : vector<8x96xf32> to vector<1x96xf32>
    %6 = vector.extract_strided_slice %4 {offsets = [1, 0], sizes = [1, 64], strides = [1, 1]} : vector<8x96xf32> to vector<1x64xf32>
    %7 = vector.extract_strided_slice %4 {offsets = [2, 0], sizes = [1, 32], strides = [1, 1]} : vector<8x96xf32> to vector<1x32xf32>
    %8 = vector.extract_strided_slice %4 {offsets = [3, 0], sizes = [1, 32], strides = [1, 1]} : vector<8x96xf32> to vector<1x32xf32>
    %9 = vector.extract_strided_slice %4 {offsets = [4, 0], sizes = [1, 32], strides = [1, 1]} : vector<8x96xf32> to vector<1x32xf32>
    %10 = vector.extract_strided_slice %4 {offsets = [5, 0], sizes = [1, 32], strides = [1, 1]} : vector<8x96xf32> to vector<1x32xf32>
    %11 = vector.extract_strided_slice %4 {offsets = [6, 0], sizes = [1, 32], strides = [1, 1]} : vector<8x96xf32> to vector<1x32xf32>
    %12 = vector.extract_strided_slice %4 {offsets = [7, 0], sizes = [1, 32], strides = [1, 1]} : vector<8x96xf32> to vector<1x32xf32>
    %cst = arith.constant dense<0.000000e+00> : vector<16xf32>
    %13 = vector.multi_reduction <add>, %2, %cst [1] : vector<16x32xf32> to vector<16xf32>
    %14 = vector.shape_cast %13 : vector<16xf32> to vector<16x1xf32>
    %cst_6 = arith.constant 3.200000e+01 : f32
    %15 = vector.broadcast %cst_6 : f32 to vector<16x1xf32>
    %16 = arith.divf %14, %15 : vector<16x1xf32>
    %17 = vector.broadcast %16 : vector<16x1xf32> to vector<16x32xf32>
    %18 = arith.subf %2, %17 : vector<16x32xf32>
    %19 = arith.mulf %18, %18 : vector<16x32xf32>
    %cst_7 = arith.constant dense<0.000000e+00> : vector<16xf32>
    %20 = vector.multi_reduction <add>, %19, %cst_7 [1] : vector<16x32xf32> to vector<16xf32>
    %21 = vector.shape_cast %20 : vector<16xf32> to vector<16x1xf32>
    %cst_8 = arith.constant 3.200000e+01 : f32
    %22 = vector.broadcast %cst_8 : f32 to vector<16x1xf32>
    %23 = arith.divf %21, %22 : vector<16x1xf32>
    %24 = vector.broadcast %16 : vector<16x1xf32> to vector<16x32xf32>
    %25 = arith.subf %2, %24 : vector<16x32xf32>
    %cst_9 = arith.constant 9.99999997E-7 : f32
    %26 = vector.broadcast %cst_9 : f32 to vector<16x1xf32>
    %27 = arith.addf %23, %26 : vector<16x1xf32>
    %28 = math.rsqrt %27 : vector<16x1xf32>
    %29 = vector.broadcast %28 : vector<16x1xf32> to vector<16x32xf32>
    %30 = arith.mulf %25, %29 : vector<16x32xf32>
    %31 = vector.broadcast %9 : vector<1x32xf32> to vector<16x32xf32>
    %32 = arith.mulf %30, %31 : vector<16x32xf32>
    %33 = vector.broadcast %10 : vector<1x32xf32> to vector<16x32xf32>
    %34 = arith.addf %32, %33 : vector<16x32xf32>
    %35 = arith.truncf %34 : vector<16x32xf32> to vector<16x32xbf16>
    %c0_10 = arith.constant 0 : index
    %c0_11 = arith.constant 0 : index
    %c0_12 = arith.constant 0 : index
    %36 = vector.load %arg2[%c0_10, %c0_11, %c0_12] : memref<2x32x96xbf16, #tpu.memory_space<vmem>>, vector<1x32x96xbf16>
    %37 = vector.shape_cast %36 : vector<1x32x96xbf16> to vector<32x96xbf16>
    %cst_13 = arith.constant dense<0.000000e+00> : vector<16x96xf32>
    %38 = tpu.matmul %35, %37, %cst_13 {dimension_numbers = #tpu.dot_dimension_numbers<[1], [0], [0], [1], [0, 0, 1, 1], [], []>} : vector<16x32xbf16>, vector<32x96xbf16>, vector<16x96xf32> -> vector<16x96xf32>
    %39 = vector.broadcast %5 : vector<1x96xf32> to vector<16x96xf32>
    %40 = arith.addf %38, %39 : vector<16x96xf32>
    %41 = arith.truncf %40 : vector<16x96xf32> to vector<16x96xbf16>
    %42 = vector.shape_cast %41 : vector<16x96xbf16> to vector<2x8x96xbf16>
    %43 = vector.extract_strided_slice %42 {offsets = [0, 0, 0], sizes = [2, 8, 8], strides = [1, 1, 1]} : vector<2x8x96xbf16> to vector<2x8x8xbf16>
    %44 = vector.extract_strided_slice %42 {offsets = [0, 0, 32], sizes = [2, 8, 8], strides = [1, 1, 1]} : vector<2x8x96xbf16> to vector<2x8x8xbf16>
    %45 = vector.extract_strided_slice %42 {offsets = [0, 0, 64], sizes = [2, 8, 8], strides = [1, 1, 1]} : vector<2x8x96xbf16> to vector<2x8x8xbf16>
    "tpu.trace_start"() <{level = 10 : i32, message = "bqd,bkd->bqk"}> : () -> ()
    %cst_14 = arith.constant dense<0.000000e+00> : vector<2x8x8xf32>
    %46 = tpu.matmul %43, %44, %cst_14 {dimension_numbers = #tpu.dot_dimension_numbers<[2], [2], [1], [1], [0, 0, 0, 1, 1, 1], [0], [0]>} : vector<2x8x8xbf16>, vector<2x8x8xbf16>, vector<2x8x8xf32> -> vector<2x8x8xf32>
    "tpu.trace_stop"() : () -> ()
    %cst_15 = arith.constant 0.353553385 : f32
    %47 = vector.broadcast %cst_15 : f32 to vector<2x8x8xf32>
    %48 = arith.mulf %46, %47 : vector<2x8x8xf32>
    %cst_16 = arith.constant dense<0xFF800000> : vector<2x8xf32>
    %49 = vector.multi_reduction <maximumf>, %48, %cst_16 [2] : vector<2x8x8xf32> to vector<2x8xf32>
    %50 = vector.shape_cast %49 : vector<2x8xf32> to vector<2x8x1xf32>
    %51 = vector.broadcast %50 : vector<2x8x1xf32> to vector<2x8x8xf32>
    %52 = arith.subf %48, %51 : vector<2x8x8xf32>
    %53 = math.exp %52 : vector<2x8x8xf32>
    %cst_17 = arith.constant dense<0.000000e+00> : vector<2x8xf32>
    %54 = vector.multi_reduction <add>, %53, %cst_17 [2] : vector<2x8x8xf32> to vector<2x8xf32>
    %55 = vector.shape_cast %54 : vector<2x8xf32> to vector<2x8x1xf32>
    %56 = tpu.reciprocal %55 {approx = true} : vector<2x8x1xf32> -> vector<2x8x1xf32>
    %57 = vector.broadcast %56 : vector<2x8x1xf32> to vector<2x8x8xf32>
    %58 = arith.mulf %53, %57 : vector<2x8x8xf32>
    %59 = arith.truncf %58 : vector<2x8x8xf32> to vector<2x8x8xbf16>
    "tpu.trace_start"() <{level = 10 : i32, message = "bqk,bkd->bqd"}> : () -> ()
    %cst_18 = arith.constant dense<0.000000e+00> : vector<2x8x8xf32>
    %60 = tpu.matmul %59, %45, %cst_18 {dimension_numbers = #tpu.dot_dimension_numbers<[2], [1], [1], [2], [0, 0, 0, 1, 1, 2], [0], [0]>} : vector<2x8x8xbf16>, vector<2x8x8xbf16>, vector<2x8x8xf32> -> vector<2x8x8xf32>
    "tpu.trace_stop"() : () -> ()
    %61 = vector.extract_strided_slice %42 {offsets = [0, 0, 8], sizes = [2, 8, 8], strides = [1, 1, 1]} : vector<2x8x96xbf16> to vector<2x8x8xbf16>
    %62 = vector.extract_strided_slice %42 {offsets = [0, 0, 40], sizes = [2, 8, 8], strides = [1, 1, 1]} : vector<2x8x96xbf16> to vector<2x8x8xbf16>
    %63 = vector.extract_strided_slice %42 {offsets = [0, 0, 72], sizes = [2, 8, 8], strides = [1, 1, 1]} : vector<2x8x96xbf16> to vector<2x8x8xbf16>
    "tpu.trace_start"() <{level = 10 : i32, message = "bqd,bkd->bqk"}> : () -> ()
    %cst_19 = arith.constant dense<0.000000e+00> : vector<2x8x8xf32>
    %64 = tpu.matmul %61, %62, %cst_19 {dimension_numbers = #tpu.dot_dimension_numbers<[2], [2], [1], [1], [0, 0, 0, 1, 1, 1], [0], [0]>} : vector<2x8x8xbf16>, vector<2x8x8xbf16>, vector<2x8x8xf32> -> vector<2x8x8xf32>
    "tpu.trace_stop"() : () -> ()
    %cst_20 = arith.constant 0.353553385 : f32
    %65 = vector.broadcast %cst_20 : f32 to vector<2x8x8xf32>
    %66 = arith.mulf %64, %65 : vector<2x8x8xf32>
    %cst_21 = arith.constant dense<0xFF800000> : vector<2x8xf32>
    %67 = vector.multi_reduction <maximumf>, %66, %cst_21 [2] : vector<2x8x8xf32> to vector<2x8xf32>
    %68 = vector.shape_cast %67 : vector<2x8xf32> to vector<2x8x1xf32>
    %69 = vector.broadcast %68 : vector<2x8x1xf32> to vector<2x8x8xf32>
    %70 = arith.subf %66, %69 : vector<2x8x8xf32>
    %71 = math.exp %70 : vector<2x8x8xf32>
    %cst_22 = arith.constant dense<0.000000e+00> : vector<2x8xf32>
    %72 = vector.multi_reduction <add>, %71, %cst_22 [2] : vector<2x8x8xf32> to vector<2x8xf32>
    %73 = vector.shape_cast %72 : vector<2x8xf32> to vector<2x8x1xf32>
    %74 = tpu.reciprocal %73 {approx = true} : vector<2x8x1xf32> -> vector<2x8x1xf32>
    %75 = vector.broadcast %74 : vector<2x8x1xf32> to vector<2x8x8xf32>
    %76 = arith.mulf %71, %75 : vector<2x8x8xf32>
    %77 = arith.truncf %76 : vector<2x8x8xf32> to vector<2x8x8xbf16>
    "tpu.trace_start"() <{level = 10 : i32, message = "bqk,bkd->bqd"}> : () -> ()
    %cst_23 = arith.constant dense<0.000000e+00> : vector<2x8x8xf32>
    %78 = tpu.matmul %77, %63, %cst_23 {dimension_numbers = #tpu.dot_dimension_numbers<[2], [1], [1], [2], [0, 0, 0, 1, 1, 2], [0], [0]>} : vector<2x8x8xbf16>, vector<2x8x8xbf16>, vector<2x8x8xf32> -> vector<2x8x8xf32>
    "tpu.trace_stop"() : () -> ()
    %79 = vector.extract_strided_slice %42 {offsets = [0, 0, 16], sizes = [2, 8, 8], strides = [1, 1, 1]} : vector<2x8x96xbf16> to vector<2x8x8xbf16>
    %80 = vector.extract_strided_slice %42 {offsets = [0, 0, 48], sizes = [2, 8, 8], strides = [1, 1, 1]} : vector<2x8x96xbf16> to vector<2x8x8xbf16>
    %81 = vector.extract_strided_slice %42 {offsets = [0, 0, 80], sizes = [2, 8, 8], strides = [1, 1, 1]} : vector<2x8x96xbf16> to vector<2x8x8xbf16>
    "tpu.trace_start"() <{level = 10 : i32, message = "bqd,bkd->bqk"}> : () -> ()
    %cst_24 = arith.constant dense<0.000000e+00> : vector<2x8x8xf32>
    %82 = tpu.matmul %79, %80, %cst_24 {dimension_numbers = #tpu.dot_dimension_numbers<[2], [2], [1], [1], [0, 0, 0, 1, 1, 1], [0], [0]>} : vector<2x8x8xbf16>, vector<2x8x8xbf16>, vector<2x8x8xf32> -> vector<2x8x8xf32>
    "tpu.trace_stop"() : () -> ()
    %cst_25 = arith.constant 0.353553385 : f32
    %83 = vector.broadcast %cst_25 : f32 to vector<2x8x8xf32>
    %84 = arith.mulf %82, %83 : vector<2x8x8xf32>
    %cst_26 = arith.constant dense<0xFF800000> : vector<2x8xf32>
    %85 = vector.multi_reduction <maximumf>, %84, %cst_26 [2] : vector<2x8x8xf32> to vector<2x8xf32>
    %86 = vector.shape_cast %85 : vector<2x8xf32> to vector<2x8x1xf32>
    %87 = vector.broadcast %86 : vector<2x8x1xf32> to vector<2x8x8xf32>
    %88 = arith.subf %84, %87 : vector<2x8x8xf32>
    %89 = math.exp %88 : vector<2x8x8xf32>
    %cst_27 = arith.constant dense<0.000000e+00> : vector<2x8xf32>
    %90 = vector.multi_reduction <add>, %89, %cst_27 [2] : vector<2x8x8xf32> to vector<2x8xf32>
    %91 = vector.shape_cast %90 : vector<2x8xf32> to vector<2x8x1xf32>
    %92 = tpu.reciprocal %91 {approx = true} : vector<2x8x1xf32> -> vector<2x8x1xf32>
    %93 = vector.broadcast %92 : vector<2x8x1xf32> to vector<2x8x8xf32>
    %94 = arith.mulf %89, %93 : vector<2x8x8xf32>
    %95 = arith.truncf %94 : vector<2x8x8xf32> to vector<2x8x8xbf16>
    "tpu.trace_start"() <{level = 10 : i32, message = "bqk,bkd->bqd"}> : () -> ()
    %cst_28 = arith.constant dense<0.000000e+00> : vector<2x8x8xf32>
    %96 = tpu.matmul %95, %81, %cst_28 {dimension_numbers = #tpu.dot_dimension_numbers<[2], [1], [1], [2], [0, 0, 0, 1, 1, 2], [0], [0]>} : vector<2x8x8xbf16>, vector<2x8x8xbf16>, vector<2x8x8xf32> -> vector<2x8x8xf32>
    "tpu.trace_stop"() : () -> ()
    %97 = vector.extract_strided_slice %42 {offsets = [0, 0, 24], sizes = [2, 8, 8], strides = [1, 1, 1]} : vector<2x8x96xbf16> to vector<2x8x8xbf16>
    %98 = vector.extract_strided_slice %42 {offsets = [0, 0, 56], sizes = [2, 8, 8], strides = [1, 1, 1]} : vector<2x8x96xbf16> to vector<2x8x8xbf16>
    %99 = vector.extract_strided_slice %42 {offsets = [0, 0, 88], sizes = [2, 8, 8], strides = [1, 1, 1]} : vector<2x8x96xbf16> to vector<2x8x8xbf16>
    "tpu.trace_start"() <{level = 10 : i32, message = "bqd,bkd->bqk"}> : () -> ()
    %cst_29 = arith.constant dense<0.000000e+00> : vector<2x8x8xf32>
    %100 = tpu.matmul %97, %98, %cst_29 {dimension_numbers = #tpu.dot_dimension_numbers<[2], [2], [1], [1], [0, 0, 0, 1, 1, 1], [0], [0]>} : vector<2x8x8xbf16>, vector<2x8x8xbf16>, vector<2x8x8xf32> -> vector<2x8x8xf32>
    "tpu.trace_stop"() : () -> ()
    %cst_30 = arith.constant 0.353553385 : f32
    %101 = vector.broadcast %cst_30 : f32 to vector<2x8x8xf32>
    %102 = arith.mulf %100, %101 : vector<2x8x8xf32>
    %cst_31 = arith.constant dense<0xFF800000> : vector<2x8xf32>
    %103 = vector.multi_reduction <maximumf>, %102, %cst_31 [2] : vector<2x8x8xf32> to vector<2x8xf32>
    %104 = vector.shape_cast %103 : vector<2x8xf32> to vector<2x8x1xf32>
    %105 = vector.broadcast %104 : vector<2x8x1xf32> to vector<2x8x8xf32>
    %106 = arith.subf %102, %105 : vector<2x8x8xf32>
    %107 = math.exp %106 : vector<2x8x8xf32>
    %cst_32 = arith.constant dense<0.000000e+00> : vector<2x8xf32>
    %108 = vector.multi_reduction <add>, %107, %cst_32 [2] : vector<2x8x8xf32> to vector<2x8xf32>
    %109 = vector.shape_cast %108 : vector<2x8xf32> to vector<2x8x1xf32>
    %110 = tpu.reciprocal %109 {approx = true} : vector<2x8x1xf32> -> vector<2x8x1xf32>
    %111 = vector.broadcast %110 : vector<2x8x1xf32> to vector<2x8x8xf32>
    %112 = arith.mulf %107, %111 : vector<2x8x8xf32>
    %113 = arith.truncf %112 : vector<2x8x8xf32> to vector<2x8x8xbf16>
    "tpu.trace_start"() <{level = 10 : i32, message = "bqk,bkd->bqd"}> : () -> ()
    %cst_33 = arith.constant dense<0.000000e+00> : vector<2x8x8xf32>
    %114 = tpu.matmul %113, %99, %cst_33 {dimension_numbers = #tpu.dot_dimension_numbers<[2], [1], [1], [2], [0, 0, 0, 1, 1, 2], [0], [0]>} : vector<2x8x8xbf16>, vector<2x8x8xbf16>, vector<2x8x8xf32> -> vector<2x8x8xf32>
    "tpu.trace_stop"() : () -> ()
    %115 = tpu.concatenate %60, %78, %96, %114 in 2 : vector<2x8x8xf32>, vector<2x8x8xf32>, vector<2x8x8xf32>, vector<2x8x8xf32> -> vector<2x8x32xf32>
    %116 = vector.shape_cast %115 : vector<2x8x32xf32> to vector<16x32xf32>
    %117 = arith.truncf %116 : vector<16x32xf32> to vector<16x32xbf16>
    %c0_34 = arith.constant 0 : index
    %c0_35 = arith.constant 0 : index
    %c0_36 = arith.constant 0 : index
    %118 = vector.load %arg3[%c0_34, %c0_35, %c0_36] : memref<2x32x32xbf16, #tpu.memory_space<vmem>>, vector<1x32x32xbf16>
    %119 = vector.shape_cast %118 : vector<1x32x32xbf16> to vector<32x32xbf16>
    %cst_37 = arith.constant dense<0.000000e+00> : vector<16x32xf32>
    %120 = tpu.matmul %117, %119, %cst_37 {dimension_numbers = #tpu.dot_dimension_numbers<[1], [0], [0], [1], [0, 0, 1, 1], [], []>} : vector<16x32xbf16>, vector<32x32xbf16>, vector<16x32xf32> -> vector<16x32xf32>
    %121 = vector.broadcast %7 : vector<1x32xf32> to vector<16x32xf32>
    %122 = arith.addf %120, %121 : vector<16x32xf32>
    %123 = arith.addf %2, %122 : vector<16x32xf32>
    %cst_38 = arith.constant dense<0.000000e+00> : vector<16xf32>
    %124 = vector.multi_reduction <add>, %123, %cst_38 [1] : vector<16x32xf32> to vector<16xf32>
    %125 = vector.shape_cast %124 : vector<16xf32> to vector<16x1xf32>
    %cst_39 = arith.constant 3.200000e+01 : f32
    %126 = vector.broadcast %cst_39 : f32 to vector<16x1xf32>
    %127 = arith.divf %125, %126 : vector<16x1xf32>
    %128 = vector.broadcast %127 : vector<16x1xf32> to vector<16x32xf32>
    %129 = arith.subf %123, %128 : vector<16x32xf32>
    %130 = arith.mulf %129, %129 : vector<16x32xf32>
    %cst_40 = arith.constant dense<0.000000e+00> : vector<16xf32>
    %131 = vector.multi_reduction <add>, %130, %cst_40 [1] : vector<16x32xf32> to vector<16xf32>
    %132 = vector.shape_cast %131 : vector<16xf32> to vector<16x1xf32>
    %cst_41 = arith.constant 3.200000e+01 : f32
    %133 = vector.broadcast %cst_41 : f32 to vector<16x1xf32>
    %134 = arith.divf %132, %133 : vector<16x1xf32>
    %135 = vector.broadcast %127 : vector<16x1xf32> to vector<16x32xf32>
    %136 = arith.subf %123, %135 : vector<16x32xf32>
    %cst_42 = arith.constant 9.99999997E-7 : f32
    %137 = vector.broadcast %cst_42 : f32 to vector<16x1xf32>
    %138 = arith.addf %134, %137 : vector<16x1xf32>
    %139 = math.rsqrt %138 : vector<16x1xf32>
    %140 = vector.broadcast %139 : vector<16x1xf32> to vector<16x32xf32>
    %141 = arith.mulf %136, %140 : vector<16x32xf32>
    %142 = vector.broadcast %11 : vector<1x32xf32> to vector<16x32xf32>
    %143 = arith.mulf %141, %142 : vector<16x32xf32>
    %144 = vector.broadcast %12 : vector<1x32xf32> to vector<16x32xf32>
    %145 = arith.addf %143, %144 : vector<16x32xf32>
    %146 = arith.truncf %145 : vector<16x32xf32> to vector<16x32xbf16>
    %c0_43 = arith.constant 0 : index
    %c0_44 = arith.constant 0 : index
    %c0_45 = arith.constant 0 : index
    %147 = vector.load %arg4[%c0_43, %c0_44, %c0_45] : memref<2x32x64xbf16, #tpu.memory_space<vmem>>, vector<1x32x64xbf16>
    %148 = vector.shape_cast %147 : vector<1x32x64xbf16> to vector<32x64xbf16>
    %cst_46 = arith.constant dense<0.000000e+00> : vector<16x64xf32>
    %149 = tpu.matmul %146, %148, %cst_46 {dimension_numbers = #tpu.dot_dimension_numbers<[1], [0], [0], [1], [0, 0, 1, 1], [], []>} : vector<16x32xbf16>, vector<32x64xbf16>, vector<16x64xf32> -> vector<16x64xf32>
    %150 = vector.broadcast %6 : vector<1x64xf32> to vector<16x64xf32>
    %151 = arith.addf %149, %150 : vector<16x64xf32>
    %cst_47 = arith.constant 0.000000e+00 : f32
    %152 = vector.broadcast %cst_47 : f32 to vector<16x64xf32>
    %153 = arith.maximumf %151, %152 : vector<16x64xf32>
    %154 = arith.truncf %153 : vector<16x64xf32> to vector<16x64xbf16>
    %c0_48 = arith.constant 0 : index
    %c0_49 = arith.constant 0 : index
    %c0_50 = arith.constant 0 : index
    %155 = vector.load %arg5[%c0_48, %c0_49, %c0_50] : memref<2x64x32xbf16, #tpu.memory_space<vmem>>, vector<1x64x32xbf16>
    %156 = vector.shape_cast %155 : vector<1x64x32xbf16> to vector<64x32xbf16>
    %cst_51 = arith.constant dense<0.000000e+00> : vector<16x32xf32>
    %157 = tpu.matmul %154, %156, %cst_51 {dimension_numbers = #tpu.dot_dimension_numbers<[1], [0], [0], [1], [0, 0, 1, 1], [], []>} : vector<16x64xbf16>, vector<64x32xbf16>, vector<16x32xf32> -> vector<16x32xf32>
    %158 = vector.broadcast %8 : vector<1x32xf32> to vector<16x32xf32>
    %159 = arith.addf %157, %158 : vector<16x32xf32>
    %160 = arith.addf %123, %159 : vector<16x32xf32>
    %c1 = arith.constant 1 : index
    %c0_52 = arith.constant 0 : index
    %c0_53 = arith.constant 0 : index
    %161 = vector.load %arg6[%c1, %c0_52, %c0_53] : memref<2x8x96xf32, #tpu.memory_space<vmem>>, vector<1x8x96xf32>
    %162 = vector.shape_cast %161 : vector<1x8x96xf32> to vector<8x96xf32>
    %163 = vector.extract_strided_slice %162 {offsets = [0, 0], sizes = [1, 96], strides = [1, 1]} : vector<8x96xf32> to vector<1x96xf32>
    %164 = vector.extract_strided_slice %162 {offsets = [1, 0], sizes = [1, 64], strides = [1, 1]} : vector<8x96xf32> to vector<1x64xf32>
    %165 = vector.extract_strided_slice %162 {offsets = [2, 0], sizes = [1, 32], strides = [1, 1]} : vector<8x96xf32> to vector<1x32xf32>
    %166 = vector.extract_strided_slice %162 {offsets = [3, 0], sizes = [1, 32], strides = [1, 1]} : vector<8x96xf32> to vector<1x32xf32>
    %167 = vector.extract_strided_slice %162 {offsets = [4, 0], sizes = [1, 32], strides = [1, 1]} : vector<8x96xf32> to vector<1x32xf32>
    %168 = vector.extract_strided_slice %162 {offsets = [5, 0], sizes = [1, 32], strides = [1, 1]} : vector<8x96xf32> to vector<1x32xf32>
    %169 = vector.extract_strided_slice %162 {offsets = [6, 0], sizes = [1, 32], strides = [1, 1]} : vector<8x96xf32> to vector<1x32xf32>
    %170 = vector.extract_strided_slice %162 {offsets = [7, 0], sizes = [1, 32], strides = [1, 1]} : vector<8x96xf32> to vector<1x32xf32>
    %cst_54 = arith.constant dense<0.000000e+00> : vector<16xf32>
    %171 = vector.multi_reduction <add>, %160, %cst_54 [1] : vector<16x32xf32> to vector<16xf32>
    %172 = vector.shape_cast %171 : vector<16xf32> to vector<16x1xf32>
    %cst_55 = arith.constant 3.200000e+01 : f32
    %173 = vector.broadcast %cst_55 : f32 to vector<16x1xf32>
    %174 = arith.divf %172, %173 : vector<16x1xf32>
    %175 = vector.broadcast %174 : vector<16x1xf32> to vector<16x32xf32>
    %176 = arith.subf %160, %175 : vector<16x32xf32>
    %177 = arith.mulf %176, %176 : vector<16x32xf32>
    %cst_56 = arith.constant dense<0.000000e+00> : vector<16xf32>
    %178 = vector.multi_reduction <add>, %177, %cst_56 [1] : vector<16x32xf32> to vector<16xf32>
    %179 = vector.shape_cast %178 : vector<16xf32> to vector<16x1xf32>
    %cst_57 = arith.constant 3.200000e+01 : f32
    %180 = vector.broadcast %cst_57 : f32 to vector<16x1xf32>
    %181 = arith.divf %179, %180 : vector<16x1xf32>
    %182 = vector.broadcast %174 : vector<16x1xf32> to vector<16x32xf32>
    %183 = arith.subf %160, %182 : vector<16x32xf32>
    %cst_58 = arith.constant 9.99999997E-7 : f32
    %184 = vector.broadcast %cst_58 : f32 to vector<16x1xf32>
    %185 = arith.addf %181, %184 : vector<16x1xf32>
    %186 = math.rsqrt %185 : vector<16x1xf32>
    %187 = vector.broadcast %186 : vector<16x1xf32> to vector<16x32xf32>
    %188 = arith.mulf %183, %187 : vector<16x32xf32>
    %189 = vector.broadcast %167 : vector<1x32xf32> to vector<16x32xf32>
    %190 = arith.mulf %188, %189 : vector<16x32xf32>
    %191 = vector.broadcast %168 : vector<1x32xf32> to vector<16x32xf32>
    %192 = arith.addf %190, %191 : vector<16x32xf32>
    %193 = arith.truncf %192 : vector<16x32xf32> to vector<16x32xbf16>
    %c1_59 = arith.constant 1 : index
    %c0_60 = arith.constant 0 : index
    %c0_61 = arith.constant 0 : index
    %194 = vector.load %arg2[%c1_59, %c0_60, %c0_61] : memref<2x32x96xbf16, #tpu.memory_space<vmem>>, vector<1x32x96xbf16>
    %195 = vector.shape_cast %194 : vector<1x32x96xbf16> to vector<32x96xbf16>
    %cst_62 = arith.constant dense<0.000000e+00> : vector<16x96xf32>
    %196 = tpu.matmul %193, %195, %cst_62 {dimension_numbers = #tpu.dot_dimension_numbers<[1], [0], [0], [1], [0, 0, 1, 1], [], []>} : vector<16x32xbf16>, vector<32x96xbf16>, vector<16x96xf32> -> vector<16x96xf32>
    %197 = vector.broadcast %163 : vector<1x96xf32> to vector<16x96xf32>
    %198 = arith.addf %196, %197 : vector<16x96xf32>
    %199 = arith.truncf %198 : vector<16x96xf32> to vector<16x96xbf16>
    %200 = vector.shape_cast %199 : vector<16x96xbf16> to vector<2x8x96xbf16>
    %201 = vector.extract_strided_slice %200 {offsets = [0, 0, 0], sizes = [2, 8, 8], strides = [1, 1, 1]} : vector<2x8x96xbf16> to vector<2x8x8xbf16>
    %202 = vector.extract_strided_slice %200 {offsets = [0, 0, 32], sizes = [2, 8, 8], strides = [1, 1, 1]} : vector<2x8x96xbf16> to vector<2x8x8xbf16>
    %203 = vector.extract_strided_slice %200 {offsets = [0, 0, 64], sizes = [2, 8, 8], strides = [1, 1, 1]} : vector<2x8x96xbf16> to vector<2x8x8xbf16>
    "tpu.trace_start"() <{level = 10 : i32, message = "bqd,bkd->bqk"}> : () -> ()
    %cst_63 = arith.constant dense<0.000000e+00> : vector<2x8x8xf32>
    %204 = tpu.matmul %201, %202, %cst_63 {dimension_numbers = #tpu.dot_dimension_numbers<[2], [2], [1], [1], [0, 0, 0, 1, 1, 1], [0], [0]>} : vector<2x8x8xbf16>, vector<2x8x8xbf16>, vector<2x8x8xf32> -> vector<2x8x8xf32>
    "tpu.trace_stop"() : () -> ()
    %cst_64 = arith.constant 0.353553385 : f32
    %205 = vector.broadcast %cst_64 : f32 to vector<2x8x8xf32>
    %206 = arith.mulf %204, %205 : vector<2x8x8xf32>
    %cst_65 = arith.constant dense<0xFF800000> : vector<2x8xf32>
    %207 = vector.multi_reduction <maximumf>, %206, %cst_65 [2] : vector<2x8x8xf32> to vector<2x8xf32>
    %208 = vector.shape_cast %207 : vector<2x8xf32> to vector<2x8x1xf32>
    %209 = vector.broadcast %208 : vector<2x8x1xf32> to vector<2x8x8xf32>
    %210 = arith.subf %206, %209 : vector<2x8x8xf32>
    %211 = math.exp %210 : vector<2x8x8xf32>
    %cst_66 = arith.constant dense<0.000000e+00> : vector<2x8xf32>
    %212 = vector.multi_reduction <add>, %211, %cst_66 [2] : vector<2x8x8xf32> to vector<2x8xf32>
    %213 = vector.shape_cast %212 : vector<2x8xf32> to vector<2x8x1xf32>
    %214 = tpu.reciprocal %213 {approx = true} : vector<2x8x1xf32> -> vector<2x8x1xf32>
    %215 = vector.broadcast %214 : vector<2x8x1xf32> to vector<2x8x8xf32>
    %216 = arith.mulf %211, %215 : vector<2x8x8xf32>
    %217 = arith.truncf %216 : vector<2x8x8xf32> to vector<2x8x8xbf16>
    "tpu.trace_start"() <{level = 10 : i32, message = "bqk,bkd->bqd"}> : () -> ()
    %cst_67 = arith.constant dense<0.000000e+00> : vector<2x8x8xf32>
    %218 = tpu.matmul %217, %203, %cst_67 {dimension_numbers = #tpu.dot_dimension_numbers<[2], [1], [1], [2], [0, 0, 0, 1, 1, 2], [0], [0]>} : vector<2x8x8xbf16>, vector<2x8x8xbf16>, vector<2x8x8xf32> -> vector<2x8x8xf32>
    "tpu.trace_stop"() : () -> ()
    %219 = vector.extract_strided_slice %200 {offsets = [0, 0, 8], sizes = [2, 8, 8], strides = [1, 1, 1]} : vector<2x8x96xbf16> to vector<2x8x8xbf16>
    %220 = vector.extract_strided_slice %200 {offsets = [0, 0, 40], sizes = [2, 8, 8], strides = [1, 1, 1]} : vector<2x8x96xbf16> to vector<2x8x8xbf16>
    %221 = vector.extract_strided_slice %200 {offsets = [0, 0, 72], sizes = [2, 8, 8], strides = [1, 1, 1]} : vector<2x8x96xbf16> to vector<2x8x8xbf16>
    "tpu.trace_start"() <{level = 10 : i32, message = "bqd,bkd->bqk"}> : () -> ()
    %cst_68 = arith.constant dense<0.000000e+00> : vector<2x8x8xf32>
    %222 = tpu.matmul %219, %220, %cst_68 {dimension_numbers = #tpu.dot_dimension_numbers<[2], [2], [1], [1], [0, 0, 0, 1, 1, 1], [0], [0]>} : vector<2x8x8xbf16>, vector<2x8x8xbf16>, vector<2x8x8xf32> -> vector<2x8x8xf32>
    "tpu.trace_stop"() : () -> ()
    %cst_69 = arith.constant 0.353553385 : f32
    %223 = vector.broadcast %cst_69 : f32 to vector<2x8x8xf32>
    %224 = arith.mulf %222, %223 : vector<2x8x8xf32>
    %cst_70 = arith.constant dense<0xFF800000> : vector<2x8xf32>
    %225 = vector.multi_reduction <maximumf>, %224, %cst_70 [2] : vector<2x8x8xf32> to vector<2x8xf32>
    %226 = vector.shape_cast %225 : vector<2x8xf32> to vector<2x8x1xf32>
    %227 = vector.broadcast %226 : vector<2x8x1xf32> to vector<2x8x8xf32>
    %228 = arith.subf %224, %227 : vector<2x8x8xf32>
    %229 = math.exp %228 : vector<2x8x8xf32>
    %cst_71 = arith.constant dense<0.000000e+00> : vector<2x8xf32>
    %230 = vector.multi_reduction <add>, %229, %cst_71 [2] : vector<2x8x8xf32> to vector<2x8xf32>
    %231 = vector.shape_cast %230 : vector<2x8xf32> to vector<2x8x1xf32>
    %232 = tpu.reciprocal %231 {approx = true} : vector<2x8x1xf32> -> vector<2x8x1xf32>
    %233 = vector.broadcast %232 : vector<2x8x1xf32> to vector<2x8x8xf32>
    %234 = arith.mulf %229, %233 : vector<2x8x8xf32>
    %235 = arith.truncf %234 : vector<2x8x8xf32> to vector<2x8x8xbf16>
    "tpu.trace_start"() <{level = 10 : i32, message = "bqk,bkd->bqd"}> : () -> ()
    %cst_72 = arith.constant dense<0.000000e+00> : vector<2x8x8xf32>
    %236 = tpu.matmul %235, %221, %cst_72 {dimension_numbers = #tpu.dot_dimension_numbers<[2], [1], [1], [2], [0, 0, 0, 1, 1, 2], [0], [0]>} : vector<2x8x8xbf16>, vector<2x8x8xbf16>, vector<2x8x8xf32> -> vector<2x8x8xf32>
    "tpu.trace_stop"() : () -> ()
    %237 = vector.extract_strided_slice %200 {offsets = [0, 0, 16], sizes = [2, 8, 8], strides = [1, 1, 1]} : vector<2x8x96xbf16> to vector<2x8x8xbf16>
    %238 = vector.extract_strided_slice %200 {offsets = [0, 0, 48], sizes = [2, 8, 8], strides = [1, 1, 1]} : vector<2x8x96xbf16> to vector<2x8x8xbf16>
    %239 = vector.extract_strided_slice %200 {offsets = [0, 0, 80], sizes = [2, 8, 8], strides = [1, 1, 1]} : vector<2x8x96xbf16> to vector<2x8x8xbf16>
    "tpu.trace_start"() <{level = 10 : i32, message = "bqd,bkd->bqk"}> : () -> ()
    %cst_73 = arith.constant dense<0.000000e+00> : vector<2x8x8xf32>
    %240 = tpu.matmul %237, %238, %cst_73 {dimension_numbers = #tpu.dot_dimension_numbers<[2], [2], [1], [1], [0, 0, 0, 1, 1, 1], [0], [0]>} : vector<2x8x8xbf16>, vector<2x8x8xbf16>, vector<2x8x8xf32> -> vector<2x8x8xf32>
    "tpu.trace_stop"() : () -> ()
    %cst_74 = arith.constant 0.353553385 : f32
    %241 = vector.broadcast %cst_74 : f32 to vector<2x8x8xf32>
    %242 = arith.mulf %240, %241 : vector<2x8x8xf32>
    %cst_75 = arith.constant dense<0xFF800000> : vector<2x8xf32>
    %243 = vector.multi_reduction <maximumf>, %242, %cst_75 [2] : vector<2x8x8xf32> to vector<2x8xf32>
    %244 = vector.shape_cast %243 : vector<2x8xf32> to vector<2x8x1xf32>
    %245 = vector.broadcast %244 : vector<2x8x1xf32> to vector<2x8x8xf32>
    %246 = arith.subf %242, %245 : vector<2x8x8xf32>
    %247 = math.exp %246 : vector<2x8x8xf32>
    %cst_76 = arith.constant dense<0.000000e+00> : vector<2x8xf32>
    %248 = vector.multi_reduction <add>, %247, %cst_76 [2] : vector<2x8x8xf32> to vector<2x8xf32>
    %249 = vector.shape_cast %248 : vector<2x8xf32> to vector<2x8x1xf32>
    %250 = tpu.reciprocal %249 {approx = true} : vector<2x8x1xf32> -> vector<2x8x1xf32>
    %251 = vector.broadcast %250 : vector<2x8x1xf32> to vector<2x8x8xf32>
    %252 = arith.mulf %247, %251 : vector<2x8x8xf32>
    %253 = arith.truncf %252 : vector<2x8x8xf32> to vector<2x8x8xbf16>
    "tpu.trace_start"() <{level = 10 : i32, message = "bqk,bkd->bqd"}> : () -> ()
    %cst_77 = arith.constant dense<0.000000e+00> : vector<2x8x8xf32>
    %254 = tpu.matmul %253, %239, %cst_77 {dimension_numbers = #tpu.dot_dimension_numbers<[2], [1], [1], [2], [0, 0, 0, 1, 1, 2], [0], [0]>} : vector<2x8x8xbf16>, vector<2x8x8xbf16>, vector<2x8x8xf32> -> vector<2x8x8xf32>
    "tpu.trace_stop"() : () -> ()
    %255 = vector.extract_strided_slice %200 {offsets = [0, 0, 24], sizes = [2, 8, 8], strides = [1, 1, 1]} : vector<2x8x96xbf16> to vector<2x8x8xbf16>
    %256 = vector.extract_strided_slice %200 {offsets = [0, 0, 56], sizes = [2, 8, 8], strides = [1, 1, 1]} : vector<2x8x96xbf16> to vector<2x8x8xbf16>
    %257 = vector.extract_strided_slice %200 {offsets = [0, 0, 88], sizes = [2, 8, 8], strides = [1, 1, 1]} : vector<2x8x96xbf16> to vector<2x8x8xbf16>
    "tpu.trace_start"() <{level = 10 : i32, message = "bqd,bkd->bqk"}> : () -> ()
    %cst_78 = arith.constant dense<0.000000e+00> : vector<2x8x8xf32>
    %258 = tpu.matmul %255, %256, %cst_78 {dimension_numbers = #tpu.dot_dimension_numbers<[2], [2], [1], [1], [0, 0, 0, 1, 1, 1], [0], [0]>} : vector<2x8x8xbf16>, vector<2x8x8xbf16>, vector<2x8x8xf32> -> vector<2x8x8xf32>
    "tpu.trace_stop"() : () -> ()
    %cst_79 = arith.constant 0.353553385 : f32
    %259 = vector.broadcast %cst_79 : f32 to vector<2x8x8xf32>
    %260 = arith.mulf %258, %259 : vector<2x8x8xf32>
    %cst_80 = arith.constant dense<0xFF800000> : vector<2x8xf32>
    %261 = vector.multi_reduction <maximumf>, %260, %cst_80 [2] : vector<2x8x8xf32> to vector<2x8xf32>
    %262 = vector.shape_cast %261 : vector<2x8xf32> to vector<2x8x1xf32>
    %263 = vector.broadcast %262 : vector<2x8x1xf32> to vector<2x8x8xf32>
    %264 = arith.subf %260, %263 : vector<2x8x8xf32>
    %265 = math.exp %264 : vector<2x8x8xf32>
    %cst_81 = arith.constant dense<0.000000e+00> : vector<2x8xf32>
    %266 = vector.multi_reduction <add>, %265, %cst_81 [2] : vector<2x8x8xf32> to vector<2x8xf32>
    %267 = vector.shape_cast %266 : vector<2x8xf32> to vector<2x8x1xf32>
    %268 = tpu.reciprocal %267 {approx = true} : vector<2x8x1xf32> -> vector<2x8x1xf32>
    %269 = vector.broadcast %268 : vector<2x8x1xf32> to vector<2x8x8xf32>
    %270 = arith.mulf %265, %269 : vector<2x8x8xf32>
    %271 = arith.truncf %270 : vector<2x8x8xf32> to vector<2x8x8xbf16>
    "tpu.trace_start"() <{level = 10 : i32, message = "bqk,bkd->bqd"}> : () -> ()
    %cst_82 = arith.constant dense<0.000000e+00> : vector<2x8x8xf32>
    %272 = tpu.matmul %271, %257, %cst_82 {dimension_numbers = #tpu.dot_dimension_numbers<[2], [1], [1], [2], [0, 0, 0, 1, 1, 2], [0], [0]>} : vector<2x8x8xbf16>, vector<2x8x8xbf16>, vector<2x8x8xf32> -> vector<2x8x8xf32>
    "tpu.trace_stop"() : () -> ()
    %273 = tpu.concatenate %218, %236, %254, %272 in 2 : vector<2x8x8xf32>, vector<2x8x8xf32>, vector<2x8x8xf32>, vector<2x8x8xf32> -> vector<2x8x32xf32>
    %274 = vector.shape_cast %273 : vector<2x8x32xf32> to vector<16x32xf32>
    %275 = arith.truncf %274 : vector<16x32xf32> to vector<16x32xbf16>
    %c1_83 = arith.constant 1 : index
    %c0_84 = arith.constant 0 : index
    %c0_85 = arith.constant 0 : index
    %276 = vector.load %arg3[%c1_83, %c0_84, %c0_85] : memref<2x32x32xbf16, #tpu.memory_space<vmem>>, vector<1x32x32xbf16>
    %277 = vector.shape_cast %276 : vector<1x32x32xbf16> to vector<32x32xbf16>
    %cst_86 = arith.constant dense<0.000000e+00> : vector<16x32xf32>
    %278 = tpu.matmul %275, %277, %cst_86 {dimension_numbers = #tpu.dot_dimension_numbers<[1], [0], [0], [1], [0, 0, 1, 1], [], []>} : vector<16x32xbf16>, vector<32x32xbf16>, vector<16x32xf32> -> vector<16x32xf32>
    %279 = vector.broadcast %165 : vector<1x32xf32> to vector<16x32xf32>
    %280 = arith.addf %278, %279 : vector<16x32xf32>
    %281 = arith.addf %160, %280 : vector<16x32xf32>
    %cst_87 = arith.constant dense<0.000000e+00> : vector<16xf32>
    %282 = vector.multi_reduction <add>, %281, %cst_87 [1] : vector<16x32xf32> to vector<16xf32>
    %283 = vector.shape_cast %282 : vector<16xf32> to vector<16x1xf32>
    %cst_88 = arith.constant 3.200000e+01 : f32
    %284 = vector.broadcast %cst_88 : f32 to vector<16x1xf32>
    %285 = arith.divf %283, %284 : vector<16x1xf32>
    %286 = vector.broadcast %285 : vector<16x1xf32> to vector<16x32xf32>
    %287 = arith.subf %281, %286 : vector<16x32xf32>
    %288 = arith.mulf %287, %287 : vector<16x32xf32>
    %cst_89 = arith.constant dense<0.000000e+00> : vector<16xf32>
    %289 = vector.multi_reduction <add>, %288, %cst_89 [1] : vector<16x32xf32> to vector<16xf32>
    %290 = vector.shape_cast %289 : vector<16xf32> to vector<16x1xf32>
    %cst_90 = arith.constant 3.200000e+01 : f32
    %291 = vector.broadcast %cst_90 : f32 to vector<16x1xf32>
    %292 = arith.divf %290, %291 : vector<16x1xf32>
    %293 = vector.broadcast %285 : vector<16x1xf32> to vector<16x32xf32>
    %294 = arith.subf %281, %293 : vector<16x32xf32>
    %cst_91 = arith.constant 9.99999997E-7 : f32
    %295 = vector.broadcast %cst_91 : f32 to vector<16x1xf32>
    %296 = arith.addf %292, %295 : vector<16x1xf32>
    %297 = math.rsqrt %296 : vector<16x1xf32>
    %298 = vector.broadcast %297 : vector<16x1xf32> to vector<16x32xf32>
    %299 = arith.mulf %294, %298 : vector<16x32xf32>
    %300 = vector.broadcast %169 : vector<1x32xf32> to vector<16x32xf32>
    %301 = arith.mulf %299, %300 : vector<16x32xf32>
    %302 = vector.broadcast %170 : vector<1x32xf32> to vector<16x32xf32>
    %303 = arith.addf %301, %302 : vector<16x32xf32>
    %304 = arith.truncf %303 : vector<16x32xf32> to vector<16x32xbf16>
    %c1_92 = arith.constant 1 : index
    %c0_93 = arith.constant 0 : index
    %c0_94 = arith.constant 0 : index
    %305 = vector.load %arg4[%c1_92, %c0_93, %c0_94] : memref<2x32x64xbf16, #tpu.memory_space<vmem>>, vector<1x32x64xbf16>
    %306 = vector.shape_cast %305 : vector<1x32x64xbf16> to vector<32x64xbf16>
    %cst_95 = arith.constant dense<0.000000e+00> : vector<16x64xf32>
    %307 = tpu.matmul %304, %306, %cst_95 {dimension_numbers = #tpu.dot_dimension_numbers<[1], [0], [0], [1], [0, 0, 1, 1], [], []>} : vector<16x32xbf16>, vector<32x64xbf16>, vector<16x64xf32> -> vector<16x64xf32>
    %308 = vector.broadcast %164 : vector<1x64xf32> to vector<16x64xf32>
    %309 = arith.addf %307, %308 : vector<16x64xf32>
    %cst_96 = arith.constant 0.000000e+00 : f32
    %310 = vector.broadcast %cst_96 : f32 to vector<16x64xf32>
    %311 = arith.maximumf %309, %310 : vector<16x64xf32>
    %312 = arith.truncf %311 : vector<16x64xf32> to vector<16x64xbf16>
    %c1_97 = arith.constant 1 : index
    %c0_98 = arith.constant 0 : index
    %c0_99 = arith.constant 0 : index
    %313 = vector.load %arg5[%c1_97, %c0_98, %c0_99] : memref<2x64x32xbf16, #tpu.memory_space<vmem>>, vector<1x64x32xbf16>
    %314 = vector.shape_cast %313 : vector<1x64x32xbf16> to vector<64x32xbf16>
    %cst_100 = arith.constant dense<0.000000e+00> : vector<16x32xf32>
    %315 = tpu.matmul %312, %314, %cst_100 {dimension_numbers = #tpu.dot_dimension_numbers<[1], [0], [0], [1], [0, 0, 1, 1], [], []>} : vector<16x64xbf16>, vector<64x32xbf16>, vector<16x32xf32> -> vector<16x32xf32>
    %316 = vector.broadcast %166 : vector<1x32xf32> to vector<16x32xf32>
    %317 = arith.addf %315, %316 : vector<16x32xf32>
    %318 = arith.addf %281, %317 : vector<16x32xf32>
    %c0_101 = arith.constant 0 : index
    %c0_102 = arith.constant 0 : index
    %319 = vector.load %arg7[%c0_101, %c0_102] : memref<2x32xf32, #tpu.memory_space<vmem>>, vector<1x32xf32>
    %c1_103 = arith.constant 1 : index
    %c0_104 = arith.constant 0 : index
    %320 = vector.load %arg7[%c1_103, %c0_104] : memref<2x32xf32, #tpu.memory_space<vmem>>, vector<1x32xf32>
    %cst_105 = arith.constant dense<0.000000e+00> : vector<16xf32>
    %321 = vector.multi_reduction <add>, %318, %cst_105 [1] : vector<16x32xf32> to vector<16xf32>
    %322 = vector.shape_cast %321 : vector<16xf32> to vector<16x1xf32>
    %cst_106 = arith.constant 3.200000e+01 : f32
    %323 = vector.broadcast %cst_106 : f32 to vector<16x1xf32>
    %324 = arith.divf %322, %323 : vector<16x1xf32>
    %325 = vector.broadcast %324 : vector<16x1xf32> to vector<16x32xf32>
    %326 = arith.subf %318, %325 : vector<16x32xf32>
    %327 = arith.mulf %326, %326 : vector<16x32xf32>
    %cst_107 = arith.constant dense<0.000000e+00> : vector<16xf32>
    %328 = vector.multi_reduction <add>, %327, %cst_107 [1] : vector<16x32xf32> to vector<16xf32>
    %329 = vector.shape_cast %328 : vector<16xf32> to vector<16x1xf32>
    %cst_108 = arith.constant 3.200000e+01 : f32
    %330 = vector.broadcast %cst_108 : f32 to vector<16x1xf32>
    %331 = arith.divf %329, %330 : vector<16x1xf32>
    %332 = vector.broadcast %324 : vector<16x1xf32> to vector<16x32xf32>
    %333 = arith.subf %318, %332 : vector<16x32xf32>
    %cst_109 = arith.constant 9.99999997E-7 : f32
    %334 = vector.broadcast %cst_109 : f32 to vector<16x1xf32>
    %335 = arith.addf %331, %334 : vector<16x1xf32>
    %336 = math.rsqrt %335 : vector<16x1xf32>
    %337 = vector.broadcast %336 : vector<16x1xf32> to vector<16x32xf32>
    %338 = arith.mulf %333, %337 : vector<16x32xf32>
    %339 = vector.broadcast %319 : vector<1x32xf32> to vector<16x32xf32>
    %340 = arith.mulf %338, %339 : vector<16x32xf32>
    %341 = vector.broadcast %320 : vector<1x32xf32> to vector<16x32xf32>
    %342 = arith.addf %340, %341 : vector<16x32xf32>
    %c0_110 = arith.constant 0 : index
    %c0_111 = arith.constant 0 : index
    %343 = vector.load %arg8[%c0_110, %c0_111] : memref<16x32xf32, #tpu.memory_space<vmem>>, vector<16x32xf32>
    tpu.vector_store %arg8[%c0_110, %c0_111], %342 {strides = array<i32>} : memref<16x32xf32, #tpu.memory_space<vmem>>, vector<16x32xf32>,
    return
  }
}

</mosaic_0001>

<llo_original>
// kernel: tpu_custom_call.1
$region0: #{tpu_custom_call.1}
  #allocation0 [shape = 'u32[]', space=smem, size = 0x4, offset = 0x4, fixed_abs, tag = 'smem constant byte address 0x4 - core index']
  #allocation1 [shape = 'u32[144,128]{1,0:T(1,128)}', space=vmem, size = 0x12000, scoped, tag = 'internal scratch']
  %s0 = inlined_call_operand.hbm [shape: f32[16,32], index: 0, kind: input, shape index: {}]
  %s1 = inlined_call_operand.hbm [shape: f32[16,32], index: 1, kind: input, shape index: {}]
  %s2 = inlined_call_operand.vmem [shape: bf16[2,32,96], index: 2, kind: input, shape index: {}]
  %s3 = inlined_call_operand.vmem [shape: bf16[2,32,32], index: 3, kind: input, shape index: {}]
  %s4 = inlined_call_operand.vmem [shape: bf16[2,32,64], index: 4, kind: input, shape index: {}]
  %s5 = inlined_call_operand.vmem [shape: bf16[2,64,32], index: 5, kind: input, shape index: {}]
  %s6 = inlined_call_operand.vmem [shape: f32[2,8,96], index: 6, kind: input, shape index: {}]
  %s7 = inlined_call_operand.vmem [shape: f32[2,32], index: 7, kind: input, shape index: {}]
  %s8 = inlined_call_operand.hbm [shape: f32[16,32], index: 8, kind: output, shape index: {}]
  %s9 = sld [smem:[#allocation0]]
  $region50: #{tpu_custom_call.1} parent=0
    _
  %s11 = ssub.s32 1, %s9
  %s12 = scalar_select 0, %s11, %s9
  $region1: #{tpu_custom_call.1} parent=0
    #allocation2 [shape = 'u8[8192]{0}', space=vmem, size = 0x2000, scoped, tag = 'input window, operand 0, single buffered']
    #allocation3 [shape = 's32[1]{0}', space=sflag, size = 0x4, scoped, tag = 'scoped memory for tpu_custom_call.1']
    #allocation4 [shape = 's32[1]{0}', space=sflag, size = 0x4, scoped, tag = 'scoped memory for tpu_custom_call.1']
    #allocation5 [shape = 'u8[8192]{0}', space=vmem, size = 0x2000, scoped, tag = 'input window, operand 1, single buffered']
    #allocation6 [shape = 's32[1]{0}', space=sflag, size = 0x4, scoped, tag = 'scoped memory for tpu_custom_call.1']
    #allocation7 [shape = 'u8[8192]{0}', space=vmem, size = 0x2000, scoped, tag = 'output window, operand 0, single buffered']
    %13 = vsyncpa [#allocation3], 0
    %14 = vsyncpa [#allocation6], 0
    %15 = vsyncpa [#allocation4], 0
    // Predicated region
    $region2: #{tpu_custom_call.1} parent=1 // pred_check
      _
    $region3: #{tpu_custom_call.1} parent=1 // pred_check_branch
      %17 = sbr.rel (0) target = $region5
    $region4: #{tpu_custom_call.1} parent=1 // pred_region
      %s19 = ssub.s32 256, 256
      %20 = vsyncadd [#allocation3], %s19
      %s21 = sshll.u32 [#allocation2], 4
      %s22 = int_to_ptr.vmem [resolvable:$true] %s21
      %27 = dma.hbm_to_vmem [thread:$0]  %s0, 256, %s22, [#allocation3], 128, 128, 8
    $region5: #{tpu_custom_call.1} parent=1 // pred_fallthru
      _
    // Predicated region
    $region6: #{tpu_custom_call.1} parent=1 // pred_check
      _
    $region7: #{tpu_custom_call.1} parent=1 // pred_check_branch
      %29 = sbr.rel (0) target = $region9
    $region8: #{tpu_custom_call.1} parent=1 // pred_region
      %s31 = ssub.s32 256, 256
      %32 = vsyncadd [#allocation6], %s31
      %s33 = sshll.u32 [#allocation5], 4
      %s34 = int_to_ptr.vmem [resolvable:$true] %s33
      %39 = dma.hbm_to_vmem [thread:$0]  %s1, 256, %s34, [#allocation6], 128, 128, 8
    $region9: #{tpu_custom_call.1} parent=1 // pred_fallthru
      _
    // Predicated region
    $region10: #{tpu_custom_call.1} parent=1 // pred_check
      _
    $region11: #{tpu_custom_call.1} parent=1 // pred_check_branch
      %41 = sbr.rel (0) target = $region13
    $region12: #{tpu_custom_call.1} parent=1 // pred_region
      _
    $region13: #{tpu_custom_call.1} parent=1 // pred_fallthru
      _
    // Predicated region
    $region14: #{tpu_custom_call.1} parent=1 // pred_check
      _
    $region15: #{tpu_custom_call.1} parent=1 // pred_check_branch
      %43 = sbr.rel (0) target = $region17
    $region16: #{tpu_custom_call.1} parent=1 // pred_region
      _
    $region17: #{tpu_custom_call.1} parent=1 // pred_fallthru
      _
    // Predicated region
    $region18: #{tpu_custom_call.1} parent=1 // pred_check
      _
    $region19: #{tpu_custom_call.1} parent=1 // pred_check_branch
      %45 = sbr.rel (0) target = $region21
    $region20: #{tpu_custom_call.1} parent=1 // pred_region
      _
    $region21: #{tpu_custom_call.1} parent=1 // pred_fallthru
      _
    // Predicated region
    $region22: #{tpu_custom_call.1} parent=1 // pred_check
      _
    $region23: #{tpu_custom_call.1} parent=1 // pred_check_branch
      %47 = sbr.rel (0) target = $region25
    $region24: #{tpu_custom_call.1} parent=1 // pred_region
      _
    $region25: #{tpu_custom_call.1} parent=1 // pred_fallthru
      _
    // Predicated region
    $region26: #{tpu_custom_call.1} parent=1 // pred_check
      _
    $region27: #{tpu_custom_call.1} parent=1 // pred_check_branch
      %49 = sbr.rel (0) target = $region29
    $region28: #{tpu_custom_call.1} parent=1 // pred_region
      _
    $region29: #{tpu_custom_call.1} parent=1 // pred_fallthru
      _
    // Predicated region
    $region30: #{tpu_custom_call.1} parent=1 // pred_check
      _
    $region31: #{tpu_custom_call.1} parent=1 // pred_check_branch
      %51 = sbr.rel (0) target = $region33
    $region32: #{tpu_custom_call.1} parent=1 // pred_region
      _
    $region33: #{tpu_custom_call.1} parent=1 // pred_fallthru
      _
    // Predicated region
    $region34: #{tpu_custom_call.1} parent=1 // pred_check
      _
    $region35: #{tpu_custom_call.1} parent=1 // pred_check_branch
      %53 = sbr.rel (0) target = $region37
    $region36: #{tpu_custom_call.1} parent=1 // pred_region
      %54 = dma.done [#allocation3], 256
    $region37: #{tpu_custom_call.1} parent=1 // pred_fallthru
      _
    // Predicated region
    $region38: #{tpu_custom_call.1} parent=1 // pred_check
      _
    $region39: #{tpu_custom_call.1} parent=1 // pred_check_branch
      %56 = sbr.rel (0) target = $region41
    $region40: #{tpu_custom_call.1} parent=1 // pred_region
      %57 = dma.done [#allocation6], 256
    $region41: #{tpu_custom_call.1} parent=1 // pred_fallthru
      _
    %v59 = vld [vmem:[#allocation2] sm:$0xff]
    %v60 = vld [vmem:[#allocation2 + $0x8] sm:$0xff]
    %v61 = vld [vmem:[#allocation5] sm:$0xff]
    %v62 = vld [vmem:[#allocation5 + $0x8] sm:$0xff]
    %v63 = vadd.f32 %v59, %v61
    %v64 = vadd.f32 %v60, %v62
    %v65 = vld [vmem:[%s6] sm:$0xff]
    %vm66 = vcmask 261120
    %v67 = vsel %vm66, %v63, 0.0
    %68 = vadd.xlane.f32.xlu0 %v67
    %v69 = vpop.xlane.xlu0 %68
    %v70 = vsel %vm66, %v64, 0.0
    %71 = vadd.xlane.f32.xlu0 %v70
    %v72 = vpop.xlane.xlu0 %71
    %v73 = vrcp.pop 32.0
    %v74 = vmul.f32 %v69, %v73
    %v75 = vmul.f32 %v72, %v73
    %v76 = vsub.f32 %v63, %v74
    %v77 = vsub.f32 %v64, %v75
    %v78 = vmul.f32 %v76, %v76
    %v79 = vmul.f32 %v77, %v77
    %v80 = vsel %vm66, %v78, 0.0
    %81 = vadd.xlane.f32.xlu0 %v80
    %v82 = vpop.xlane.xlu0 %81
    %v83 = vsel %vm66, %v79, 0.0
    %84 = vadd.xlane.f32.xlu0 %v83
    %v85 = vpop.xlane.xlu0 %84
    %v86 = vmul.f32 %v82, %v73
    %v87 = vmul.f32 %v85, %v73
    %v88 = vadd.f32 %v86, 1e-06
    %v89 = vadd.f32 %v87, 1e-06
    %v90 = vrsqrt.pop %v88
    %v91 = vrsqrt.pop %v89
    %v92 = vmul.f32 %v76, %v90
    %v93 = vmul.f32 %v77, %v91
    %v94 = vlaneseq
    %v95 = vshrl.u32 %v94, 7
    %v96 = vsub.s32 4, %v95
    %v97 = vrot.slane %v65, %v96
    %v98 = vmul.f32 %v92, %v97
    %v99 = vmul.f32 %v93, %v97
    %v100 = vlaneseq
    %v101 = vshrl.u32 %v100, 7
    %v102 = vsub.s32 5, %v101
    %v103 = vrot.slane %v65, %v102
    %v104 = vadd.f32 %v98, %v103
    %v105 = vadd.f32 %v99, %v103
    %v106 = vpack.c.bf16 %v105, %v104
    %v107 = vld [vmem:[%s2] sm:$0xf]
    %v108 = vld [vmem:[%s2 + $0x4] sm:$0xf]
    %v109 = vld [vmem:[%s2 + $0x8] sm:$0xf]
    %v110 = vld [vmem:[%s2 + $0xc] sm:$0xf]
    %v111 = vlaneseq
    %v112 = vshrl.u32 %v111, 7
    %v113 = vsub.s32 0, %v112
    %v114 = vrot.slane %v65, %v113
    %v119 = vunpack.c.l.b16 %v107
    %v120 = vunpack.c.l.b16 %v108
    %v121 = vunpack.c.l.b16 %v109
    %v122 = vunpack.c.l.b16 %v110
    %v123 = vpack.c.b16 %v120, %v119
    %v124 = vpack.c.b16 %v122, %v121
    %v128 = vsel %vm66, %v106, 0
    %130 = vmatprep.subr.bf16.mxu0 0
    %131 = vmatpush1.bf16.msra.mxu0 %v123
    %132 = vmatprep.subr.bf16.mxu0 0
    %133 = vmatpush1.bf16.msra.mxu0 %v124
    %134 = vmatprep.subr.bf16.mxu0 0
    %135 = vmatpush1.bf16.msra.mxu0 0
    %136 = vmatprep.subr.bf16.mxu0 0
    %137 = vmatpush1.bf16.msra.mxu0 0
    %138 = vmatprep.subr.bf16.mxu0 0
    %139 = vmatpush1.bf16.msra.mxu0 0
    %140 = vmatprep.subr.bf16.mxu0 0
    %141 = vmatpush1.bf16.msra.mxu0 0
    %142 = vmatprep.subr.bf16.mxu0 0
    %143 = vmatpush1.bf16.msra.mxu0 0
    %144 = vmatprep.subr.bf16.mxu0 0
    %145 = vmatpush1.bf16.msra.mxu0 0
    %146 = vmatprep.subr.bf16.mxu0 0
    %147 = vmatpush1.bf16.msra.mxu0 0
    %148 = vmatprep.subr.bf16.mxu0 0
    %149 = vmatpush1.bf16.msra.mxu0 0
    %150 = vmatprep.subr.bf16.mxu0 0
    %151 = vmatpush1.bf16.msra.mxu0 0
    %152 = vmatprep.subr.bf16.mxu0 0
    %153 = vmatpush1.bf16.msra.mxu0 0
    %154 = vmatprep.subr.bf16.mxu0 0
    %155 = vmatpush1.bf16.msra.mxu0 0
    %156 = vmatprep.subr.bf16.mxu0 0
    %157 = vmatpush1.bf16.msra.mxu0 0
    %158 = vmatprep.subr.bf16.mxu0 0
    %159 = vmatpush1.bf16.msra.mxu0 0
    %160 = vmatprep.subr.bf16.mxu0 0
    %161 = vmatpush1.bf16.msra.mxu0 0
    %162 = vmatprep.mubr.bf16.mxu0 0
    %163 = vmatmul.mubr.bf16.gmra.mrb[0].mxu0 %v128
    %v164 = vpop.f32.mrb[0].mxu0
    %v165 = vadd.f32 %v114, %v164
    %v166 = vpop.f32.mrb[0].mxu0
    %v167 = vpop.f32.mrb[0].mxu0
    %v168 = vadd.f32 %v114, %v167
    %v169 = vpop.f32.mrb[0].mxu0
    %170 = vdwg.mxu0
    %v171 = vpack.c.bf16 %v168, %v165
    %v173 = vunpack.c.l.b16 %v171
    %v174 = vunpack.c.h.b16 %v171
    %v175 = vpack.c.b16 %v173, %v173
    %v176 = vpack.c.b16 %v174, %v174
    %177 = vrot.lane.b32.xlu0 %v175, 96
    %v178 = vpop.permute.xlu0 %177
    %vm179 = vcmask 64512
    %v181 = vsel %vm179, %v175, 0
    %v184 = vsel %vm179, %v178, 0
    %186 = vmatprep.subr.bf16.mxu0 0
    %187 = vmatpush1.bf16.xpose.msra.mxu0 %v184
    %188 = vmatprep.subr.bf16.mxu0 0
    %189 = vmatpush1.bf16.xpose.msra.mxu0 0
    %190 = vmatprep.subr.bf16.mxu0 0
    %191 = vmatpush1.bf16.xpose.msra.mxu0 0
    %192 = vmatprep.subr.bf16.mxu0 0
    %193 = vmatpush1.bf16.xpose.msra.mxu0 0
    %194 = vmatprep.subr.bf16.mxu0 0
    %195 = vmatpush1.bf16.xpose.msra.mxu0 0
    %196 = vmatprep.subr.bf16.mxu0 0
    %197 = vmatpush1.bf16.xpose.msra.mxu0 0
    %198 = vmatprep.subr.bf16.mxu0 0
    %199 = vmatpush1.bf16.xpose.msra.mxu0 0
    %200 = vmatprep.subr.bf16.mxu0 0
    %201 = vmatpush1.bf16.xpose.msra.mxu0 0
    %202 = vmatprep.subr.bf16.mxu0 0
    %203 = vmatpush1.bf16.xpose.msra.mxu0 0
    %204 = vmatprep.subr.bf16.mxu0 0
    %205 = vmatpush1.bf16.xpose.msra.mxu0 0
    %206 = vmatprep.subr.bf16.mxu0 0
    %207 = vmatpush1.bf16.xpose.msra.mxu0 0
    %208 = vmatprep.subr.bf16.mxu0 0
    %209 = vmatpush1.bf16.xpose.msra.mxu0 0
    %210 = vmatprep.subr.bf16.mxu0 0
    %211 = vmatpush1.bf16.xpose.msra.mxu0 0
    %212 = vmatprep.subr.bf16.mxu0 0
    %213 = vmatpush1.bf16.xpose.msra.mxu0 0
    %214 = vmatprep.subr.bf16.mxu0 0
    %215 = vmatpush1.bf16.xpose.msra.mxu0 0
    %216 = vmatprep.subr.bf16.mxu0 0
    %217 = vmatpush1.bf16.xpose.msra.mxu0 0
    %218 = vmatprep.mubr.bf16.mxu0 0
    %219 = vmatmul.mubr.bf16.gmra.mrb[0].mxu0 %v181
    %v220 = vpop.f32.mrb[0].mxu0
    %v221 = vadd.f32 0.0, %v220
    %v222 = vpop.f32.mrb[0].mxu0
    %v223 = vpop.f32.mrb[0].mxu0
    %v224 = vpop.f32.mrb[0].mxu0
    %225 = vdwg.mxu0
    %226 = vrot.lane.b32.xlu0 %v176, 96
    %v227 = vpop.permute.xlu0 %226
    %v229 = vsel %vm179, %v176, 0
    %v232 = vsel %vm179, %v227, 0
    %234 = vmatprep.subr.bf16.mxu0 0
    %235 = vmatpush1.bf16.xpose.msra.mxu0 %v232
    %236 = vmatprep.subr.bf16.mxu0 0
    %237 = vmatpush1.bf16.xpose.msra.mxu0 0
    %238 = vmatprep.subr.bf16.mxu0 0
    %239 = vmatpush1.bf16.xpose.msra.mxu0 0
    %240 = vmatprep.subr.bf16.mxu0 0
    %241 = vmatpush1.bf16.xpose.msra.mxu0 0
    %242 = vmatprep.subr.bf16.mxu0 0
    %243 = vmatpush1.bf16.xpose.msra.mxu0 0
    %244 = vmatprep.subr.bf16.mxu0 0
    %245 = vmatpush1.bf16.xpose.msra.mxu0 0
    %246 = vmatprep.subr.bf16.mxu0 0
    %247 = vmatpush1.bf16.xpose.msra.mxu0 0
    %248 = vmatprep.subr.bf16.mxu0 0
    %249 = vmatpush1.bf16.xpose.msra.mxu0 0
    %250 = vmatprep.subr.bf16.mxu0 0
    %251 = vmatpush1.bf16.xpose.msra.mxu0 0
    %252 = vmatprep.subr.bf16.mxu0 0
    %253 = vmatpush1.bf16.xpose.msra.mxu0 0
    %254 = vmatprep.subr.bf16.mxu0 0
    %255 = vmatpush1.bf16.xpose.msra.mxu0 0
    %256 = vmatprep.subr.bf16.mxu0 0
    %257 = vmatpush1.bf16.xpose.msra.mxu0 0
    %258 = vmatprep.subr.bf16.mxu0 0
    %259 = vmatpush1.bf16.xpose.msra.mxu0 0
    %260 = vmatprep.subr.bf16.mxu0 0
    %261 = vmatpush1.bf16.xpose.msra.mxu0 0
    %262 = vmatprep.subr.bf16.mxu0 0
    %263 = vmatpush1.bf16.xpose.msra.mxu0 0
    %264 = vmatprep.subr.bf16.mxu0 0
    %265 = vmatpush1.bf16.xpose.msra.mxu0 0
    %266 = vmatprep.mubr.bf16.mxu0 0
    %267 = vmatmul.mubr.bf16.gmra.mrb[0].mxu0 %v229
    %v268 = vpop.f32.mrb[0].mxu0
    %v269 = vadd.f32 0.0, %v268
    %v270 = vpop.f32.mrb[0].mxu0
    %v271 = vpop.f32.mrb[0].mxu0
    %v272 = vpop.f32.mrb[0].mxu0
    %273 = vdwg.mxu0
    %v274 = vmul.f32 %v221, 0.35355338
    %v275 = vmul.f32 %v269, 0.35355338
    %v276 = vsel %vm179, %v274, -inf
    %277 = vmax.xlane.f32.xlu0 %v276
    %v278 = vpop.xlane.xlu0 %277
    %v279 = vsel %vm179, %v275, -inf
    %280 = vmax.xlane.f32.xlu0 %v279
    %v281 = vpop.xlane.xlu0 %280
    %v282 = vsub.f32 %v274, %v278
    %v283 = vsub.f32 %v275, %v281
    %v284 = vmul.f32 %v282, 1.442695
    %v285 = vpow.pop %v284
    %v286 = vmul.f32 %v283, 1.442695
    %v287 = vpow.pop %v286
    %v288 = vsel %vm179, %v285, 0.0
    %289 = vadd.xlane.f32.xlu0 %v288
    %v290 = vpop.xlane.xlu0 %289
    %v291 = vsel %vm179, %v287, 0.0
    %292 = vadd.xlane.f32.xlu0 %v291
    %v293 = vpop.xlane.xlu0 %292
    %v294 = vrcp.pop %v290
    %v295 = vrcp.pop %v293
    %v296 = vmul.f32 %v285, %v294
    %v297 = vmul.f32 %v287, %v295
    %v298 = vpack.c.bf16 %v296, %v296
    %v299 = vpack.c.bf16 %v297, %v297
    %300 = vrot.lane.b32.xlu0 %v175, 64
    %v301 = vpop.permute.xlu0 %300
    %v303 = vsel %vm179, %v298, 0
    %vm305 = vcmask 1043456
    %v307 = vsel %vm305, %v301, 0
    %309 = vmatprep.subr.bf16.mxu0 0
    %310 = vmatpush1.bf16.msra.mxu0 %v307
    %311 = vmatprep.subr.bf16.mxu0 0
    %312 = vmatpush1.bf16.msra.mxu0 0
    %313 = vmatprep.subr.bf16.mxu0 0
    %314 = vmatpush1.bf16.msra.mxu0 0
    %315 = vmatprep.subr.bf16.mxu0 0
    %316 = vmatpush1.bf16.msra.mxu0 0
    %317 = vmatprep.subr.bf16.mxu0 0
    %318 = vmatpush1.bf16.msra.mxu0 0
    %319 = vmatprep.subr.bf16.mxu0 0
    %320 = vmatpush1.bf16.msra.mxu0 0
    %321 = vmatprep.subr.bf16.mxu0 0
    %322 = vmatpush1.bf16.msra.mxu0 0
    %323 = vmatprep.subr.bf16.mxu0 0
    %324 = vmatpush1.bf16.msra.mxu0 0
    %325 = vmatprep.subr.bf16.mxu0 0
    %326 = vmatpush1.bf16.msra.mxu0 0
    %327 = vmatprep.subr.bf16.mxu0 0
    %328 = vmatpush1.bf16.msra.mxu0 0
    %329 = vmatprep.subr.bf16.mxu0 0
    %330 = vmatpush1.bf16.msra.mxu0 0
    %331 = vmatprep.subr.bf16.mxu0 0
    %332 = vmatpush1.bf16.msra.mxu0 0
    %333 = vmatprep.subr.bf16.mxu0 0
    %334 = vmatpush1.bf16.msra.mxu0 0
    %335 = vmatprep.subr.bf16.mxu0 0
    %336 = vmatpush1.bf16.msra.mxu0 0
    %337 = vmatprep.subr.bf16.mxu0 0
    %338 = vmatpush1.bf16.msra.mxu0 0
    %339 = vmatprep.subr.bf16.mxu0 0
    %340 = vmatpush1.bf16.msra.mxu0 0
    %341 = vmatprep.mubr.bf16.mxu0 0
    %342 = vmatmul.mubr.bf16.gmra.mrb[0].mxu0 %v303
    %v343 = vpop.f32.mrb[0].mxu0
    %v344 = vadd.f32 0.0, %v343
    %v345 = vpop.f32.mrb[0].mxu0
    %v346 = vpop.f32.mrb[0].mxu0
    %v347 = vpop.f32.mrb[0].mxu0
    %348 = vdwg.mxu0
    %349 = vrot.lane.b32.xlu0 %v176, 64
    %v350 = vpop.permute.xlu0 %349
    %v352 = vsel %vm179, %v299, 0
    %v355 = vsel %vm305, %v350, 0
    %357 = vmatprep.subr.bf16.mxu0 0
    %358 = vmatpush1.bf16.msra.mxu0 %v355
    %359 = vmatprep.subr.bf16.mxu0 0
    %360 = vmatpush1.bf16.msra.mxu0 0
    %361 = vmatprep.subr.bf16.mxu0 0
    %362 = vmatpush1.bf16.msra.mxu0 0
    %363 = vmatprep.subr.bf16.mxu0 0
    %364 = vmatpush1.bf16.msra.mxu0 0
    %365 = vmatprep.subr.bf16.mxu0 0
    %366 = vmatpush1.bf16.msra.mxu0 0
    %367 = vmatprep.subr.bf16.mxu0 0
    %368 = vmatpush1.bf16.msra.mxu0 0
    %369 = vmatprep.subr.bf16.mxu0 0
    %370 = vmatpush1.bf16.msra.mxu0 0
    %371 = vmatprep.subr.bf16.mxu0 0
    %372 = vmatpush1.bf16.msra.mxu0 0
    %373 = vmatprep.subr.bf16.mxu0 0
    %374 = vmatpush1.bf16.msra.mxu0 0
    %375 = vmatprep.subr.bf16.mxu0 0
    %376 = vmatpush1.bf16.msra.mxu0 0
    %377 = vmatprep.subr.bf16.mxu0 0
    %378 = vmatpush1.bf16.msra.mxu0 0
    %379 = vmatprep.subr.bf16.mxu0 0
    %380 = vmatpush1.bf16.msra.mxu0 0
    %381 = vmatprep.subr.bf16.mxu0 0
    %382 = vmatpush1.bf16.msra.mxu0 0
    %383 = vmatprep.subr.bf16.mxu0 0
    %384 = vmatpush1.bf16.msra.mxu0 0
    %385 = vmatprep.subr.bf16.mxu0 0
    %386 = vmatpush1.bf16.msra.mxu0 0
    %387 = vmatprep.subr.bf16.mxu0 0
    %388 = vmatpush1.bf16.msra.mxu0 0
    %389 = vmatprep.mubr.bf16.mxu0 0
    %390 = vmatmul.mubr.bf16.gmra.mrb[0].mxu0 %v352
    %v391 = vpop.f32.mrb[0].mxu0
    %v392 = vadd.f32 0.0, %v391
    %v393 = vpop.f32.mrb[0].mxu0
    %v394 = vpop.f32.mrb[0].mxu0
    %v395 = vpop.f32.mrb[0].mxu0
    %396 = vdwg.mxu0
    %397 = vrot.lane.b32.xlu0 %v175, 120
    %v398 = vpop.permute.xlu0 %397
    %399 = vrot.lane.b32.xlu0 %v175, 88
    %v400 = vpop.permute.xlu0 %399
    %v402 = vsel %vm179, %v398, 0
    %v405 = vsel %vm179, %v400, 0
    %407 = vmatprep.subr.bf16.mxu0 0
    %408 = vmatpush1.bf16.xpose.msra.mxu0 %v405
    %409 = vmatprep.subr.bf16.mxu0 0
    %410 = vmatpush1.bf16.xpose.msra.mxu0 0
    %411 = vmatprep.subr.bf16.mxu0 0
    %412 = vmatpush1.bf16.xpose.msra.mxu0 0
    %413 = vmatprep.subr.bf16.mxu0 0
    %414 = vmatpush1.bf16.xpose.msra.mxu0 0
    %415 = vmatprep.subr.bf16.mxu0 0
    %416 = vmatpush1.bf16.xpose.msra.mxu0 0
    %417 = vmatprep.subr.bf16.mxu0 0
    %418 = vmatpush1.bf16.xpose.msra.mxu0 0
    %419 = vmatprep.subr.bf16.mxu0 0
    %420 = vmatpush1.bf16.xpose.msra.mxu0 0
    %421 = vmatprep.subr.bf16.mxu0 0
    %422 = vmatpush1.bf16.xpose.msra.mxu0 0
    %423 = vmatprep.subr.bf16.mxu0 0
    %424 = vmatpush1.bf16.xpose.msra.mxu0 0
    %425 = vmatprep.subr.bf16.mxu0 0
    %426 = vmatpush1.bf16.xpose.msra.mxu0 0
    %427 = vmatprep.subr.bf16.mxu0 0
    %428 = vmatpush1.bf16.xpose.msra.mxu0 0
    %429 = vmatprep.subr.bf16.mxu0 0
    %430 = vmatpush1.bf16.xpose.msra.mxu0 0
    %431 = vmatprep.subr.bf16.mxu0 0
    %432 = vmatpush1.bf16.xpose.msra.mxu0 0
    %433 = vmatprep.subr.bf16.mxu0 0
    %434 = vmatpush1.bf16.xpose.msra.mxu0 0
    %435 = vmatprep.subr.bf16.mxu0 0
    %436 = vmatpush1.bf16.xpose.msra.mxu0 0
    %437 = vmatprep.subr.bf16.mxu0 0
    %438 = vmatpush1.bf16.xpose.msra.mxu0 0
    %439 = vmatprep.mubr.bf16.mxu0 0
    %440 = vmatmul.mubr.bf16.gmra.mrb[0].mxu0 %v402
    %v441 = vpop.f32.mrb[0].mxu0
    %v442 = vadd.f32 0.0, %v441
    %v443 = vpop.f32.mrb[0].mxu0
    %v444 = vpop.f32.mrb[0].mxu0
    %v445 = vpop.f32.mrb[0].mxu0
    %446 = vdwg.mxu0
    %447 = vrot.lane.b32.xlu0 %v176, 120
    %v448 = vpop.permute.xlu0 %447
    %449 = vrot.lane.b32.xlu0 %v176, 88
    %v450 = vpop.permute.xlu0 %449
    %v452 = vsel %vm179, %v448, 0
    %v455 = vsel %vm179, %v450, 0
    %457 = vmatprep.subr.bf16.mxu0 0
    %458 = vmatpush1.bf16.xpose.msra.mxu0 %v455
    %459 = vmatprep.subr.bf16.mxu0 0
    %460 = vmatpush1.bf16.xpose.msra.mxu0 0
    %461 = vmatprep.subr.bf16.mxu0 0
    %462 = vmatpush1.bf16.xpose.msra.mxu0 0
    %463 = vmatprep.subr.bf16.mxu0 0
    %464 = vmatpush1.bf16.xpose.msra.mxu0 0
    %465 = vmatprep.subr.bf16.mxu0 0
    %466 = vmatpush1.bf16.xpose.msra.mxu0 0
    %467 = vmatprep.subr.bf16.mxu0 0
    %468 = vmatpush1.bf16.xpose.msra.mxu0 0
    %469 = vmatprep.subr.bf16.mxu0 0
    %470 = vmatpush1.bf16.xpose.msra.mxu0 0
    %471 = vmatprep.subr.bf16.mxu0 0
    %472 = vmatpush1.bf16.xpose.msra.mxu0 0
    %473 = vmatprep.subr.bf16.mxu0 0
    %474 = vmatpush1.bf16.xpose.msra.mxu0 0
    %475 = vmatprep.subr.bf16.mxu0 0
    %476 = vmatpush1.bf16.xpose.msra.mxu0 0
    %477 = vmatprep.subr.bf16.mxu0 0
    %478 = vmatpush1.bf16.xpose.msra.mxu0 0
    %479 = vmatprep.subr.bf16.mxu0 0
    %480 = vmatpush1.bf16.xpose.msra.mxu0 0
    %481 = vmatprep.subr.bf16.mxu0 0
    %482 = vmatpush1.bf16.xpose.msra.mxu0 0
    %483 = vmatprep.subr.bf16.mxu0 0
    %484 = vmatpush1.bf16.xpose.msra.mxu0 0
    %485 = vmatprep.subr.bf16.mxu0 0
    %486 = vmatpush1.bf16.xpose.msra.mxu0 0
    %487 = vmatprep.subr.bf16.mxu0 0
    %488 = vmatpush1.bf16.xpose.msra.mxu0 0
    %489 = vmatprep.mubr.bf16.mxu0 0
    %490 = vmatmul.mubr.bf16.gmra.mrb[0].mxu0 %v452
    %v491 = vpop.f32.mrb[0].mxu0
    %v492 = vadd.f32 0.0, %v491
    %v493 = vpop.f32.mrb[0].mxu0
    %v494 = vpop.f32.mrb[0].mxu0
    %v495 = vpop.f32.mrb[0].mxu0
    %496 = vdwg.mxu0
    %v497 = vmul.f32 %v442, 0.35355338
    %v498 = vmul.f32 %v492, 0.35355338
    %v499 = vsel %vm179, %v497, -inf
    %500 = vmax.xlane.f32.xlu0 %v499
    %v501 = vpop.xlane.xlu0 %500
    %v502 = vsel %vm179, %v498, -inf
    %503 = vmax.xlane.f32.xlu0 %v502
    %v504 = vpop.xlane.xlu0 %503
    %v505 = vsub.f32 %v497, %v501
    %v506 = vsub.f32 %v498, %v504
    %v507 = vmul.f32 %v505, 1.442695
    %v508 = vpow.pop %v507
    %v509 = vmul.f32 %v506, 1.442695
    %v510 = vpow.pop %v509
    %v511 = vsel %vm179, %v508, 0.0
    %512 = vadd.xlane.f32.xlu0 %v511
    %v513 = vpop.xlane.xlu0 %512
    %v514 = vsel %vm179, %v510, 0.0
    %515 = vadd.xlane.f32.xlu0 %v514
    %v516 = vpop.xlane.xlu0 %515
    %v517 = vrcp.pop %v513
    %v518 = vrcp.pop %v516
    %v519 = vmul.f32 %v508, %v517
    %v520 = vmul.f32 %v510, %v518
    %v521 = vpack.c.bf16 %v519, %v519
    %v522 = vpack.c.bf16 %v520, %v520
    %523 = vrot.lane.b32.xlu0 %v175, 56
    %v524 = vpop.permute.xlu0 %523
    %v526 = vsel %vm179, %v521, 0
    %v529 = vsel %vm305, %v524, 0
    %531 = vmatprep.subr.bf16.mxu0 0
    %532 = vmatpush1.bf16.msra.mxu0 %v529
    %533 = vmatprep.subr.bf16.mxu0 0
    %534 = vmatpush1.bf16.msra.mxu0 0
    %535 = vmatprep.subr.bf16.mxu0 0
    %536 = vmatpush1.bf16.msra.mxu0 0
    %537 = vmatprep.subr.bf16.mxu0 0
    %538 = vmatpush1.bf16.msra.mxu0 0
    %539 = vmatprep.subr.bf16.mxu0 0
    %540 = vmatpush1.bf16.msra.mxu0 0
    %541 = vmatprep.subr.bf16.mxu0 0
    %542 = vmatpush1.bf16.msra.mxu0 0
    %543 = vmatprep.subr.bf16.mxu0 0
    %544 = vmatpush1.bf16.msra.mxu0 0
    %545 = vmatprep.subr.bf16.mxu0 0
    %546 = vmatpush1.bf16.msra.mxu0 0
    %547 = vmatprep.subr.bf16.mxu0 0
    %548 = vmatpush1.bf16.msra.mxu0 0
    %549 = vmatprep.subr.bf16.mxu0 0
    %550 = vmatpush1.bf16.msra.mxu0 0
    %551 = vmatprep.subr.bf16.mxu0 0
    %552 = vmatpush1.bf16.msra.mxu0 0
    %553 = vmatprep.subr.bf16.mxu0 0
    %554 = vmatpush1.bf16.msra.mxu0 0
    %555 = vmatprep.subr.bf16.mxu0 0
    %556 = vmatpush1.bf16.msra.mxu0 0
    %557 = vmatprep.subr.bf16.mxu0 0
    %558 = vmatpush1.bf16.msra.mxu0 0
    %559 = vmatprep.subr.bf16.mxu0 0
    %560 = vmatpush1.bf16.msra.mxu0 0
    %561 = vmatprep.subr.bf16.mxu0 0
    %562 = vmatpush1.bf16.msra.mxu0 0
    %563 = vmatprep.mubr.bf16.mxu0 0
    %564 = vmatmul.mubr.bf16.gmra.mrb[0].mxu0 %v526
    %v565 = vpop.f32.mrb[0].mxu0
    %v566 = vadd.f32 0.0, %v565
    %v567 = vpop.f32.mrb[0].mxu0
    %v568 = vpop.f32.mrb[0].mxu0
    %v569 = vpop.f32.mrb[0].mxu0
    %570 = vdwg.mxu0
    %571 = vrot.lane.b32.xlu0 %v176, 56
    %v572 = vpop.permute.xlu0 %571
    %v574 = vsel %vm179, %v522, 0
    %v577 = vsel %vm305, %v572, 0
    %579 = vmatprep.subr.bf16.mxu0 0
    %580 = vmatpush1.bf16.msra.mxu0 %v577
    %581 = vmatprep.subr.bf16.mxu0 0
    %582 = vmatpush1.bf16.msra.mxu0 0
    %583 = vmatprep.subr.bf16.mxu0 0
    %584 = vmatpush1.bf16.msra.mxu0 0
    %585 = vmatprep.subr.bf16.mxu0 0
    %586 = vmatpush1.bf16.msra.mxu0 0
    %587 = vmatprep.subr.bf16.mxu0 0
    %588 = vmatpush1.bf16.msra.mxu0 0
    %589 = vmatprep.subr.bf16.mxu0 0
    %590 = vmatpush1.bf16.msra.mxu0 0
    %591 = vmatprep.subr.bf16.mxu0 0
    %592 = vmatpush1.bf16.msra.mxu0 0
    %593 = vmatprep.subr.bf16.mxu0 0
    %594 = vmatpush1.bf16.msra.mxu0 0
    %595 = vmatprep.subr.bf16.mxu0 0
    %596 = vmatpush1.bf16.msra.mxu0 0
    %597 = vmatprep.subr.bf16.mxu0 0
    %598 = vmatpush1.bf16.msra.mxu0 0
    %599 = vmatprep.subr.bf16.mxu0 0
    %600 = vmatpush1.bf16.msra.mxu0 0
    %601 = vmatprep.subr.bf16.mxu0 0
    %602 = vmatpush1.bf16.msra.mxu0 0
    %603 = vmatprep.subr.bf16.mxu0 0
    %604 = vmatpush1.bf16.msra.mxu0 0
    %605 = vmatprep.subr.bf16.mxu0 0
    %606 = vmatpush1.bf16.msra.mxu0 0
    %607 = vmatprep.subr.bf16.mxu0 0
    %608 = vmatpush1.bf16.msra.mxu0 0
    %609 = vmatprep.subr.bf16.mxu0 0
    %610 = vmatpush1.bf16.msra.mxu0 0
    %611 = vmatprep.mubr.bf16.mxu0 0
    %612 = vmatmul.mubr.bf16.gmra.mrb[0].mxu0 %v574
    %v613 = vpop.f32.mrb[0].mxu0
    %v614 = vadd.f32 0.0, %v613
    %v615 = vpop.f32.mrb[0].mxu0
    %v616 = vpop.f32.mrb[0].mxu0
    %v617 = vpop.f32.mrb[0].mxu0
    %618 = vdwg.mxu0
    %619 = vrot.lane.b32.xlu0 %v175, 112
    %v620 = vpop.permute.xlu0 %619
    %621 = vrot.lane.b32.xlu0 %v175, 80
    %v622 = vpop.permute.xlu0 %621
    %v624 = vsel %vm179, %v620, 0
    %v627 = vsel %vm179, %v622, 0
    %629 = vmatprep.subr.bf16.mxu0 0
    %630 = vmatpush1.bf16.xpose.msra.mxu0 %v627
    %631 = vmatprep.subr.bf16.mxu0 0
    %632 = vmatpush1.bf16.xpose.msra.mxu0 0
    %633 = vmatprep.subr.bf16.mxu0 0
    %634 = vmatpush1.bf16.xpose.msra.mxu0 0
    %635 = vmatprep.subr.bf16.mxu0 0
    %636 = vmatpush1.bf16.xpose.msra.mxu0 0
    %637 = vmatprep.subr.bf16.mxu0 0
    %638 = vmatpush1.bf16.xpose.msra.mxu0 0
    %639 = vmatprep.subr.bf16.mxu0 0
    %640 = vmatpush1.bf16.xpose.msra.mxu0 0
    %641 = vmatprep.subr.bf16.mxu0 0
    %642 = vmatpush1.bf16.xpose.msra.mxu0 0
    %643 = vmatprep.subr.bf16.mxu0 0
    %644 = vmatpush1.bf16.xpose.msra.mxu0 0
    %645 = vmatprep.subr.bf16.mxu0 0
    %646 = vmatpush1.bf16.xpose.msra.mxu0 0
    %647 = vmatprep.subr.bf16.mxu0 0
    %648 = vmatpush1.bf16.xpose.msra.mxu0 0
    %649 = vmatprep.subr.bf16.mxu0 0
    %650 = vmatpush1.bf16.xpose.msra.mxu0 0
    %651 = vmatprep.subr.bf16.mxu0 0
    %652 = vmatpush1.bf16.xpose.msra.mxu0 0
    %653 = vmatprep.subr.bf16.mxu0 0
    %654 = vmatpush1.bf16.xpose.msra.mxu0 0
    %655 = vmatprep.subr.bf16.mxu0 0
    %656 = vmatpush1.bf16.xpose.msra.mxu0 0
    %657 = vmatprep.subr.bf16.mxu0 0
    %658 = vmatpush1.bf16.xpose.msra.mxu0 0
    %659 = vmatprep.subr.bf16.mxu0 0
    %660 = vmatpush1.bf16.xpose.msra.mxu0 0
    %661 = vmatprep.mubr.bf16.mxu0 0
    %662 = vmatmul.mubr.bf16.gmra.mrb[0].mxu0 %v624
    %v663 = vpop.f32.mrb[0].mxu0
    %v664 = vadd.f32 0.0, %v663
    %v665 = vpop.f32.mrb[0].mxu0
    %v666 = vpop.f32.mrb[0].mxu0
    %v667 = vpop.f32.mrb[0].mxu0
    %668 = vdwg.mxu0
    %669 = vrot.lane.b32.xlu0 %v176, 112
    %v670 = vpop.permute.xlu0 %669
    %671 = vrot.lane.b32.xlu0 %v176, 80
    %v672 = vpop.permute.xlu0 %671
    %v674 = vsel %vm179, %v670, 0
    %v677 = vsel %vm179, %v672, 0
    %679 = vmatprep.subr.bf16.mxu0 0
    %680 = vmatpush1.bf16.xpose.msra.mxu0 %v677
    %681 = vmatprep.subr.bf16.mxu0 0
    %682 = vmatpush1.bf16.xpose.msra.mxu0 0
    %683 = vmatprep.subr.bf16.mxu0 0
    %684 = vmatpush1.bf16.xpose.msra.mxu0 0
    %685 = vmatprep.subr.bf16.mxu0 0
    %686 = vmatpush1.bf16.xpose.msra.mxu0 0
    %687 = vmatprep.subr.bf16.mxu0 0
    %688 = vmatpush1.bf16.xpose.msra.mxu0 0
    %689 = vmatprep.subr.bf16.mxu0 0
    %690 = vmatpush1.bf16.xpose.msra.mxu0 0
    %691 = vmatprep.subr.bf16.mxu0 0
    %692 = vmatpush1.bf16.xpose.msra.mxu0 0
    %693 = vmatprep.subr.bf16.mxu0 0
    %694 = vmatpush1.bf16.xpose.msra.mxu0 0
    %695 = vmatprep.subr.bf16.mxu0 0
    %696 = vmatpush1.bf16.xpose.msra.mxu0 0
    %697 = vmatprep.subr.bf16.mxu0 0
    %698 = vmatpush1.bf16.xpose.msra.mxu0 0
    %699 = vmatprep.subr.bf16.mxu0 0
    %700 = vmatpush1.bf16.xpose.msra.mxu0 0
    %701 = vmatprep.subr.bf16.mxu0 0
    %702 = vmatpush1.bf16.xpose.msra.mxu0 0
    %703 = vmatprep.subr.bf16.mxu0 0
    %704 = vmatpush1.bf16.xpose.msra.mxu0 0
    %705 = vmatprep.subr.bf16.mxu0 0
    %706 = vmatpush1.bf16.xpose.msra.mxu0 0
    %707 = vmatprep.subr.bf16.mxu0 0
    %708 = vmatpush1.bf16.xpose.msra.mxu0 0
    %709 = vmatprep.subr.bf16.mxu0 0
    %710 = vmatpush1.bf16.xpose.msra.mxu0 0
    %711 = vmatprep.mubr.bf16.mxu0 0
    %712 = vmatmul.mubr.bf16.gmra.mrb[0].mxu0 %v674
    %v713 = vpop.f32.mrb[0].mxu0
    %v714 = vadd.f32 0.0, %v713
    %v715 = vpop.f32.mrb[0].mxu0
    %v716 = vpop.f32.mrb[0].mxu0
    %v717 = vpop.f32.mrb[0].mxu0
    %718 = vdwg.mxu0
    %v719 = vmul.f32 %v664, 0.35355338
    %v720 = vmul.f32 %v714, 0.35355338
    %v721 = vsel %vm179, %v719, -inf
    %722 = vmax.xlane.f32.xlu0 %v721
    %v723 = vpop.xlane.xlu0 %722
    %v724 = vsel %vm179, %v720, -inf
    %725 = vmax.xlane.f32.xlu0 %v724
    %v726 = vpop.xlane.xlu0 %725
    %v727 = vsub.f32 %v719, %v723
    %v728 = vsub.f32 %v720, %v726
    %v729 = vmul.f32 %v727, 1.442695
    %v730 = vpow.pop %v729
    %v731 = vmul.f32 %v728, 1.442695
    %v732 = vpow.pop %v731
    %v733 = vsel %vm179, %v730, 0.0
    %734 = vadd.xlane.f32.xlu0 %v733
    %v735 = vpop.xlane.xlu0 %734
    %v736 = vsel %vm179, %v732, 0.0
    %737 = vadd.xlane.f32.xlu0 %v736
    %v738 = vpop.xlane.xlu0 %737
    %v739 = vrcp.pop %v735
    %v740 = vrcp.pop %v738
    %v741 = vmul.f32 %v730, %v739
    %v742 = vmul.f32 %v732, %v740
    %v743 = vpack.c.bf16 %v741, %v741
    %v744 = vpack.c.bf16 %v742, %v742
    %745 = vrot.lane.b32.xlu0 %v175, 48
    %v746 = vpop.permute.xlu0 %745
    %v748 = vsel %vm179, %v743, 0
    %v751 = vsel %vm305, %v746, 0
    %753 = vmatprep.subr.bf16.mxu0 0
    %754 = vmatpush1.bf16.msra.mxu0 %v751
    %755 = vmatprep.subr.bf16.mxu0 0
    %756 = vmatpush1.bf16.msra.mxu0 0
    %757 = vmatprep.subr.bf16.mxu0 0
    %758 = vmatpush1.bf16.msra.mxu0 0
    %759 = vmatprep.subr.bf16.mxu0 0
    %760 = vmatpush1.bf16.msra.mxu0 0
    %761 = vmatprep.subr.bf16.mxu0 0
    %762 = vmatpush1.bf16.msra.mxu0 0
    %763 = vmatprep.subr.bf16.mxu0 0
    %764 = vmatpush1.bf16.msra.mxu0 0
    %765 = vmatprep.subr.bf16.mxu0 0
    %766 = vmatpush1.bf16.msra.mxu0 0
    %767 = vmatprep.subr.bf16.mxu0 0
    %768 = vmatpush1.bf16.msra.mxu0 0
    %769 = vmatprep.subr.bf16.mxu0 0
    %770 = vmatpush1.bf16.msra.mxu0 0
    %771 = vmatprep.subr.bf16.mxu0 0
    %772 = vmatpush1.bf16.msra.mxu0 0
    %773 = vmatprep.subr.bf16.mxu0 0
    %774 = vmatpush1.bf16.msra.mxu0 0
    %775 = vmatprep.subr.bf16.mxu0 0
    %776 = vmatpush1.bf16.msra.mxu0 0
    %777 = vmatprep.subr.bf16.mxu0 0
    %778 = vmatpush1.bf16.msra.mxu0 0
    %779 = vmatprep.subr.bf16.mxu0 0
    %780 = vmatpush1.bf16.msra.mxu0 0
    %781 = vmatprep.subr.bf16.mxu0 0
    %782 = vmatpush1.bf16.msra.mxu0 0
    %783 = vmatprep.subr.bf16.mxu0 0
    %784 = vmatpush1.bf16.msra.mxu0 0
    %785 = vmatprep.mubr.bf16.mxu0 0
    %786 = vmatmul.mubr.bf16.gmra.mrb[0].mxu0 %v748
    %v787 = vpop.f32.mrb[0].mxu0
    %v788 = vadd.f32 0.0, %v787
    %v789 = vpop.f32.mrb[0].mxu0
    %v790 = vpop.f32.mrb[0].mxu0
    %v791 = vpop.f32.mrb[0].mxu0
    %792 = vdwg.mxu0
    %793 = vrot.lane.b32.xlu0 %v176, 48
    %v794 = vpop.permute.xlu0 %793
    %v796 = vsel %vm179, %v744, 0
    %v799 = vsel %vm305, %v794, 0
    %801 = vmatprep.subr.bf16.mxu0 0
    %802 = vmatpush1.bf16.msra.mxu0 %v799
    %803 = vmatprep.subr.bf16.mxu0 0
    %804 = vmatpush1.bf16.msra.mxu0 0
    %805 = vmatprep.subr.bf16.mxu0 0
    %806 = vmatpush1.bf16.msra.mxu0 0
    %807 = vmatprep.subr.bf16.mxu0 0
    %808 = vmatpush1.bf16.msra.mxu0 0
    %809 = vmatprep.subr.bf16.mxu0 0
    %810 = vmatpush1.bf16.msra.mxu0 0
    %811 = vmatprep.subr.bf16.mxu0 0
    %812 = vmatpush1.bf16.msra.mxu0 0
    %813 = vmatprep.subr.bf16.mxu0 0
    %814 = vmatpush1.bf16.msra.mxu0 0
    %815 = vmatprep.subr.bf16.mxu0 0
    %816 = vmatpush1.bf16.msra.mxu0 0
    %817 = vmatprep.subr.bf16.mxu0 0
    %818 = vmatpush1.bf16.msra.mxu0 0
    %819 = vmatprep.subr.bf16.mxu0 0
    %820 = vmatpush1.bf16.msra.mxu0 0
    %821 = vmatprep.subr.bf16.mxu0 0
    %822 = vmatpush1.bf16.msra.mxu0 0
    %823 = vmatprep.subr.bf16.mxu0 0
    %824 = vmatpush1.bf16.msra.mxu0 0
    %825 = vmatprep.subr.bf16.mxu0 0
    %826 = vmatpush1.bf16.msra.mxu0 0
    %827 = vmatprep.subr.bf16.mxu0 0
    %828 = vmatpush1.bf16.msra.mxu0 0
    %829 = vmatprep.subr.bf16.mxu0 0
    %830 = vmatpush1.bf16.msra.mxu0 0
    %831 = vmatprep.subr.bf16.mxu0 0
    %832 = vmatpush1.bf16.msra.mxu0 0
    %833 = vmatprep.mubr.bf16.mxu0 0
    %834 = vmatmul.mubr.bf16.gmra.mrb[0].mxu0 %v796
    %v835 = vpop.f32.mrb[0].mxu0
    %v836 = vadd.f32 0.0, %v835
    %v837 = vpop.f32.mrb[0].mxu0
    %v838 = vpop.f32.mrb[0].mxu0
    %v839 = vpop.f32.mrb[0].mxu0
    %840 = vdwg.mxu0
    %841 = vrot.lane.b32.xlu0 %v175, 104
    %v842 = vpop.permute.xlu0 %841
    %843 = vrot.lane.b32.xlu0 %v175, 72
    %v844 = vpop.permute.xlu0 %843
    %v846 = vsel %vm179, %v842, 0
    %v849 = vsel %vm179, %v844, 0
    %851 = vmatprep.subr.bf16.mxu0 0
    %852 = vmatpush1.bf16.xpose.msra.mxu0 %v849
    %853 = vmatprep.subr.bf16.mxu0 0
    %854 = vmatpush1.bf16.xpose.msra.mxu0 0
    %855 = vmatprep.subr.bf16.mxu0 0
    %856 = vmatpush1.bf16.xpose.msra.mxu0 0
    %857 = vmatprep.subr.bf16.mxu0 0
    %858 = vmatpush1.bf16.xpose.msra.mxu0 0
    %859 = vmatprep.subr.bf16.mxu0 0
    %860 = vmatpush1.bf16.xpose.msra.mxu0 0
    %861 = vmatprep.subr.bf16.mxu0 0
    %862 = vmatpush1.bf16.xpose.msra.mxu0 0
    %863 = vmatprep.subr.bf16.mxu0 0
    %864 = vmatpush1.bf16.xpose.msra.mxu0 0
    %865 = vmatprep.subr.bf16.mxu0 0
    %866 = vmatpush1.bf16.xpose.msra.mxu0 0
    %867 = vmatprep.subr.bf16.mxu0 0
    %868 = vmatpush1.bf16.xpose.msra.mxu0 0
    %869 = vmatprep.subr.bf16.mxu0 0
    %870 = vmatpush1.bf16.xpose.msra.mxu0 0
    %871 = vmatprep.subr.bf16.mxu0 0
    %872 = vmatpush1.bf16.xpose.msra.mxu0 0
    %873 = vmatprep.subr.bf16.mxu0 0
    %874 = vmatpush1.bf16.xpose.msra.mxu0 0
    %875 = vmatprep.subr.bf16.mxu0 0
    %876 = vmatpush1.bf16.xpose.msra.mxu0 0
    %877 = vmatprep.subr.bf16.mxu0 0
    %878 = vmatpush1.bf16.xpose.msra.mxu0 0
    %879 = vmatprep.subr.bf16.mxu0 0
    %880 = vmatpush1.bf16.xpose.msra.mxu0 0
    %881 = vmatprep.subr.bf16.mxu0 0
    %882 = vmatpush1.bf16.xpose.msra.mxu0 0
    %883 = vmatprep.mubr.bf16.mxu0 0
    %884 = vmatmul.mubr.bf16.gmra.mrb[0].mxu0 %v846
    %v885 = vpop.f32.mrb[0].mxu0
    %v886 = vadd.f32 0.0, %v885
    %v887 = vpop.f32.mrb[0].mxu0
    %v888 = vpop.f32.mrb[0].mxu0
    %v889 = vpop.f32.mrb[0].mxu0
    %890 = vdwg.mxu0
    %891 = vrot.lane.b32.xlu0 %v176, 104
    %v892 = vpop.permute.xlu0 %891
    %893 = vrot.lane.b32.xlu0 %v176, 72
    %v894 = vpop.permute.xlu0 %893
    %v896 = vsel %vm179, %v892, 0
    %v899 = vsel %vm179, %v894, 0
    %901 = vmatprep.subr.bf16.mxu0 0
    %902 = vmatpush1.bf16.xpose.msra.mxu0 %v899
    %903 = vmatprep.subr.bf16.mxu0 0
    %904 = vmatpush1.bf16.xpose.msra.mxu0 0
    %905 = vmatprep.subr.bf16.mxu0 0
    %906 = vmatpush1.bf16.xpose.msra.mxu0 0
    %907 = vmatprep.subr.bf16.mxu0 0
    %908 = vmatpush1.bf16.xpose.msra.mxu0 0
    %909 = vmatprep.subr.bf16.mxu0 0
    %910 = vmatpush1.bf16.xpose.msra.mxu0 0
    %911 = vmatprep.subr.bf16.mxu0 0
    %912 = vmatpush1.bf16.xpose.msra.mxu0 0
    %913 = vmatprep.subr.bf16.mxu0 0
    %914 = vmatpush1.bf16.xpose.msra.mxu0 0
    %915 = vmatprep.subr.bf16.mxu0 0
    %916 = vmatpush1.bf16.xpose.msra.mxu0 0
    %917 = vmatprep.subr.bf16.mxu0 0
    %918 = vmatpush1.bf16.xpose.msra.mxu0 0
    %919 = vmatprep.subr.bf16.mxu0 0
    %920 = vmatpush1.bf16.xpose.msra.mxu0 0
    %921 = vmatprep.subr.bf16.mxu0 0
    %922 = vmatpush1.bf16.xpose.msra.mxu0 0
    %923 = vmatprep.subr.bf16.mxu0 0
    %924 = vmatpush1.bf16.xpose.msra.mxu0 0
    %925 = vmatprep.subr.bf16.mxu0 0
    %926 = vmatpush1.bf16.xpose.msra.mxu0 0
    %927 = vmatprep.subr.bf16.mxu0 0
    %928 = vmatpush1.bf16.xpose.msra.mxu0 0
    %929 = vmatprep.subr.bf16.mxu0 0
    %930 = vmatpush1.bf16.xpose.msra.mxu0 0
    %931 = vmatprep.subr.bf16.mxu0 0
    %932 = vmatpush1.bf16.xpose.msra.mxu0 0
    %933 = vmatprep.mubr.bf16.mxu0 0
    %934 = vmatmul.mubr.bf16.gmra.mrb[0].mxu0 %v896
    %v935 = vpop.f32.mrb[0].mxu0
    %v936 = vadd.f32 0.0, %v935
    %v937 = vpop.f32.mrb[0].mxu0
    %v938 = vpop.f32.mrb[0].mxu0
    %v939 = vpop.f32.mrb[0].mxu0
    %940 = vdwg.mxu0
    %v941 = vmul.f32 %v886, 0.35355338
    %v942 = vmul.f32 %v936, 0.35355338
    %v943 = vsel %vm179, %v941, -inf
    %944 = vmax.xlane.f32.xlu0 %v943
    %v945 = vpop.xlane.xlu0 %944
    %v946 = vsel %vm179, %v942, -inf
    %947 = vmax.xlane.f32.xlu0 %v946
    %v948 = vpop.xlane.xlu0 %947
    %v949 = vsub.f32 %v941, %v945
    %v950 = vsub.f32 %v942, %v948
    %v951 = vmul.f32 %v949, 1.442695
    %v952 = vpow.pop %v951
    %v953 = vmul.f32 %v950, 1.442695
    %v954 = vpow.pop %v953
    %v955 = vsel %vm179, %v952, 0.0
    %956 = vadd.xlane.f32.xlu0 %v955
    %v957 = vpop.xlane.xlu0 %956
    %v958 = vsel %vm179, %v954, 0.0
    %959 = vadd.xlane.f32.xlu0 %v958
    %v960 = vpop.xlane.xlu0 %959
    %v961 = vrcp.pop %v957
    %v962 = vrcp.pop %v960
    %v963 = vmul.f32 %v952, %v961
    %v964 = vmul.f32 %v954, %v962
    %v965 = vpack.c.bf16 %v963, %v963
    %v966 = vpack.c.bf16 %v964, %v964
    %967 = vrot.lane.b32.xlu0 %v175, 40
    %v968 = vpop.permute.xlu0 %967
    %v970 = vsel %vm179, %v965, 0
    %v973 = vsel %vm305, %v968, 0
    %975 = vmatprep.subr.bf16.mxu0 0
    %976 = vmatpush1.bf16.msra.mxu0 %v973
    %977 = vmatprep.subr.bf16.mxu0 0
    %978 = vmatpush1.bf16.msra.mxu0 0
    %979 = vmatprep.subr.bf16.mxu0 0
    %980 = vmatpush1.bf16.msra.mxu0 0
    %981 = vmatprep.subr.bf16.mxu0 0
    %982 = vmatpush1.bf16.msra.mxu0 0
    %983 = vmatprep.subr.bf16.mxu0 0
    %984 = vmatpush1.bf16.msra.mxu0 0
    %985 = vmatprep.subr.bf16.mxu0 0
    %986 = vmatpush1.bf16.msra.mxu0 0
    %987 = vmatprep.subr.bf16.mxu0 0
    %988 = vmatpush1.bf16.msra.mxu0 0
    %989 = vmatprep.subr.bf16.mxu0 0
    %990 = vmatpush1.bf16.msra.mxu0 0
    %991 = vmatprep.subr.bf16.mxu0 0
    %992 = vmatpush1.bf16.msra.mxu0 0
    %993 = vmatprep.subr.bf16.mxu0 0
    %994 = vmatpush1.bf16.msra.mxu0 0
    %995 = vmatprep.subr.bf16.mxu0 0
    %996 = vmatpush1.bf16.msra.mxu0 0
    %997 = vmatprep.subr.bf16.mxu0 0
    %998 = vmatpush1.bf16.msra.mxu0 0
    %999 = vmatprep.subr.bf16.mxu0 0
    %1000 = vmatpush1.bf16.msra.mxu0 0
    %1001 = vmatprep.subr.bf16.mxu0 0
    %1002 = vmatpush1.bf16.msra.mxu0 0
    %1003 = vmatprep.subr.bf16.mxu0 0
    %1004 = vmatpush1.bf16.msra.mxu0 0
    %1005 = vmatprep.subr.bf16.mxu0 0
    %1006 = vmatpush1.bf16.msra.mxu0 0
    %1007 = vmatprep.mubr.bf16.mxu0 0
    %1008 = vmatmul.mubr.bf16.gmra.mrb[0].mxu0 %v970
    %v1009 = vpop.f32.mrb[0].mxu0
    %v1010 = vadd.f32 0.0, %v1009
    %v1011 = vpop.f32.mrb[0].mxu0
    %v1012 = vpop.f32.mrb[0].mxu0
    %v1013 = vpop.f32.mrb[0].mxu0
    %1014 = vdwg.mxu0
    %1015 = vrot.lane.b32.xlu0 %v176, 40
    %v1016 = vpop.permute.xlu0 %1015
    %v1018 = vsel %vm179, %v966, 0
    %v1021 = vsel %vm305, %v1016, 0
    %1023 = vmatprep.subr.bf16.mxu0 0
    %1024 = vmatpush1.bf16.msra.mxu0 %v1021
    %1025 = vmatprep.subr.bf16.mxu0 0
    %1026 = vmatpush1.bf16.msra.mxu0 0
    %1027 = vmatprep.subr.bf16.mxu0 0
    %1028 = vmatpush1.bf16.msra.mxu0 0
    %1029 = vmatprep.subr.bf16.mxu0 0
    %1030 = vmatpush1.bf16.msra.mxu0 0
    %1031 = vmatprep.subr.bf16.mxu0 0
    %1032 = vmatpush1.bf16.msra.mxu0 0
    %1033 = vmatprep.subr.bf16.mxu0 0
    %1034 = vmatpush1.bf16.msra.mxu0 0
    %1035 = vmatprep.subr.bf16.mxu0 0
    %1036 = vmatpush1.bf16.msra.mxu0 0
    %1037 = vmatprep.subr.bf16.mxu0 0
    %1038 = vmatpush1.bf16.msra.mxu0 0
    %1039 = vmatprep.subr.bf16.mxu0 0
    %1040 = vmatpush1.bf16.msra.mxu0 0
    %1041 = vmatprep.subr.bf16.mxu0 0
    %1042 = vmatpush1.bf16.msra.mxu0 0
    %1043 = vmatprep.subr.bf16.mxu0 0
    %1044 = vmatpush1.bf16.msra.mxu0 0
    %1045 = vmatprep.subr.bf16.mxu0 0
    %1046 = vmatpush1.bf16.msra.mxu0 0
    %1047 = vmatprep.subr.bf16.mxu0 0
    %1048 = vmatpush1.bf16.msra.mxu0 0
    %1049 = vmatprep.subr.bf16.mxu0 0
    %1050 = vmatpush1.bf16.msra.mxu0 0
    %1051 = vmatprep.subr.bf16.mxu0 0
    %1052 = vmatpush1.bf16.msra.mxu0 0
    %1053 = vmatprep.subr.bf16.mxu0 0
    %1054 = vmatpush1.bf16.msra.mxu0 0
    %1055 = vmatprep.mubr.bf16.mxu0 0
    %1056 = vmatmul.mubr.bf16.gmra.mrb[0].mxu0 %v1018
    %v1057 = vpop.f32.mrb[0].mxu0
    %v1058 = vadd.f32 0.0, %v1057
    %v1059 = vpop.f32.mrb[0].mxu0
    %v1060 = vpop.f32.mrb[0].mxu0
    %v1061 = vpop.f32.mrb[0].mxu0
    %1062 = vdwg.mxu0
    %1065 = vrot.lane.b32.xlu0 %v566, 8
    %v1066 = vpop.permute.xlu0 %1065
    %1067 = vrot.lane.b32.xlu0 %v614, 8
    %v1068 = vpop.permute.xlu0 %1067
    %1073 = vrot.lane.b32.xlu0 %v788, 16
    %v1074 = vpop.permute.xlu0 %1073
    %1075 = vrot.lane.b32.xlu0 %v836, 16
    %v1076 = vpop.permute.xlu0 %1075
    %1081 = vrot.lane.b32.xlu0 %v1010, 24
    %v1082 = vpop.permute.xlu0 %1081
    %1083 = vrot.lane.b32.xlu0 %v1058, 24
    %v1084 = vpop.permute.xlu0 %1083
    %v1087 = vsel %vm179, %v344, %v1066
    %v1088 = vsel %vm179, %v392, %v1068
    %vm1089 = vcmask 130048
    %v1090 = vsel %vm1089, %v1087, %v1074
    %v1091 = vsel %vm1089, %v1088, %v1076
    %vm1092 = vcmask 195584
    %v1093 = vsel %vm1092, %v1090, %v1082
    %v1094 = vsel %vm1092, %v1091, %v1084
    %v1095 = vpack.c.bf16 %v1094, %v1093
    %v1096 = vld [vmem:[%s3] sm:$0xf]
    %v1097 = vld [vmem:[%s3 + $0x4] sm:$0xf]
    %v1098 = vld [vmem:[%s3 + $0x8] sm:$0xf]
    %v1099 = vld [vmem:[%s3 + $0xc] sm:$0xf]
    %v1100 = vlaneseq
    %v1101 = vshrl.u32 %v1100, 7
    %v1102 = vsub.s32 2, %v1101
    %v1103 = vrot.slane %v65, %v1102
    %v1108 = vunpack.c.l.b16 %v1096
    %v1109 = vunpack.c.l.b16 %v1097
    %v1110 = vunpack.c.l.b16 %v1098
    %v1111 = vunpack.c.l.b16 %v1099
    %v1112 = vpack.c.b16 %v1109, %v1108
    %v1113 = vpack.c.b16 %v1111, %v1110
    %v1117 = vsel %vm66, %v1095, 0
    %1119 = vmatprep.subr.bf16.mxu0 0
    %1120 = vmatpush1.bf16.msra.mxu0 %v1112
    %1121 = vmatprep.subr.bf16.mxu0 0
    %1122 = vmatpush1.bf16.msra.mxu0 %v1113
    %1123 = vmatprep.subr.bf16.mxu0 0
    %1124 = vmatpush1.bf16.msra.mxu0 0
    %1125 = vmatprep.subr.bf16.mxu0 0
    %1126 = vmatpush1.bf16.msra.mxu0 0
    %1127 = vmatprep.subr.bf16.mxu0 0
    %1128 = vmatpush1.bf16.msra.mxu0 0
    %1129 = vmatprep.subr.bf16.mxu0 0
    %1130 = vmatpush1.bf16.msra.mxu0 0
    %1131 = vmatprep.subr.bf16.mxu0 0
    %1132 = vmatpush1.bf16.msra.mxu0 0
    %1133 = vmatprep.subr.bf16.mxu0 0
    %1134 = vmatpush1.bf16.msra.mxu0 0
    %1135 = vmatprep.subr.bf16.mxu0 0
    %1136 = vmatpush1.bf16.msra.mxu0 0
    %1137 = vmatprep.subr.bf16.mxu0 0
    %1138 = vmatpush1.bf16.msra.mxu0 0
    %1139 = vmatprep.subr.bf16.mxu0 0
    %1140 = vmatpush1.bf16.msra.mxu0 0
    %1141 = vmatprep.subr.bf16.mxu0 0
    %1142 = vmatpush1.bf16.msra.mxu0 0
    %1143 = vmatprep.subr.bf16.mxu0 0
    %1144 = vmatpush1.bf16.msra.mxu0 0
    %1145 = vmatprep.subr.bf16.mxu0 0
    %1146 = vmatpush1.bf16.msra.mxu0 0
    %1147 = vmatprep.subr.bf16.mxu0 0
    %1148 = vmatpush1.bf16.msra.mxu0 0
    %1149 = vmatprep.subr.bf16.mxu0 0
    %1150 = vmatpush1.bf16.msra.mxu0 0
    %1151 = vmatprep.mubr.bf16.mxu0 0
    %1152 = vmatmul.mubr.bf16.gmra.mrb[0].mxu0 %v1117
    %v1153 = vpop.f32.mrb[0].mxu0
    %v1154 = vadd.f32 %v1103, %v1153
    %v1155 = vpop.f32.mrb[0].mxu0
    %v1156 = vpop.f32.mrb[0].mxu0
    %v1157 = vadd.f32 %v1103, %v1156
    %v1158 = vpop.f32.mrb[0].mxu0
    %1159 = vdwg.mxu0
    %v1160 = vadd.f32 %v63, %v1154
    %v1161 = vadd.f32 %v64, %v1157
    %v1162 = vsel %vm66, %v1160, 0.0
    %1163 = vadd.xlane.f32.xlu0 %v1162
    %v1164 = vpop.xlane.xlu0 %1163
    %v1165 = vsel %vm66, %v1161, 0.0
    %1166 = vadd.xlane.f32.xlu0 %v1165
    %v1167 = vpop.xlane.xlu0 %1166
    %v1168 = vmul.f32 %v1164, %v73
    %v1169 = vmul.f32 %v1167, %v73
    %v1170 = vsub.f32 %v1160, %v1168
    %v1171 = vsub.f32 %v1161, %v1169
    %v1172 = vmul.f32 %v1170, %v1170
    %v1173 = vmul.f32 %v1171, %v1171
    %v1174 = vsel %vm66, %v1172, 0.0
    %1175 = vadd.xlane.f32.xlu0 %v1174
    %v1176 = vpop.xlane.xlu0 %1175
    %v1177 = vsel %vm66, %v1173, 0.0
    %1178 = vadd.xlane.f32.xlu0 %v1177
    %v1179 = vpop.xlane.xlu0 %1178
    %v1180 = vmul.f32 %v1176, %v73
    %v1181 = vmul.f32 %v1179, %v73
    %v1182 = vadd.f32 %v1180, 1e-06
    %v1183 = vadd.f32 %v1181, 1e-06
    %v1184 = vrsqrt.pop %v1182
    %v1185 = vrsqrt.pop %v1183
    %v1186 = vmul.f32 %v1170, %v1184
    %v1187 = vmul.f32 %v1171, %v1185
    %v1188 = vlaneseq
    %v1189 = vshrl.u32 %v1188, 7
    %v1190 = vsub.s32 6, %v1189
    %v1191 = vrot.slane %v65, %v1190
    %v1192 = vmul.f32 %v1186, %v1191
    %v1193 = vmul.f32 %v1187, %v1191
    %v1194 = vlaneseq
    %v1195 = vshrl.u32 %v1194, 7
    %v1196 = vsub.s32 7, %v1195
    %v1197 = vrot.slane %v65, %v1196
    %v1198 = vadd.f32 %v1192, %v1197
    %v1199 = vadd.f32 %v1193, %v1197
    %v1200 = vpack.c.bf16 %v1199, %v1198
    %v1201 = vld [vmem:[%s4] sm:$0xf]
    %v1202 = vld [vmem:[%s4 + $0x4] sm:$0xf]
    %v1203 = vld [vmem:[%s4 + $0x8] sm:$0xf]
    %v1204 = vld [vmem:[%s4 + $0xc] sm:$0xf]
    %v1205 = vlaneseq
    %v1206 = vshrl.u32 %v1205, 7
    %v1207 = vsub.s32 1, %v1206
    %v1208 = vrot.slane %v65, %v1207
    %v1213 = vunpack.c.l.b16 %v1201
    %v1214 = vunpack.c.l.b16 %v1202
    %v1215 = vunpack.c.l.b16 %v1203
    %v1216 = vunpack.c.l.b16 %v1204
    %v1217 = vpack.c.b16 %v1214, %v1213
    %v1218 = vpack.c.b16 %v1216, %v1215
    %v1222 = vsel %vm66, %v1200, 0
    %1224 = vmatprep.subr.bf16.mxu0 0
    %1225 = vmatpush1.bf16.msra.mxu0 %v1217
    %1226 = vmatprep.subr.bf16.mxu0 0
    %1227 = vmatpush1.bf16.msra.mxu0 %v1218
    %1228 = vmatprep.subr.bf16.mxu0 0
    %1229 = vmatpush1.bf16.msra.mxu0 0
    %1230 = vmatprep.subr.bf16.mxu0 0
    %1231 = vmatpush1.bf16.msra.mxu0 0
    %1232 = vmatprep.subr.bf16.mxu0 0
    %1233 = vmatpush1.bf16.msra.mxu0 0
    %1234 = vmatprep.subr.bf16.mxu0 0
    %1235 = vmatpush1.bf16.msra.mxu0 0
    %1236 = vmatprep.subr.bf16.mxu0 0
    %1237 = vmatpush1.bf16.msra.mxu0 0
    %1238 = vmatprep.subr.bf16.mxu0 0
    %1239 = vmatpush1.bf16.msra.mxu0 0
    %1240 = vmatprep.subr.bf16.mxu0 0
    %1241 = vmatpush1.bf16.msra.mxu0 0
    %1242 = vmatprep.subr.bf16.mxu0 0
    %1243 = vmatpush1.bf16.msra.mxu0 0
    %1244 = vmatprep.subr.bf16.mxu0 0
    %1245 = vmatpush1.bf16.msra.mxu0 0
    %1246 = vmatprep.subr.bf16.mxu0 0
    %1247 = vmatpush1.bf16.msra.mxu0 0
    %1248 = vmatprep.subr.bf16.mxu0 0
    %1249 = vmatpush1.bf16.msra.mxu0 0
    %1250 = vmatprep.subr.bf16.mxu0 0
    %1251 = vmatpush1.bf16.msra.mxu0 0
    %1252 = vmatprep.subr.bf16.mxu0 0
    %1253 = vmatpush1.bf16.msra.mxu0 0
    %1254 = vmatprep.subr.bf16.mxu0 0
    %1255 = vmatpush1.bf16.msra.mxu0 0
    %1256 = vmatprep.mubr.bf16.mxu0 0
    %1257 = vmatmul.mubr.bf16.gmra.mrb[0].mxu0 %v1222
    %v1258 = vpop.f32.mrb[0].mxu0
    %v1259 = vadd.f32 %v1208, %v1258
    %v1260 = vpop.f32.mrb[0].mxu0
    %v1261 = vpop.f32.mrb[0].mxu0
    %v1262 = vadd.f32 %v1208, %v1261
    %v1263 = vpop.f32.mrb[0].mxu0
    %1264 = vdwg.mxu0
    %v1265 = vmax.f32 %v1259, 0.0
    %v1266 = vmax.f32 %v1262, 0.0
    %v1267 = vpack.c.bf16 %v1266, %v1265
    %v1268 = vld [vmem:[%s5] sm:$0xf]
    %v1269 = vld [vmem:[%s5 + $0x4] sm:$0xf]
    %v1270 = vld [vmem:[%s5 + $0x8] sm:$0xf]
    %v1271 = vld [vmem:[%s5 + $0xc] sm:$0xf]
    %v1272 = vld [vmem:[%s5 + $0x10] sm:$0xf]
    %v1273 = vld [vmem:[%s5 + $0x14] sm:$0xf]
    %v1274 = vld [vmem:[%s5 + $0x18] sm:$0xf]
    %v1275 = vld [vmem:[%s5 + $0x1c] sm:$0xf]
    %v1276 = vlaneseq
    %v1277 = vshrl.u32 %v1276, 7
    %v1278 = vsub.s32 3, %v1277
    %v1279 = vrot.slane %v65, %v1278
    %v1288 = vunpack.c.l.b16 %v1268
    %v1289 = vunpack.c.l.b16 %v1269
    %v1290 = vunpack.c.l.b16 %v1270
    %v1291 = vunpack.c.l.b16 %v1271
    %v1292 = vunpack.c.l.b16 %v1272
    %v1293 = vunpack.c.l.b16 %v1273
    %v1294 = vunpack.c.l.b16 %v1274
    %v1295 = vunpack.c.l.b16 %v1275
    %v1296 = vpack.c.b16 %v1289, %v1288
    %v1297 = vpack.c.b16 %v1291, %v1290
    %v1298 = vpack.c.b16 %v1293, %v1292
    %v1299 = vpack.c.b16 %v1295, %v1294
    %vm1304 = vcmask 523264
    %v1306 = vsel %vm1304, %v1267, 0
    %1308 = vmatprep.subr.bf16.mxu0 0
    %1309 = vmatpush1.bf16.msra.mxu0 %v1296
    %1310 = vmatprep.subr.bf16.mxu0 0
    %1311 = vmatpush1.bf16.msra.mxu0 %v1297
    %1312 = vmatprep.subr.bf16.mxu0 0
    %1313 = vmatpush1.bf16.msra.mxu0 %v1298
    %1314 = vmatprep.subr.bf16.mxu0 0
    %1315 = vmatpush1.bf16.msra.mxu0 %v1299
    %1316 = vmatprep.subr.bf16.mxu0 0
    %1317 = vmatpush1.bf16.msra.mxu0 0
    %1318 = vmatprep.subr.bf16.mxu0 0
    %1319 = vmatpush1.bf16.msra.mxu0 0
    %1320 = vmatprep.subr.bf16.mxu0 0
    %1321 = vmatpush1.bf16.msra.mxu0 0
    %1322 = vmatprep.subr.bf16.mxu0 0
    %1323 = vmatpush1.bf16.msra.mxu0 0
    %1324 = vmatprep.subr.bf16.mxu0 0
    %1325 = vmatpush1.bf16.msra.mxu0 0
    %1326 = vmatprep.subr.bf16.mxu0 0
    %1327 = vmatpush1.bf16.msra.mxu0 0
    %1328 = vmatprep.subr.bf16.mxu0 0
    %1329 = vmatpush1.bf16.msra.mxu0 0
    %1330 = vmatprep.subr.bf16.mxu0 0
    %1331 = vmatpush1.bf16.msra.mxu0 0
    %1332 = vmatprep.subr.bf16.mxu0 0
    %1333 = vmatpush1.bf16.msra.mxu0 0
    %1334 = vmatprep.subr.bf16.mxu0 0
    %1335 = vmatpush1.bf16.msra.mxu0 0
    %1336 = vmatprep.subr.bf16.mxu0 0
    %1337 = vmatpush1.bf16.msra.mxu0 0
    %1338 = vmatprep.subr.bf16.mxu0 0
    %1339 = vmatpush1.bf16.msra.mxu0 0
    %1340 = vmatprep.mubr.bf16.mxu0 0
    %1341 = vmatmul.mubr.bf16.gmra.mrb[0].mxu0 %v1306
    %v1342 = vpop.f32.mrb[0].mxu0
    %v1343 = vadd.f32 %v1279, %v1342
    %v1344 = vpop.f32.mrb[0].mxu0
    %v1345 = vpop.f32.mrb[0].mxu0
    %v1346 = vadd.f32 %v1279, %v1345
    %v1347 = vpop.f32.mrb[0].mxu0
    %1348 = vdwg.mxu0
    %v1349 = vadd.f32 %v1160, %v1343
    %v1350 = vadd.f32 %v1161, %v1346
    %s1351 = scalar_lea.vmem %s6, 8
    %v1352 = vld [vmem:[%s1351] sm:$0xff]
    %v1353 = vsel %vm66, %v1349, 0.0
    %1354 = vadd.xlane.f32.xlu0 %v1353
    %v1355 = vpop.xlane.xlu0 %1354
    %v1356 = vsel %vm66, %v1350, 0.0
    %1357 = vadd.xlane.f32.xlu0 %v1356
    %v1358 = vpop.xlane.xlu0 %1357
    %v1359 = vmul.f32 %v1355, %v73
    %v1360 = vmul.f32 %v1358, %v73
    %v1361 = vsub.f32 %v1349, %v1359
    %v1362 = vsub.f32 %v1350, %v1360
    %v1363 = vmul.f32 %v1361, %v1361
    %v1364 = vmul.f32 %v1362, %v1362
    %v1365 = vsel %vm66, %v1363, 0.0
    %1366 = vadd.xlane.f32.xlu0 %v1365
    %v1367 = vpop.xlane.xlu0 %1366
    %v1368 = vsel %vm66, %v1364, 0.0
    %1369 = vadd.xlane.f32.xlu0 %v1368
    %v1370 = vpop.xlane.xlu0 %1369
    %v1371 = vmul.f32 %v1367, %v73
    %v1372 = vmul.f32 %v1370, %v73
    %v1373 = vadd.f32 %v1371, 1e-06
    %v1374 = vadd.f32 %v1372, 1e-06
    %v1375 = vrsqrt.pop %v1373
    %v1376 = vrsqrt.pop %v1374
    %v1377 = vmul.f32 %v1361, %v1375
    %v1378 = vmul.f32 %v1362, %v1376
    %v1379 = vlaneseq
    %v1380 = vshrl.u32 %v1379, 7
    %v1381 = vsub.s32 4, %v1380
    %v1382 = vrot.slane %v1352, %v1381
    %v1383 = vmul.f32 %v1377, %v1382
    %v1384 = vmul.f32 %v1378, %v1382
    %v1385 = vlaneseq
    %v1386 = vshrl.u32 %v1385, 7
    %v1387 = vsub.s32 5, %v1386
    %v1388 = vrot.slane %v1352, %v1387
    %v1389 = vadd.f32 %v1383, %v1388
    %v1390 = vadd.f32 %v1384, %v1388
    %v1391 = vpack.c.bf16 %v1390, %v1389
    %s1392 = scalar_lea.vmem %s2, 16
    %v1393 = vld [vmem:[%s1392] sm:$0xf]
    %v1394 = vld [vmem:[%s1392 + $0x4] sm:$0xf]
    %v1395 = vld [vmem:[%s1392 + $0x8] sm:$0xf]
    %v1396 = vld [vmem:[%s1392 + $0xc] sm:$0xf]
    %v1397 = vlaneseq
    %v1398 = vshrl.u32 %v1397, 7
    %v1399 = vsub.s32 0, %v1398
    %v1400 = vrot.slane %v1352, %v1399
    %v1405 = vunpack.c.l.b16 %v1393
    %v1406 = vunpack.c.l.b16 %v1394
    %v1407 = vunpack.c.l.b16 %v1395
    %v1408 = vunpack.c.l.b16 %v1396
    %v1409 = vpack.c.b16 %v1406, %v1405
    %v1410 = vpack.c.b16 %v1408, %v1407
    %v1414 = vsel %vm66, %v1391, 0
    %1416 = vmatprep.subr.bf16.mxu0 0
    %1417 = vmatpush1.bf16.msra.mxu0 %v1409
    %1418 = vmatprep.subr.bf16.mxu0 0
    %1419 = vmatpush1.bf16.msra.mxu0 %v1410
    %1420 = vmatprep.subr.bf16.mxu0 0
    %1421 = vmatpush1.bf16.msra.mxu0 0
    %1422 = vmatprep.subr.bf16.mxu0 0
    %1423 = vmatpush1.bf16.msra.mxu0 0
    %1424 = vmatprep.subr.bf16.mxu0 0
    %1425 = vmatpush1.bf16.msra.mxu0 0
    %1426 = vmatprep.subr.bf16.mxu0 0
    %1427 = vmatpush1.bf16.msra.mxu0 0
    %1428 = vmatprep.subr.bf16.mxu0 0
    %1429 = vmatpush1.bf16.msra.mxu0 0
    %1430 = vmatprep.subr.bf16.mxu0 0
    %1431 = vmatpush1.bf16.msra.mxu0 0
    %1432 = vmatprep.subr.bf16.mxu0 0
    %1433 = vmatpush1.bf16.msra.mxu0 0
    %1434 = vmatprep.subr.bf16.mxu0 0
    %1435 = vmatpush1.bf16.msra.mxu0 0
    %1436 = vmatprep.subr.bf16.mxu0 0
    %1437 = vmatpush1.bf16.msra.mxu0 0
    %1438 = vmatprep.subr.bf16.mxu0 0
    %1439 = vmatpush1.bf16.msra.mxu0 0
    %1440 = vmatprep.subr.bf16.mxu0 0
    %1441 = vmatpush1.bf16.msra.mxu0 0
    %1442 = vmatprep.subr.bf16.mxu0 0
    %1443 = vmatpush1.bf16.msra.mxu0 0
    %1444 = vmatprep.subr.bf16.mxu0 0
    %1445 = vmatpush1.bf16.msra.mxu0 0
    %1446 = vmatprep.subr.bf16.mxu0 0
    %1447 = vmatpush1.bf16.msra.mxu0 0
    %1448 = vmatprep.mubr.bf16.mxu0 0
    %1449 = vmatmul.mubr.bf16.gmra.mrb[0].mxu0 %v1414
    %v1450 = vpop.f32.mrb[0].mxu0
    %v1451 = vadd.f32 %v1400, %v1450
    %v1452 = vpop.f32.mrb[0].mxu0
    %v1453 = vpop.f32.mrb[0].mxu0
    %v1454 = vadd.f32 %v1400, %v1453
    %v1455 = vpop.f32.mrb[0].mxu0
    %1456 = vdwg.mxu0
    %v1457 = vpack.c.bf16 %v1454, %v1451
    %v1459 = vunpack.c.l.b16 %v1457
    %v1460 = vunpack.c.h.b16 %v1457
    %v1461 = vpack.c.b16 %v1459, %v1459
    %v1462 = vpack.c.b16 %v1460, %v1460
    %1463 = vrot.lane.b32.xlu0 %v1461, 96
    %v1464 = vpop.permute.xlu0 %1463
    %v1466 = vsel %vm179, %v1461, 0
    %v1469 = vsel %vm179, %v1464, 0
    %1471 = vmatprep.subr.bf16.mxu0 0
    %1472 = vmatpush1.bf16.xpose.msra.mxu0 %v1469
    %1473 = vmatprep.subr.bf16.mxu0 0
    %1474 = vmatpush1.bf16.xpose.msra.mxu0 0
    %1475 = vmatprep.subr.bf16.mxu0 0
    %1476 = vmatpush1.bf16.xpose.msra.mxu0 0
    %1477 = vmatprep.subr.bf16.mxu0 0
    %1478 = vmatpush1.bf16.xpose.msra.mxu0 0
    %1479 = vmatprep.subr.bf16.mxu0 0
    %1480 = vmatpush1.bf16.xpose.msra.mxu0 0
    %1481 = vmatprep.subr.bf16.mxu0 0
    %1482 = vmatpush1.bf16.xpose.msra.mxu0 0
    %1483 = vmatprep.subr.bf16.mxu0 0
    %1484 = vmatpush1.bf16.xpose.msra.mxu0 0
    %1485 = vmatprep.subr.bf16.mxu0 0
    %1486 = vmatpush1.bf16.xpose.msra.mxu0 0
    %1487 = vmatprep.subr.bf16.mxu0 0
    %1488 = vmatpush1.bf16.xpose.msra.mxu0 0
    %1489 = vmatprep.subr.bf16.mxu0 0
    %1490 = vmatpush1.bf16.xpose.msra.mxu0 0
    %1491 = vmatprep.subr.bf16.mxu0 0
    %1492 = vmatpush1.bf16.xpose.msra.mxu0 0
    %1493 = vmatprep.subr.bf16.mxu0 0
    %1494 = vmatpush1.bf16.xpose.msra.mxu0 0
    %1495 = vmatprep.subr.bf16.mxu0 0
    %1496 = vmatpush1.bf16.xpose.msra.mxu0 0
    %1497 = vmatprep.subr.bf16.mxu0 0
    %1498 = vmatpush1.bf16.xpose.msra.mxu0 0
    %1499 = vmatprep.subr.bf16.mxu0 0
    %1500 = vmatpush1.bf16.xpose.msra.mxu0 0
    %1501 = vmatprep.subr.bf16.mxu0 0
    %1502 = vmatpush1.bf16.xpose.msra.mxu0 0
    %1503 = vmatprep.mubr.bf16.mxu0 0
    %1504 = vmatmul.mubr.bf16.gmra.mrb[0].mxu0 %v1466
    %v1505 = vpop.f32.mrb[0].mxu0
    %v1506 = vadd.f32 0.0, %v1505
    %v1507 = vpop.f32.mrb[0].mxu0
    %v1508 = vpop.f32.mrb[0].mxu0
    %v1509 = vpop.f32.mrb[0].mxu0
    %1510 = vdwg.mxu0
    %1511 = vrot.lane.b32.xlu0 %v1462, 96
    %v1512 = vpop.permute.xlu0 %1511
    %v1514 = vsel %vm179, %v1462, 0
    %v1517 = vsel %vm179, %v1512, 0
    %1519 = vmatprep.subr.bf16.mxu0 0
    %1520 = vmatpush1.bf16.xpose.msra.mxu0 %v1517
    %1521 = vmatprep.subr.bf16.mxu0 0
    %1522 = vmatpush1.bf16.xpose.msra.mxu0 0
    %1523 = vmatprep.subr.bf16.mxu0 0
    %1524 = vmatpush1.bf16.xpose.msra.mxu0 0
    %1525 = vmatprep.subr.bf16.mxu0 0
    %1526 = vmatpush1.bf16.xpose.msra.mxu0 0
    %1527 = vmatprep.subr.bf16.mxu0 0
    %1528 = vmatpush1.bf16.xpose.msra.mxu0 0
    %1529 = vmatprep.subr.bf16.mxu0 0
    %1530 = vmatpush1.bf16.xpose.msra.mxu0 0
    %1531 = vmatprep.subr.bf16.mxu0 0
    %1532 = vmatpush1.bf16.xpose.msra.mxu0 0
    %1533 = vmatprep.subr.bf16.mxu0 0
    %1534 = vmatpush1.bf16.xpose.msra.mxu0 0
    %1535 = vmatprep.subr.bf16.mxu0 0
    %1536 = vmatpush1.bf16.xpose.msra.mxu0 0
    %1537 = vmatprep.subr.bf16.mxu0 0
    %1538 = vmatpush1.bf16.xpose.msra.mxu0 0
    %1539 = vmatprep.subr.bf16.mxu0 0
    %1540 = vmatpush1.bf16.xpose.msra.mxu0 0
    %1541 = vmatprep.subr.bf16.mxu0 0
    %1542 = vmatpush1.bf16.xpose.msra.mxu0 0
    %1543 = vmatprep.subr.bf16.mxu0 0
    %1544 = vmatpush1.bf16.xpose.msra.mxu0 0
    %1545 = vmatprep.subr.bf16.mxu0 0
    %1546 = vmatpush1.bf16.xpose.msra.mxu0 0
    %1547 = vmatprep.subr.bf16.mxu0 0
    %1548 = vmatpush1.bf16.xpose.msra.mxu0 0
    %1549 = vmatprep.subr.bf16.mxu0 0
    %1550 = vmatpush1.bf16.xpose.msra.mxu0 0
    %1551 = vmatprep.mubr.bf16.mxu0 0
    %1552 = vmatmul.mubr.bf16.gmra.mrb[0].mxu0 %v1514
    %v1553 = vpop.f32.mrb[0].mxu0
    %v1554 = vadd.f32 0.0, %v1553
    %v1555 = vpop.f32.mrb[0].mxu0
    %v1556 = vpop.f32.mrb[0].mxu0
    %v1557 = vpop.f32.mrb[0].mxu0
    %1558 = vdwg.mxu0
    %v1559 = vmul.f32 %v1506, 0.35355338
    %v1560 = vmul.f32 %v1554, 0.35355338
    %v1561 = vsel %vm179, %v1559, -inf
    %1562 = vmax.xlane.f32.xlu0 %v1561
    %v1563 = vpop.xlane.xlu0 %1562
    %v1564 = vsel %vm179, %v1560, -inf
    %1565 = vmax.xlane.f32.xlu0 %v1564
    %v1566 = vpop.xlane.xlu0 %1565
    %v1567 = vsub.f32 %v1559, %v1563
    %v1568 = vsub.f32 %v1560, %v1566
    %v1569 = vmul.f32 %v1567, 1.442695
    %v1570 = vpow.pop %v1569
    %v1571 = vmul.f32 %v1568, 1.442695
    %v1572 = vpow.pop %v1571
    %v1573 = vsel %vm179, %v1570, 0.0
    %1574 = vadd.xlane.f32.xlu0 %v1573
    %v1575 = vpop.xlane.xlu0 %1574
    %v1576 = vsel %vm179, %v1572, 0.0
    %1577 = vadd.xlane.f32.xlu0 %v1576
    %v1578 = vpop.xlane.xlu0 %1577
    %v1579 = vrcp.pop %v1575
    %v1580 = vrcp.pop %v1578
    %v1581 = vmul.f32 %v1570, %v1579
    %v1582 = vmul.f32 %v1572, %v1580
    %v1583 = vpack.c.bf16 %v1581, %v1581
    %v1584 = vpack.c.bf16 %v1582, %v1582
    %1585 = vrot.lane.b32.xlu0 %v1461, 64
    %v1586 = vpop.permute.xlu0 %1585
    %v1588 = vsel %vm179, %v1583, 0
    %v1591 = vsel %vm305, %v1586, 0
    %1593 = vmatprep.subr.bf16.mxu0 0
    %1594 = vmatpush1.bf16.msra.mxu0 %v1591
    %1595 = vmatprep.subr.bf16.mxu0 0
    %1596 = vmatpush1.bf16.msra.mxu0 0
    %1597 = vmatprep.subr.bf16.mxu0 0
    %1598 = vmatpush1.bf16.msra.mxu0 0
    %1599 = vmatprep.subr.bf16.mxu0 0
    %1600 = vmatpush1.bf16.msra.mxu0 0
    %1601 = vmatprep.subr.bf16.mxu0 0
    %1602 = vmatpush1.bf16.msra.mxu0 0
    %1603 = vmatprep.subr.bf16.mxu0 0
    %1604 = vmatpush1.bf16.msra.mxu0 0
    %1605 = vmatprep.subr.bf16.mxu0 0
    %1606 = vmatpush1.bf16.msra.mxu0 0
    %1607 = vmatprep.subr.bf16.mxu0 0
    %1608 = vmatpush1.bf16.msra.mxu0 0
    %1609 = vmatprep.subr.bf16.mxu0 0
    %1610 = vmatpush1.bf16.msra.mxu0 0
    %1611 = vmatprep.subr.bf16.mxu0 0
    %1612 = vmatpush1.bf16.msra.mxu0 0
    %1613 = vmatprep.subr.bf16.mxu0 0
    %1614 = vmatpush1.bf16.msra.mxu0 0
    %1615 = vmatprep.subr.bf16.mxu0 0
    %1616 = vmatpush1.bf16.msra.mxu0 0
    %1617 = vmatprep.subr.bf16.mxu0 0
    %1618 = vmatpush1.bf16.msra.mxu0 0
    %1619 = vmatprep.subr.bf16.mxu0 0
    %1620 = vmatpush1.bf16.msra.mxu0 0
    %1621 = vmatprep.subr.bf16.mxu0 0
    %1622 = vmatpush1.bf16.msra.mxu0 0
    %1623 = vmatprep.subr.bf16.mxu0 0
    %1624 = vmatpush1.bf16.msra.mxu0 0
    %1625 = vmatprep.mubr.bf16.mxu0 0
    %1626 = vmatmul.mubr.bf16.gmra.mrb[0].mxu0 %v1588
    %v1627 = vpop.f32.mrb[0].mxu0
    %v1628 = vadd.f32 0.0, %v1627
    %v1629 = vpop.f32.mrb[0].mxu0
    %v1630 = vpop.f32.mrb[0].mxu0
    %v1631 = vpop.f32.mrb[0].mxu0
    %1632 = vdwg.mxu0
    %1633 = vrot.lane.b32.xlu0 %v1462, 64
    %v1634 = vpop.permute.xlu0 %1633
    %v1636 = vsel %vm179, %v1584, 0
    %v1639 = vsel %vm305, %v1634, 0
    %1641 = vmatprep.subr.bf16.mxu0 0
    %1642 = vmatpush1.bf16.msra.mxu0 %v1639
    %1643 = vmatprep.subr.bf16.mxu0 0
    %1644 = vmatpush1.bf16.msra.mxu0 0
    %1645 = vmatprep.subr.bf16.mxu0 0
    %1646 = vmatpush1.bf16.msra.mxu0 0
    %1647 = vmatprep.subr.bf16.mxu0 0
    %1648 = vmatpush1.bf16.msra.mxu0 0
    %1649 = vmatprep.subr.bf16.mxu0 0
    %1650 = vmatpush1.bf16.msra.mxu0 0
    %1651 = vmatprep.subr.bf16.mxu0 0
    %1652 = vmatpush1.bf16.msra.mxu0 0
    %1653 = vmatprep.subr.bf16.mxu0 0
    %1654 = vmatpush1.bf16.msra.mxu0 0
    %1655 = vmatprep.subr.bf16.mxu0 0
    %1656 = vmatpush1.bf16.msra.mxu0 0
    %1657 = vmatprep.subr.bf16.mxu0 0
    %1658 = vmatpush1.bf16.msra.mxu0 0
    %1659 = vmatprep.subr.bf16.mxu0 0
    %1660 = vmatpush1.bf16.msra.mxu0 0
    %1661 = vmatprep.subr.bf16.mxu0 0
    %1662 = vmatpush1.bf16.msra.mxu0 0
    %1663 = vmatprep.subr.bf16.mxu0 0
    %1664 = vmatpush1.bf16.msra.mxu0 0
    %1665 = vmatprep.subr.bf16.mxu0 0
    %1666 = vmatpush1.bf16.msra.mxu0 0
    %1667 = vmatprep.subr.bf16.mxu0 0
    %1668 = vmatpush1.bf16.msra.mxu0 0
    %1669 = vmatprep.subr.bf16.mxu0 0
    %1670 = vmatpush1.bf16.msra.mxu0 0
    %1671 = vmatprep.subr.bf16.mxu0 0
    %1672 = vmatpush1.bf16.msra.mxu0 0
    %1673 = vmatprep.mubr.bf16.mxu0 0
    %1674 = vmatmul.mubr.bf16.gmra.mrb[0].mxu0 %v1636
    %v1675 = vpop.f32.mrb[0].mxu0
    %v1676 = vadd.f32 0.0, %v1675
    %v1677 = vpop.f32.mrb[0].mxu0
    %v1678 = vpop.f32.mrb[0].mxu0
    %v1679 = vpop.f32.mrb[0].mxu0
    %1680 = vdwg.mxu0
    %1681 = vrot.lane.b32.xlu0 %v1461, 120
    %v1682 = vpop.permute.xlu0 %1681
    %1683 = vrot.lane.b32.xlu0 %v1461, 88
    %v1684 = vpop.permute.xlu0 %1683
    %v1686 = vsel %vm179, %v1682, 0
    %v1689 = vsel %vm179, %v1684, 0
    %1691 = vmatprep.subr.bf16.mxu0 0
    %1692 = vmatpush1.bf16.xpose.msra.mxu0 %v1689
    %1693 = vmatprep.subr.bf16.mxu0 0
    %1694 = vmatpush1.bf16.xpose.msra.mxu0 0
    %1695 = vmatprep.subr.bf16.mxu0 0
    %1696 = vmatpush1.bf16.xpose.msra.mxu0 0
    %1697 = vmatprep.subr.bf16.mxu0 0
    %1698 = vmatpush1.bf16.xpose.msra.mxu0 0
    %1699 = vmatprep.subr.bf16.mxu0 0
    %1700 = vmatpush1.bf16.xpose.msra.mxu0 0
    %1701 = vmatprep.subr.bf16.mxu0 0
    %1702 = vmatpush1.bf16.xpose.msra.mxu0 0
    %1703 = vmatprep.subr.bf16.mxu0 0
    %1704 = vmatpush1.bf16.xpose.msra.mxu0 0
    %1705 = vmatprep.subr.bf16.mxu0 0
    %1706 = vmatpush1.bf16.xpose.msra.mxu0 0
    %1707 = vmatprep.subr.bf16.mxu0 0
    %1708 = vmatpush1.bf16.xpose.msra.mxu0 0
    %1709 = vmatprep.subr.bf16.mxu0 0
    %1710 = vmatpush1.bf16.xpose.msra.mxu0 0
    %1711 = vmatprep.subr.bf16.mxu0 0
    %1712 = vmatpush1.bf16.xpose.msra.mxu0 0
    %1713 = vmatprep.subr.bf16.mxu0 0
    %1714 = vmatpush1.bf16.xpose.msra.mxu0 0
    %1715 = vmatprep.subr.bf16.mxu0 0
    %1716 = vmatpush1.bf16.xpose.msra.mxu0 0
    %1717 = vmatprep.subr.bf16.mxu0 0
    %1718 = vmatpush1.bf16.xpose.msra.mxu0 0
    %1719 = vmatprep.subr.bf16.mxu0 0
    %1720 = vmatpush1.bf16.xpose.msra.mxu0 0
    %1721 = vmatprep.subr.bf16.mxu0 0
    %1722 = vmatpush1.bf16.xpose.msra.mxu0 0
    %1723 = vmatprep.mubr.bf16.mxu0 0
    %1724 = vmatmul.mubr.bf16.gmra.mrb[0].mxu0 %v1686
    %v1725 = vpop.f32.mrb[0].mxu0
    %v1726 = vadd.f32 0.0, %v1725
    %v1727 = vpop.f32.mrb[0].mxu0
    %v1728 = vpop.f32.mrb[0].mxu0
    %v1729 = vpop.f32.mrb[0].mxu0
    %1730 = vdwg.mxu0
    %1731 = vrot.lane.b32.xlu0 %v1462, 120
    %v1732 = vpop.permute.xlu0 %1731
    %1733 = vrot.lane.b32.xlu0 %v1462, 88
    %v1734 = vpop.permute.xlu0 %1733
    %v1736 = vsel %vm179, %v1732, 0
    %v1739 = vsel %vm179, %v1734, 0
    %1741 = vmatprep.subr.bf16.mxu0 0
    %1742 = vmatpush1.bf16.xpose.msra.mxu0 %v1739
    %1743 = vmatprep.subr.bf16.mxu0 0
    %1744 = vmatpush1.bf16.xpose.msra.mxu0 0
    %1745 = vmatprep.subr.bf16.mxu0 0
    %1746 = vmatpush1.bf16.xpose.msra.mxu0 0
    %1747 = vmatprep.subr.bf16.mxu0 0
    %1748 = vmatpush1.bf16.xpose.msra.mxu0 0
    %1749 = vmatprep.subr.bf16.mxu0 0
    %1750 = vmatpush1.bf16.xpose.msra.mxu0 0
    %1751 = vmatprep.subr.bf16.mxu0 0
    %1752 = vmatpush1.bf16.xpose.msra.mxu0 0
    %1753 = vmatprep.subr.bf16.mxu0 0
    %1754 = vmatpush1.bf16.xpose.msra.mxu0 0
    %1755 = vmatprep.subr.bf16.mxu0 0
    %1756 = vmatpush1.bf16.xpose.msra.mxu0 0
    %1757 = vmatprep.subr.bf16.mxu0 0
    %1758 = vmatpush1.bf16.xpose.msra.mxu0 0
    %1759 = vmatprep.subr.bf16.mxu0 0
    %1760 = vmatpush1.bf16.xpose.msra.mxu0 0
    %1761 = vmatprep.subr.bf16.mxu0 0
    %1762 = vmatpush1.bf16.xpose.msra.mxu0 0
    %1763 = vmatprep.subr.bf16.mxu0 0
    %1764 = vmatpush1.bf16.xpose.msra.mxu0 0
    %1765 = vmatprep.subr.bf16.mxu0 0
    %1766 = vmatpush1.bf16.xpose.msra.mxu0 0
    %1767 = vmatprep.subr.bf16.mxu0 0
    %1768 = vmatpush1.bf16.xpose.msra.mxu0 0
    %1769 = vmatprep.subr.bf16.mxu0 0
    %1770 = vmatpush1.bf16.xpose.msra.mxu0 0
    %1771 = vmatprep.subr.bf16.mxu0 0
    %1772 = vmatpush1.bf16.xpose.msra.mxu0 0
    %1773 = vmatprep.mubr.bf16.mxu0 0
    %1774 = vmatmul.mubr.bf16.gmra.mrb[0].mxu0 %v1736
    %v1775 = vpop.f32.mrb[0].mxu0
    %v1776 = vadd.f32 0.0, %v1775
    %v1777 = vpop.f32.mrb[0].mxu0
    %v1778 = vpop.f32.mrb[0].mxu0
    %v1779 = vpop.f32.mrb[0].mxu0
    %1780 = vdwg.mxu0
    %v1781 = vmul.f32 %v1726, 0.35355338
    %v1782 = vmul.f32 %v1776, 0.35355338
    %v1783 = vsel %vm179, %v1781, -inf
    %1784 = vmax.xlane.f32.xlu0 %v1783
    %v1785 = vpop.xlane.xlu0 %1784
    %v1786 = vsel %vm179, %v1782, -inf
    %1787 = vmax.xlane.f32.xlu0 %v1786
    %v1788 = vpop.xlane.xlu0 %1787
    %v1789 = vsub.f32 %v1781, %v1785
    %v1790 = vsub.f32 %v1782, %v1788
    %v1791 = vmul.f32 %v1789, 1.442695
    %v1792 = vpow.pop %v1791
    %v1793 = vmul.f32 %v1790, 1.442695
    %v1794 = vpow.pop %v1793
    %v1795 = vsel %vm179, %v1792, 0.0
    %1796 = vadd.xlane.f32.xlu0 %v1795
    %v1797 = vpop.xlane.xlu0 %1796
    %v1798 = vsel %vm179, %v1794, 0.0
    %1799 = vadd.xlane.f32.xlu0 %v1798
    %v1800 = vpop.xlane.xlu0 %1799
    %v1801 = vrcp.pop %v1797
    %v1802 = vrcp.pop %v1800
    %v1803 = vmul.f32 %v1792, %v1801
    %v1804 = vmul.f32 %v1794, %v1802
    %v1805 = vpack.c.bf16 %v1803, %v1803
    %v1806 = vpack.c.bf16 %v1804, %v1804
    %1807 = vrot.lane.b32.xlu0 %v1461, 56
    %v1808 = vpop.permute.xlu0 %1807
    %v1810 = vsel %vm179, %v1805, 0
    %v1813 = vsel %vm305, %v1808, 0
    %1815 = vmatprep.subr.bf16.mxu0 0
    %1816 = vmatpush1.bf16.msra.mxu0 %v1813
    %1817 = vmatprep.subr.bf16.mxu0 0
    %1818 = vmatpush1.bf16.msra.mxu0 0
    %1819 = vmatprep.subr.bf16.mxu0 0
    %1820 = vmatpush1.bf16.msra.mxu0 0
    %1821 = vmatprep.subr.bf16.mxu0 0
    %1822 = vmatpush1.bf16.msra.mxu0 0
    %1823 = vmatprep.subr.bf16.mxu0 0
    %1824 = vmatpush1.bf16.msra.mxu0 0
    %1825 = vmatprep.subr.bf16.mxu0 0
    %1826 = vmatpush1.bf16.msra.mxu0 0
    %1827 = vmatprep.subr.bf16.mxu0 0
    %1828 = vmatpush1.bf16.msra.mxu0 0
    %1829 = vmatprep.subr.bf16.mxu0 0
    %1830 = vmatpush1.bf16.msra.mxu0 0
    %1831 = vmatprep.subr.bf16.mxu0 0
    %1832 = vmatpush1.bf16.msra.mxu0 0
    %1833 = vmatprep.subr.bf16.mxu0 0
    %1834 = vmatpush1.bf16.msra.mxu0 0
    %1835 = vmatprep.subr.bf16.mxu0 0
    %1836 = vmatpush1.bf16.msra.mxu0 0
    %1837 = vmatprep.subr.bf16.mxu0 0
    %1838 = vmatpush1.bf16.msra.mxu0 0
    %1839 = vmatprep.subr.bf16.mxu0 0
    %1840 = vmatpush1.bf16.msra.mxu0 0
    %1841 = vmatprep.subr.bf16.mxu0 0
    %1842 = vmatpush1.bf16.msra.mxu0 0
    %1843 = vmatprep.subr.bf16.mxu0 0
    %1844 = vmatpush1.bf16.msra.mxu0 0
    %1845 = vmatprep.subr.bf16.mxu0 0
    %1846 = vmatpush1.bf16.msra.mxu0 0
    %1847 = vmatprep.mubr.bf16.mxu0 0
    %1848 = vmatmul.mubr.bf16.gmra.mrb[0].mxu0 %v1810
    %v1849 = vpop.f32.mrb[0].mxu0
    %v1850 = vadd.f32 0.0, %v1849
    %v1851 = vpop.f32.mrb[0].mxu0
    %v1852 = vpop.f32.mrb[0].mxu0
    %v1853 = vpop.f32.mrb[0].mxu0
    %1854 = vdwg.mxu0
    %1855 = vrot.lane.b32.xlu0 %v1462, 56
    %v1856 = vpop.permute.xlu0 %1855
    %v1858 = vsel %vm179, %v1806, 0
    %v1861 = vsel %vm305, %v1856, 0
    %1863 = vmatprep.subr.bf16.mxu0 0
    %1864 = vmatpush1.bf16.msra.mxu0 %v1861
    %1865 = vmatprep.subr.bf16.mxu0 0
    %1866 = vmatpush1.bf16.msra.mxu0 0
    %1867 = vmatprep.subr.bf16.mxu0 0
    %1868 = vmatpush1.bf16.msra.mxu0 0
    %1869 = vmatprep.subr.bf16.mxu0 0
    %1870 = vmatpush1.bf16.msra.mxu0 0
    %1871 = vmatprep.subr.bf16.mxu0 0
    %1872 = vmatpush1.bf16.msra.mxu0 0
    %1873 = vmatprep.subr.bf16.mxu0 0
    %1874 = vmatpush1.bf16.msra.mxu0 0
    %1875 = vmatprep.subr.bf16.mxu0 0
    %1876 = vmatpush1.bf16.msra.mxu0 0
    %1877 = vmatprep.subr.bf16.mxu0 0
    %1878 = vmatpush1.bf16.msra.mxu0 0
    %1879 = vmatprep.subr.bf16.mxu0 0
    %1880 = vmatpush1.bf16.msra.mxu0 0
    %1881 = vmatprep.subr.bf16.mxu0 0
    %1882 = vmatpush1.bf16.msra.mxu0 0
    %1883 = vmatprep.subr.bf16.mxu0 0
    %1884 = vmatpush1.bf16.msra.mxu0 0
    %1885 = vmatprep.subr.bf16.mxu0 0
    %1886 = vmatpush1.bf16.msra.mxu0 0
    %1887 = vmatprep.subr.bf16.mxu0 0
    %1888 = vmatpush1.bf16.msra.mxu0 0
    %1889 = vmatprep.subr.bf16.mxu0 0
    %1890 = vmatpush1.bf16.msra.mxu0 0
    %1891 = vmatprep.subr.bf16.mxu0 0
    %1892 = vmatpush1.bf16.msra.mxu0 0
    %1893 = vmatprep.subr.bf16.mxu0 0
    %1894 = vmatpush1.bf16.msra.mxu0 0
    %1895 = vmatprep.mubr.bf16.mxu0 0
    %1896 = vmatmul.mubr.bf16.gmra.mrb[0].mxu0 %v1858
    %v1897 = vpop.f32.mrb[0].mxu0
    %v1898 = vadd.f32 0.0, %v1897
    %v1899 = vpop.f32.mrb[0].mxu0
    %v1900 = vpop.f32.mrb[0].mxu0
    %v1901 = vpop.f32.mrb[0].mxu0
    %1902 = vdwg.mxu0
    %1903 = vrot.lane.b32.xlu0 %v1461, 112
    %v1904 = vpop.permute.xlu0 %1903
    %1905 = vrot.lane.b32.xlu0 %v1461, 80
    %v1906 = vpop.permute.xlu0 %1905
    %v1908 = vsel %vm179, %v1904, 0
    %v1911 = vsel %vm179, %v1906, 0
    %1913 = vmatprep.subr.bf16.mxu0 0
    %1914 = vmatpush1.bf16.xpose.msra.mxu0 %v1911
    %1915 = vmatprep.subr.bf16.mxu0 0
    %1916 = vmatpush1.bf16.xpose.msra.mxu0 0
    %1917 = vmatprep.subr.bf16.mxu0 0
    %1918 = vmatpush1.bf16.xpose.msra.mxu0 0
    %1919 = vmatprep.subr.bf16.mxu0 0
    %1920 = vmatpush1.bf16.xpose.msra.mxu0 0
    %1921 = vmatprep.subr.bf16.mxu0 0
    %1922 = vmatpush1.bf16.xpose.msra.mxu0 0
    %1923 = vmatprep.subr.bf16.mxu0 0
    %1924 = vmatpush1.bf16.xpose.msra.mxu0 0
    %1925 = vmatprep.subr.bf16.mxu0 0
    %1926 = vmatpush1.bf16.xpose.msra.mxu0 0
    %1927 = vmatprep.subr.bf16.mxu0 0
    %1928 = vmatpush1.bf16.xpose.msra.mxu0 0
    %1929 = vmatprep.subr.bf16.mxu0 0
    %1930 = vmatpush1.bf16.xpose.msra.mxu0 0
    %1931 = vmatprep.subr.bf16.mxu0 0
    %1932 = vmatpush1.bf16.xpose.msra.mxu0 0
    %1933 = vmatprep.subr.bf16.mxu0 0
    %1934 = vmatpush1.bf16.xpose.msra.mxu0 0
    %1935 = vmatprep.subr.bf16.mxu0 0
    %1936 = vmatpush1.bf16.xpose.msra.mxu0 0
    %1937 = vmatprep.subr.bf16.mxu0 0
    %1938 = vmatpush1.bf16.xpose.msra.mxu0 0
    %1939 = vmatprep.subr.bf16.mxu0 0
    %1940 = vmatpush1.bf16.xpose.msra.mxu0 0
    %1941 = vmatprep.subr.bf16.mxu0 0
    %1942 = vmatpush1.bf16.xpose.msra.mxu0 0
    %1943 = vmatprep.subr.bf16.mxu0 0
    %1944 = vmatpush1.bf16.xpose.msra.mxu0 0
    %1945 = vmatprep.mubr.bf16.mxu0 0
    %1946 = vmatmul.mubr.bf16.gmra.mrb[0].mxu0 %v1908
    %v1947 = vpop.f32.mrb[0].mxu0
    %v1948 = vadd.f32 0.0, %v1947
    %v1949 = vpop.f32.mrb[0].mxu0
    %v1950 = vpop.f32.mrb[0].mxu0
    %v1951 = vpop.f32.mrb[0].mxu0
    %1952 = vdwg.mxu0
    %1953 = vrot.lane.b32.xlu0 %v1462, 112
    %v1954 = vpop.permute.xlu0 %1953
    %1955 = vrot.lane.b32.xlu0 %v1462, 80
    %v1956 = vpop.permute.xlu0 %1955
    %v1958 = vsel %vm179, %v1954, 0
    %v1961 = vsel %vm179, %v1956, 0
    %1963 = vmatprep.subr.bf16.mxu0 0
    %1964 = vmatpush1.bf16.xpose.msra.mxu0 %v1961
    %1965 = vmatprep.subr.bf16.mxu0 0
    %1966 = vmatpush1.bf16.xpose.msra.mxu0 0
    %1967 = vmatprep.subr.bf16.mxu0 0
    %1968 = vmatpush1.bf16.xpose.msra.mxu0 0
    %1969 = vmatprep.subr.bf16.mxu0 0
    %1970 = vmatpush1.bf16.xpose.msra.mxu0 0
    %1971 = vmatprep.subr.bf16.mxu0 0
    %1972 = vmatpush1.bf16.xpose.msra.mxu0 0
    %1973 = vmatprep.subr.bf16.mxu0 0
    %1974 = vmatpush1.bf16.xpose.msra.mxu0 0
    %1975 = vmatprep.subr.bf16.mxu0 0
    %1976 = vmatpush1.bf16.xpose.msra.mxu0 0
    %1977 = vmatprep.subr.bf16.mxu0 0
    %1978 = vmatpush1.bf16.xpose.msra.mxu0 0
    %1979 = vmatprep.subr.bf16.mxu0 0
    %1980 = vmatpush1.bf16.xpose.msra.mxu0 0
    %1981 = vmatprep.subr.bf16.mxu0 0
    %1982 = vmatpush1.bf16.xpose.msra.mxu0 0
    %1983 = vmatprep.subr.bf16.mxu0 0
    %1984 = vmatpush1.bf16.xpose.msra.mxu0 0
    %1985 = vmatprep.subr.bf16.mxu0 0
    %1986 = vmatpush1.bf16.xpose.msra.mxu0 0
    %1987 = vmatprep.subr.bf16.mxu0 0
    %1988 = vmatpush1.bf16.xpose.msra.mxu0 0
    %1989 = vmatprep.subr.bf16.mxu0 0
    %1990 = vmatpush1.bf16.xpose.msra.mxu0 0
    %1991 = vmatprep.subr.bf16.mxu0 0
    %1992 = vmatpush1.bf16.xpose.msra.mxu0 0
    %1993 = vmatprep.subr.bf16.mxu0 0
    %1994 = vmatpush1.bf16.xpose.msra.mxu0 0
    %1995 = vmatprep.mubr.bf16.mxu0 0
    %1996 = vmatmul.mubr.bf16.gmra.mrb[0].mxu0 %v1958
    %v1997 = vpop.f32.mrb[0].mxu0
    %v1998 = vadd.f32 0.0, %v1997
    %v1999 = vpop.f32.mrb[0].mxu0
    %v2000 = vpop.f32.mrb[0].mxu0
    %v2001 = vpop.f32.mrb[0].mxu0
    %2002 = vdwg.mxu0
    %v2003 = vmul.f32 %v1948, 0.35355338
    %v2004 = vmul.f32 %v1998, 0.35355338
    %v2005 = vsel %vm179, %v2003, -inf
    %2006 = vmax.xlane.f32.xlu0 %v2005
    %v2007 = vpop.xlane.xlu0 %2006
    %v2008 = vsel %vm179, %v2004, -inf
    %2009 = vmax.xlane.f32.xlu0 %v2008
    %v2010 = vpop.xlane.xlu0 %2009
    %v2011 = vsub.f32 %v2003, %v2007
    %v2012 = vsub.f32 %v2004, %v2010
    %v2013 = vmul.f32 %v2011, 1.442695
    %v2014 = vpow.pop %v2013
    %v2015 = vmul.f32 %v2012, 1.442695
    %v2016 = vpow.pop %v2015
    %v2017 = vsel %vm179, %v2014, 0.0
    %2018 = vadd.xlane.f32.xlu0 %v2017
    %v2019 = vpop.xlane.xlu0 %2018
    %v2020 = vsel %vm179, %v2016, 0.0
    %2021 = vadd.xlane.f32.xlu0 %v2020
    %v2022 = vpop.xlane.xlu0 %2021
    %v2023 = vrcp.pop %v2019
    %v2024 = vrcp.pop %v2022
    %v2025 = vmul.f32 %v2014, %v2023
    %v2026 = vmul.f32 %v2016, %v2024
    %v2027 = vpack.c.bf16 %v2025, %v2025
    %v2028 = vpack.c.bf16 %v2026, %v2026
    %2029 = vrot.lane.b32.xlu0 %v1461, 48
    %v2030 = vpop.permute.xlu0 %2029
    %v2032 = vsel %vm179, %v2027, 0
    %v2035 = vsel %vm305, %v2030, 0
    %2037 = vmatprep.subr.bf16.mxu0 0
    %2038 = vmatpush1.bf16.msra.mxu0 %v2035
    %2039 = vmatprep.subr.bf16.mxu0 0
    %2040 = vmatpush1.bf16.msra.mxu0 0
    %2041 = vmatprep.subr.bf16.mxu0 0
    %2042 = vmatpush1.bf16.msra.mxu0 0
    %2043 = vmatprep.subr.bf16.mxu0 0
    %2044 = vmatpush1.bf16.msra.mxu0 0
    %2045 = vmatprep.subr.bf16.mxu0 0
    %2046 = vmatpush1.bf16.msra.mxu0 0
    %2047 = vmatprep.subr.bf16.mxu0 0
    %2048 = vmatpush1.bf16.msra.mxu0 0
    %2049 = vmatprep.subr.bf16.mxu0 0
    %2050 = vmatpush1.bf16.msra.mxu0 0
    %2051 = vmatprep.subr.bf16.mxu0 0
    %2052 = vmatpush1.bf16.msra.mxu0 0
    %2053 = vmatprep.subr.bf16.mxu0 0
    %2054 = vmatpush1.bf16.msra.mxu0 0
    %2055 = vmatprep.subr.bf16.mxu0 0
    %2056 = vmatpush1.bf16.msra.mxu0 0
    %2057 = vmatprep.subr.bf16.mxu0 0
    %2058 = vmatpush1.bf16.msra.mxu0 0
    %2059 = vmatprep.subr.bf16.mxu0 0
    %2060 = vmatpush1.bf16.msra.mxu0 0
    %2061 = vmatprep.subr.bf16.mxu0 0
    %2062 = vmatpush1.bf16.msra.mxu0 0
    %2063 = vmatprep.subr.bf16.mxu0 0
    %2064 = vmatpush1.bf16.msra.mxu0 0
    %2065 = vmatprep.subr.bf16.mxu0 0
    %2066 = vmatpush1.bf16.msra.mxu0 0
    %2067 = vmatprep.subr.bf16.mxu0 0
    %2068 = vmatpush1.bf16.msra.mxu0 0
    %2069 = vmatprep.mubr.bf16.mxu0 0
    %2070 = vmatmul.mubr.bf16.gmra.mrb[0].mxu0 %v2032
    %v2071 = vpop.f32.mrb[0].mxu0
    %v2072 = vadd.f32 0.0, %v2071
    %v2073 = vpop.f32.mrb[0].mxu0
    %v2074 = vpop.f32.mrb[0].mxu0
    %v2075 = vpop.f32.mrb[0].mxu0
    %2076 = vdwg.mxu0
    %2077 = vrot.lane.b32.xlu0 %v1462, 48
    %v2078 = vpop.permute.xlu0 %2077
    %v2080 = vsel %vm179, %v2028, 0
    %v2083 = vsel %vm305, %v2078, 0
    %2085 = vmatprep.subr.bf16.mxu0 0
    %2086 = vmatpush1.bf16.msra.mxu0 %v2083
    %2087 = vmatprep.subr.bf16.mxu0 0
    %2088 = vmatpush1.bf16.msra.mxu0 0
    %2089 = vmatprep.subr.bf16.mxu0 0
    %2090 = vmatpush1.bf16.msra.mxu0 0
    %2091 = vmatprep.subr.bf16.mxu0 0
    %2092 = vmatpush1.bf16.msra.mxu0 0
    %2093 = vmatprep.subr.bf16.mxu0 0
    %2094 = vmatpush1.bf16.msra.mxu0 0
    %2095 = vmatprep.subr.bf16.mxu0 0
    %2096 = vmatpush1.bf16.msra.mxu0 0
    %2097 = vmatprep.subr.bf16.mxu0 0
    %2098 = vmatpush1.bf16.msra.mxu0 0
    %2099 = vmatprep.subr.bf16.mxu0 0
    %2100 = vmatpush1.bf16.msra.mxu0 0
    %2101 = vmatprep.subr.bf16.mxu0 0
    %2102 = vmatpush1.bf16.msra.mxu0 0
    %2103 = vmatprep.subr.bf16.mxu0 0
    %2104 = vmatpush1.bf16.msra.mxu0 0
    %2105 = vmatprep.subr.bf16.mxu0 0
    %2106 = vmatpush1.bf16.msra.mxu0 0
    %2107 = vmatprep.subr.bf16.mxu0 0
    %2108 = vmatpush1.bf16.msra.mxu0 0
    %2109 = vmatprep.subr.bf16.mxu0 0
    %2110 = vmatpush1.bf16.msra.mxu0 0
    %2111 = vmatprep.subr.bf16.mxu0 0
    %2112 = vmatpush1.bf16.msra.mxu0 0
    %2113 = vmatprep.subr.bf16.mxu0 0
    %2114 = vmatpush1.bf16.msra.mxu0 0
    %2115 = vmatprep.subr.bf16.mxu0 0
    %2116 = vmatpush1.bf16.msra.mxu0 0
    %2117 = vmatprep.mubr.bf16.mxu0 0
    %2118 = vmatmul.mubr.bf16.gmra.mrb[0].mxu0 %v2080
    %v2119 = vpop.f32.mrb[0].mxu0
    %v2120 = vadd.f32 0.0, %v2119
    %v2121 = vpop.f32.mrb[0].mxu0
    %v2122 = vpop.f32.mrb[0].mxu0
    %v2123 = vpop.f32.mrb[0].mxu0
    %2124 = vdwg.mxu0
    %2125 = vrot.lane.b32.xlu0 %v1461, 104
    %v2126 = vpop.permute.xlu0 %2125
    %2127 = vrot.lane.b32.xlu0 %v1461, 72
    %v2128 = vpop.permute.xlu0 %2127
    %v2130 = vsel %vm179, %v2126, 0
    %v2133 = vsel %vm179, %v2128, 0
    %2135 = vmatprep.subr.bf16.mxu0 0
    %2136 = vmatpush1.bf16.xpose.msra.mxu0 %v2133
    %2137 = vmatprep.subr.bf16.mxu0 0
    %2138 = vmatpush1.bf16.xpose.msra.mxu0 0
    %2139 = vmatprep.subr.bf16.mxu0 0
    %2140 = vmatpush1.bf16.xpose.msra.mxu0 0
    %2141 = vmatprep.subr.bf16.mxu0 0
    %2142 = vmatpush1.bf16.xpose.msra.mxu0 0
    %2143 = vmatprep.subr.bf16.mxu0 0
    %2144 = vmatpush1.bf16.xpose.msra.mxu0 0
    %2145 = vmatprep.subr.bf16.mxu0 0
    %2146 = vmatpush1.bf16.xpose.msra.mxu0 0
    %2147 = vmatprep.subr.bf16.mxu0 0
    %2148 = vmatpush1.bf16.xpose.msra.mxu0 0
    %2149 = vmatprep.subr.bf16.mxu0 0
    %2150 = vmatpush1.bf16.xpose.msra.mxu0 0
    %2151 = vmatprep.subr.bf16.mxu0 0
    %2152 = vmatpush1.bf16.xpose.msra.mxu0 0
    %2153 = vmatprep.subr.bf16.mxu0 0
    %2154 = vmatpush1.bf16.xpose.msra.mxu0 0
    %2155 = vmatprep.subr.bf16.mxu0 0
    %2156 = vmatpush1.bf16.xpose.msra.mxu0 0
    %2157 = vmatprep.subr.bf16.mxu0 0
    %2158 = vmatpush1.bf16.xpose.msra.mxu0 0
    %2159 = vmatprep.subr.bf16.mxu0 0
    %2160 = vmatpush1.bf16.xpose.msra.mxu0 0
    %2161 = vmatprep.subr.bf16.mxu0 0
    %2162 = vmatpush1.bf16.xpose.msra.mxu0 0
    %2163 = vmatprep.subr.bf16.mxu0 0
    %2164 = vmatpush1.bf16.xpose.msra.mxu0 0
    %2165 = vmatprep.subr.bf16.mxu0 0
    %2166 = vmatpush1.bf16.xpose.msra.mxu0 0
    %2167 = vmatprep.mubr.bf16.mxu0 0
    %2168 = vmatmul.mubr.bf16.gmra.mrb[0].mxu0 %v2130
    %v2169 = vpop.f32.mrb[0].mxu0
    %v2170 = vadd.f32 0.0, %v2169
    %v2171 = vpop.f32.mrb[0].mxu0
    %v2172 = vpop.f32.mrb[0].mxu0
    %v2173 = vpop.f32.mrb[0].mxu0
    %2174 = vdwg.mxu0
    %2175 = vrot.lane.b32.xlu0 %v1462, 104
    %v2176 = vpop.permute.xlu0 %2175
    %2177 = vrot.lane.b32.xlu0 %v1462, 72
    %v2178 = vpop.permute.xlu0 %2177
    %v2180 = vsel %vm179, %v2176, 0
    %v2183 = vsel %vm179, %v2178, 0
    %2185 = vmatprep.subr.bf16.mxu0 0
    %2186 = vmatpush1.bf16.xpose.msra.mxu0 %v2183
    %2187 = vmatprep.subr.bf16.mxu0 0
    %2188 = vmatpush1.bf16.xpose.msra.mxu0 0
    %2189 = vmatprep.subr.bf16.mxu0 0
    %2190 = vmatpush1.bf16.xpose.msra.mxu0 0
    %2191 = vmatprep.subr.bf16.mxu0 0
    %2192 = vmatpush1.bf16.xpose.msra.mxu0 0
    %2193 = vmatprep.subr.bf16.mxu0 0
    %2194 = vmatpush1.bf16.xpose.msra.mxu0 0
    %2195 = vmatprep.subr.bf16.mxu0 0
    %2196 = vmatpush1.bf16.xpose.msra.mxu0 0
    %2197 = vmatprep.subr.bf16.mxu0 0
    %2198 = vmatpush1.bf16.xpose.msra.mxu0 0
    %2199 = vmatprep.subr.bf16.mxu0 0
    %2200 = vmatpush1.bf16.xpose.msra.mxu0 0
    %2201 = vmatprep.subr.bf16.mxu0 0
    %2202 = vmatpush1.bf16.xpose.msra.mxu0 0
    %2203 = vmatprep.subr.bf16.mxu0 0
    %2204 = vmatpush1.bf16.xpose.msra.mxu0 0
    %2205 = vmatprep.subr.bf16.mxu0 0
    %2206 = vmatpush1.bf16.xpose.msra.mxu0 0
    %2207 = vmatprep.subr.bf16.mxu0 0
    %2208 = vmatpush1.bf16.xpose.msra.mxu0 0
    %2209 = vmatprep.subr.bf16.mxu0 0
    %2210 = vmatpush1.bf16.xpose.msra.mxu0 0
    %2211 = vmatprep.subr.bf16.mxu0 0
    %2212 = vmatpush1.bf16.xpose.msra.mxu0 0
    %2213 = vmatprep.subr.bf16.mxu0 0
    %2214 = vmatpush1.bf16.xpose.msra.mxu0 0
    %2215 = vmatprep.subr.bf16.mxu0 0
    %2216 = vmatpush1.bf16.xpose.msra.mxu0 0
    %2217 = vmatprep.mubr.bf16.mxu0 0
    %2218 = vmatmul.mubr.bf16.gmra.mrb[0].mxu0 %v2180
    %v2219 = vpop.f32.mrb[0].mxu0
    %v2220 = vadd.f32 0.0, %v2219
    %v2221 = vpop.f32.mrb[0].mxu0
    %v2222 = vpop.f32.mrb[0].mxu0
    %v2223 = vpop.f32.mrb[0].mxu0
    %2224 = vdwg.mxu0
    %v2225 = vmul.f32 %v2170, 0.35355338
    %v2226 = vmul.f32 %v2220, 0.35355338
    %v2227 = vsel %vm179, %v2225, -inf
    %2228 = vmax.xlane.f32.xlu0 %v2227
    %v2229 = vpop.xlane.xlu0 %2228
    %v2230 = vsel %vm179, %v2226, -inf
    %2231 = vmax.xlane.f32.xlu0 %v2230
    %v2232 = vpop.xlane.xlu0 %2231
    %v2233 = vsub.f32 %v2225, %v2229
    %v2234 = vsub.f32 %v2226, %v2232
    %v2235 = vmul.f32 %v2233, 1.442695
    %v2236 = vpow.pop %v2235
    %v2237 = vmul.f32 %v2234, 1.442695
    %v2238 = vpow.pop %v2237
    %v2239 = vsel %vm179, %v2236, 0.0
    %2240 = vadd.xlane.f32.xlu0 %v2239
    %v2241 = vpop.xlane.xlu0 %2240
    %v2242 = vsel %vm179, %v2238, 0.0
    %2243 = vadd.xlane.f32.xlu0 %v2242
    %v2244 = vpop.xlane.xlu0 %2243
    %v2245 = vrcp.pop %v2241
    %v2246 = vrcp.pop %v2244
    %v2247 = vmul.f32 %v2236, %v2245
    %v2248 = vmul.f32 %v2238, %v2246
    %v2249 = vpack.c.bf16 %v2247, %v2247
    %v2250 = vpack.c.bf16 %v2248, %v2248
    %2251 = vrot.lane.b32.xlu0 %v1461, 40
    %v2252 = vpop.permute.xlu0 %2251
    %v2254 = vsel %vm179, %v2249, 0
    %v2257 = vsel %vm305, %v2252, 0
    %2259 = vmatprep.subr.bf16.mxu0 0
    %2260 = vmatpush1.bf16.msra.mxu0 %v2257
    %2261 = vmatprep.subr.bf16.mxu0 0
    %2262 = vmatpush1.bf16.msra.mxu0 0
    %2263 = vmatprep.subr.bf16.mxu0 0
    %2264 = vmatpush1.bf16.msra.mxu0 0
    %2265 = vmatprep.subr.bf16.mxu0 0
    %2266 = vmatpush1.bf16.msra.mxu0 0
    %2267 = vmatprep.subr.bf16.mxu0 0
    %2268 = vmatpush1.bf16.msra.mxu0 0
    %2269 = vmatprep.subr.bf16.mxu0 0
    %2270 = vmatpush1.bf16.msra.mxu0 0
    %2271 = vmatprep.subr.bf16.mxu0 0
    %2272 = vmatpush1.bf16.msra.mxu0 0
    %2273 = vmatprep.subr.bf16.mxu0 0
    %2274 = vmatpush1.bf16.msra.mxu0 0
    %2275 = vmatprep.subr.bf16.mxu0 0
    %2276 = vmatpush1.bf16.msra.mxu0 0
    %2277 = vmatprep.subr.bf16.mxu0 0
    %2278 = vmatpush1.bf16.msra.mxu0 0
    %2279 = vmatprep.subr.bf16.mxu0 0
    %2280 = vmatpush1.bf16.msra.mxu0 0
    %2281 = vmatprep.subr.bf16.mxu0 0
    %2282 = vmatpush1.bf16.msra.mxu0 0
    %2283 = vmatprep.subr.bf16.mxu0 0
    %2284 = vmatpush1.bf16.msra.mxu0 0
    %2285 = vmatprep.subr.bf16.mxu0 0
    %2286 = vmatpush1.bf16.msra.mxu0 0
    %2287 = vmatprep.subr.bf16.mxu0 0
    %2288 = vmatpush1.bf16.msra.mxu0 0
    %2289 = vmatprep.subr.bf16.mxu0 0
    %2290 = vmatpush1.bf16.msra.mxu0 0
    %2291 = vmatprep.mubr.bf16.mxu0 0
    %2292 = vmatmul.mubr.bf16.gmra.mrb[0].mxu0 %v2254
    %v2293 = vpop.f32.mrb[0].mxu0
    %v2294 = vadd.f32 0.0, %v2293
    %v2295 = vpop.f32.mrb[0].mxu0
    %v2296 = vpop.f32.mrb[0].mxu0
    %v2297 = vpop.f32.mrb[0].mxu0
    %2298 = vdwg.mxu0
    %2299 = vrot.lane.b32.xlu0 %v1462, 40
    %v2300 = vpop.permute.xlu0 %2299
    %v2302 = vsel %vm179, %v2250, 0
    %v2305 = vsel %vm305, %v2300, 0
    %2307 = vmatprep.subr.bf16.mxu0 0
    %2308 = vmatpush1.bf16.msra.mxu0 %v2305
    %2309 = vmatprep.subr.bf16.mxu0 0
    %2310 = vmatpush1.bf16.msra.mxu0 0
    %2311 = vmatprep.subr.bf16.mxu0 0
    %2312 = vmatpush1.bf16.msra.mxu0 0
    %2313 = vmatprep.subr.bf16.mxu0 0
    %2314 = vmatpush1.bf16.msra.mxu0 0
    %2315 = vmatprep.subr.bf16.mxu0 0
    %2316 = vmatpush1.bf16.msra.mxu0 0
    %2317 = vmatprep.subr.bf16.mxu0 0
    %2318 = vmatpush1.bf16.msra.mxu0 0
    %2319 = vmatprep.subr.bf16.mxu0 0
    %2320 = vmatpush1.bf16.msra.mxu0 0
    %2321 = vmatprep.subr.bf16.mxu0 0
    %2322 = vmatpush1.bf16.msra.mxu0 0
    %2323 = vmatprep.subr.bf16.mxu0 0
    %2324 = vmatpush1.bf16.msra.mxu0 0
    %2325 = vmatprep.subr.bf16.mxu0 0
    %2326 = vmatpush1.bf16.msra.mxu0 0
    %2327 = vmatprep.subr.bf16.mxu0 0
    %2328 = vmatpush1.bf16.msra.mxu0 0
    %2329 = vmatprep.subr.bf16.mxu0 0
    %2330 = vmatpush1.bf16.msra.mxu0 0
    %2331 = vmatprep.subr.bf16.mxu0 0
    %2332 = vmatpush1.bf16.msra.mxu0 0
    %2333 = vmatprep.subr.bf16.mxu0 0
    %2334 = vmatpush1.bf16.msra.mxu0 0
    %2335 = vmatprep.subr.bf16.mxu0 0
    %2336 = vmatpush1.bf16.msra.mxu0 0
    %2337 = vmatprep.subr.bf16.mxu0 0
    %2338 = vmatpush1.bf16.msra.mxu0 0
    %2339 = vmatprep.mubr.bf16.mxu0 0
    %2340 = vmatmul.mubr.bf16.gmra.mrb[0].mxu0 %v2302
    %v2341 = vpop.f32.mrb[0].mxu0
    %v2342 = vadd.f32 0.0, %v2341
    %v2343 = vpop.f32.mrb[0].mxu0
    %v2344 = vpop.f32.mrb[0].mxu0
    %v2345 = vpop.f32.mrb[0].mxu0
    %2346 = vdwg.mxu0
    %2349 = vrot.lane.b32.xlu0 %v1850, 8
    %v2350 = vpop.permute.xlu0 %2349
    %2351 = vrot.lane.b32.xlu0 %v1898, 8
    %v2352 = vpop.permute.xlu0 %2351
    %2357 = vrot.lane.b32.xlu0 %v2072, 16
    %v2358 = vpop.permute.xlu0 %2357
    %2359 = vrot.lane.b32.xlu0 %v2120, 16
    %v2360 = vpop.permute.xlu0 %2359
    %2365 = vrot.lane.b32.xlu0 %v2294, 24
    %v2366 = vpop.permute.xlu0 %2365
    %2367 = vrot.lane.b32.xlu0 %v2342, 24
    %v2368 = vpop.permute.xlu0 %2367
    %v2371 = vsel %vm179, %v1628, %v2350
    %v2372 = vsel %vm179, %v1676, %v2352
    %v2373 = vsel %vm1089, %v2371, %v2358
    %v2374 = vsel %vm1089, %v2372, %v2360
    %v2375 = vsel %vm1092, %v2373, %v2366
    %v2376 = vsel %vm1092, %v2374, %v2368
    %v2377 = vpack.c.bf16 %v2376, %v2375
    %s2378 = scalar_lea.vmem %s3, 16
    %v2379 = vld [vmem:[%s2378] sm:$0xf]
    %v2380 = vld [vmem:[%s2378 + $0x4] sm:$0xf]
    %v2381 = vld [vmem:[%s2378 + $0x8] sm:$0xf]
    %v2382 = vld [vmem:[%s2378 + $0xc] sm:$0xf]
    %v2383 = vlaneseq
    %v2384 = vshrl.u32 %v2383, 7
    %v2385 = vsub.s32 2, %v2384
    %v2386 = vrot.slane %v1352, %v2385
    %v2391 = vunpack.c.l.b16 %v2379
    %v2392 = vunpack.c.l.b16 %v2380
    %v2393 = vunpack.c.l.b16 %v2381
    %v2394 = vunpack.c.l.b16 %v2382
    %v2395 = vpack.c.b16 %v2392, %v2391
    %v2396 = vpack.c.b16 %v2394, %v2393
    %v2400 = vsel %vm66, %v2377, 0
    %2402 = vmatprep.subr.bf16.mxu0 0
    %2403 = vmatpush1.bf16.msra.mxu0 %v2395
    %2404 = vmatprep.subr.bf16.mxu0 0
    %2405 = vmatpush1.bf16.msra.mxu0 %v2396
    %2406 = vmatprep.subr.bf16.mxu0 0
    %2407 = vmatpush1.bf16.msra.mxu0 0
    %2408 = vmatprep.subr.bf16.mxu0 0
    %2409 = vmatpush1.bf16.msra.mxu0 0
    %2410 = vmatprep.subr.bf16.mxu0 0
    %2411 = vmatpush1.bf16.msra.mxu0 0
    %2412 = vmatprep.subr.bf16.mxu0 0
    %2413 = vmatpush1.bf16.msra.mxu0 0
    %2414 = vmatprep.subr.bf16.mxu0 0
    %2415 = vmatpush1.bf16.msra.mxu0 0
    %2416 = vmatprep.subr.bf16.mxu0 0
    %2417 = vmatpush1.bf16.msra.mxu0 0
    %2418 = vmatprep.subr.bf16.mxu0 0
    %2419 = vmatpush1.bf16.msra.mxu0 0
    %2420 = vmatprep.subr.bf16.mxu0 0
    %2421 = vmatpush1.bf16.msra.mxu0 0
    %2422 = vmatprep.subr.bf16.mxu0 0
    %2423 = vmatpush1.bf16.msra.mxu0 0
    %2424 = vmatprep.subr.bf16.mxu0 0
    %2425 = vmatpush1.bf16.msra.mxu0 0
    %2426 = vmatprep.subr.bf16.mxu0 0
    %2427 = vmatpush1.bf16.msra.mxu0 0
    %2428 = vmatprep.subr.bf16.mxu0 0
    %2429 = vmatpush1.bf16.msra.mxu0 0
    %2430 = vmatprep.subr.bf16.mxu0 0
    %2431 = vmatpush1.bf16.msra.mxu0 0
    %2432 = vmatprep.subr.bf16.mxu0 0
    %2433 = vmatpush1.bf16.msra.mxu0 0
    %2434 = vmatprep.mubr.bf16.mxu0 0
    %2435 = vmatmul.mubr.bf16.gmra.mrb[0].mxu0 %v2400
    %v2436 = vpop.f32.mrb[0].mxu0
    %v2437 = vadd.f32 %v2386, %v2436
    %v2438 = vpop.f32.mrb[0].mxu0
    %v2439 = vpop.f32.mrb[0].mxu0
    %v2440 = vadd.f32 %v2386, %v2439
    %v2441 = vpop.f32.mrb[0].mxu0
    %2442 = vdwg.mxu0
    %v2443 = vadd.f32 %v1349, %v2437
    %v2444 = vadd.f32 %v1350, %v2440
    %v2445 = vsel %vm66, %v2443, 0.0
    %2446 = vadd.xlane.f32.xlu0 %v2445
    %v2447 = vpop.xlane.xlu0 %2446
    %v2448 = vsel %vm66, %v2444, 0.0
    %2449 = vadd.xlane.f32.xlu0 %v2448
    %v2450 = vpop.xlane.xlu0 %2449
    %v2451 = vmul.f32 %v2447, %v73
    %v2452 = vmul.f32 %v2450, %v73
    %v2453 = vsub.f32 %v2443, %v2451
    %v2454 = vsub.f32 %v2444, %v2452
    %v2455 = vmul.f32 %v2453, %v2453
    %v2456 = vmul.f32 %v2454, %v2454
    %v2457 = vsel %vm66, %v2455, 0.0
    %2458 = vadd.xlane.f32.xlu0 %v2457
    %v2459 = vpop.xlane.xlu0 %2458
    %v2460 = vsel %vm66, %v2456, 0.0
    %2461 = vadd.xlane.f32.xlu0 %v2460
    %v2462 = vpop.xlane.xlu0 %2461
    %v2463 = vmul.f32 %v2459, %v73
    %v2464 = vmul.f32 %v2462, %v73
    %v2465 = vadd.f32 %v2463, 1e-06
    %v2466 = vadd.f32 %v2464, 1e-06
    %v2467 = vrsqrt.pop %v2465
    %v2468 = vrsqrt.pop %v2466
    %v2469 = vmul.f32 %v2453, %v2467
    %v2470 = vmul.f32 %v2454, %v2468
    %v2471 = vlaneseq
    %v2472 = vshrl.u32 %v2471, 7
    %v2473 = vsub.s32 6, %v2472
    %v2474 = vrot.slane %v1352, %v2473
    %v2475 = vmul.f32 %v2469, %v2474
    %v2476 = vmul.f32 %v2470, %v2474
    %v2477 = vlaneseq
    %v2478 = vshrl.u32 %v2477, 7
    %v2479 = vsub.s32 7, %v2478
    %v2480 = vrot.slane %v1352, %v2479
    %v2481 = vadd.f32 %v2475, %v2480
    %v2482 = vadd.f32 %v2476, %v2480
    %v2483 = vpack.c.bf16 %v2482, %v2481
    %s2484 = scalar_lea.vmem %s4, 16
    %v2485 = vld [vmem:[%s2484] sm:$0xf]
    %v2486 = vld [vmem:[%s2484 + $0x4] sm:$0xf]
    %v2487 = vld [vmem:[%s2484 + $0x8] sm:$0xf]
    %v2488 = vld [vmem:[%s2484 + $0xc] sm:$0xf]
    %v2489 = vlaneseq
    %v2490 = vshrl.u32 %v2489, 7
    %v2491 = vsub.s32 1, %v2490
    %v2492 = vrot.slane %v1352, %v2491
    %v2497 = vunpack.c.l.b16 %v2485
    %v2498 = vunpack.c.l.b16 %v2486
    %v2499 = vunpack.c.l.b16 %v2487
    %v2500 = vunpack.c.l.b16 %v2488
    %v2501 = vpack.c.b16 %v2498, %v2497
    %v2502 = vpack.c.b16 %v2500, %v2499
    %v2506 = vsel %vm66, %v2483, 0
    %2508 = vmatprep.subr.bf16.mxu0 0
    %2509 = vmatpush1.bf16.msra.mxu0 %v2501
    %2510 = vmatprep.subr.bf16.mxu0 0
    %2511 = vmatpush1.bf16.msra.mxu0 %v2502
    %2512 = vmatprep.subr.bf16.mxu0 0
    %2513 = vmatpush1.bf16.msra.mxu0 0
    %2514 = vmatprep.subr.bf16.mxu0 0
    %2515 = vmatpush1.bf16.msra.mxu0 0
    %2516 = vmatprep.subr.bf16.mxu0 0
    %2517 = vmatpush1.bf16.msra.mxu0 0
    %2518 = vmatprep.subr.bf16.mxu0 0
    %2519 = vmatpush1.bf16.msra.mxu0 0
    %2520 = vmatprep.subr.bf16.mxu0 0
    %2521 = vmatpush1.bf16.msra.mxu0 0
    %2522 = vmatprep.subr.bf16.mxu0 0
    %2523 = vmatpush1.bf16.msra.mxu0 0
    %2524 = vmatprep.subr.bf16.mxu0 0
    %2525 = vmatpush1.bf16.msra.mxu0 0
    %2526 = vmatprep.subr.bf16.mxu0 0
    %2527 = vmatpush1.bf16.msra.mxu0 0
    %2528 = vmatprep.subr.bf16.mxu0 0
    %2529 = vmatpush1.bf16.msra.mxu0 0
    %2530 = vmatprep.subr.bf16.mxu0 0
    %2531 = vmatpush1.bf16.msra.mxu0 0
    %2532 = vmatprep.subr.bf16.mxu0 0
    %2533 = vmatpush1.bf16.msra.mxu0 0
    %2534 = vmatprep.subr.bf16.mxu0 0
    %2535 = vmatpush1.bf16.msra.mxu0 0
    %2536 = vmatprep.subr.bf16.mxu0 0
    %2537 = vmatpush1.bf16.msra.mxu0 0
    %2538 = vmatprep.subr.bf16.mxu0 0
    %2539 = vmatpush1.bf16.msra.mxu0 0
    %2540 = vmatprep.mubr.bf16.mxu0 0
    %2541 = vmatmul.mubr.bf16.gmra.mrb[0].mxu0 %v2506
    %v2542 = vpop.f32.mrb[0].mxu0
    %v2543 = vadd.f32 %v2492, %v2542
    %v2544 = vpop.f32.mrb[0].mxu0
    %v2545 = vpop.f32.mrb[0].mxu0
    %v2546 = vadd.f32 %v2492, %v2545
    %v2547 = vpop.f32.mrb[0].mxu0
    %2548 = vdwg.mxu0
    %v2549 = vmax.f32 %v2543, 0.0
    %v2550 = vmax.f32 %v2546, 0.0
    %v2551 = vpack.c.bf16 %v2550, %v2549
    %s2552 = scalar_lea.vmem %s5, 32
    %v2553 = vld [vmem:[%s2552] sm:$0xf]
    %v2554 = vld [vmem:[%s2552 + $0x4] sm:$0xf]
    %v2555 = vld [vmem:[%s2552 + $0x8] sm:$0xf]
    %v2556 = vld [vmem:[%s2552 + $0xc] sm:$0xf]
    %v2557 = vld [vmem:[%s2552 + $0x10] sm:$0xf]
    %v2558 = vld [vmem:[%s2552 + $0x14] sm:$0xf]
    %v2559 = vld [vmem:[%s2552 + $0x18] sm:$0xf]
    %v2560 = vld [vmem:[%s2552 + $0x1c] sm:$0xf]
    %v2561 = vlaneseq
    %v2562 = vshrl.u32 %v2561, 7
    %v2563 = vsub.s32 3, %v2562
    %v2564 = vrot.slane %v1352, %v2563
    %v2573 = vunpack.c.l.b16 %v2553
    %v2574 = vunpack.c.l.b16 %v2554
    %v2575 = vunpack.c.l.b16 %v2555
    %v2576 = vunpack.c.l.b16 %v2556
    %v2577 = vunpack.c.l.b16 %v2557
    %v2578 = vunpack.c.l.b16 %v2558
    %v2579 = vunpack.c.l.b16 %v2559
    %v2580 = vunpack.c.l.b16 %v2560
    %v2581 = vpack.c.b16 %v2574, %v2573
    %v2582 = vpack.c.b16 %v2576, %v2575
    %v2583 = vpack.c.b16 %v2578, %v2577
    %v2584 = vpack.c.b16 %v2580, %v2579
    %v2590 = vsel %vm1304, %v2551, 0
    %2592 = vmatprep.subr.bf16.mxu0 0
    %2593 = vmatpush1.bf16.msra.mxu0 %v2581
    %2594 = vmatprep.subr.bf16.mxu0 0
    %2595 = vmatpush1.bf16.msra.mxu0 %v2582
    %2596 = vmatprep.subr.bf16.mxu0 0
    %2597 = vmatpush1.bf16.msra.mxu0 %v2583
    %2598 = vmatprep.subr.bf16.mxu0 0
    %2599 = vmatpush1.bf16.msra.mxu0 %v2584
    %2600 = vmatprep.subr.bf16.mxu0 0
    %2601 = vmatpush1.bf16.msra.mxu0 0
    %2602 = vmatprep.subr.bf16.mxu0 0
    %2603 = vmatpush1.bf16.msra.mxu0 0
    %2604 = vmatprep.subr.bf16.mxu0 0
    %2605 = vmatpush1.bf16.msra.mxu0 0
    %2606 = vmatprep.subr.bf16.mxu0 0
    %2607 = vmatpush1.bf16.msra.mxu0 0
    %2608 = vmatprep.subr.bf16.mxu0 0
    %2609 = vmatpush1.bf16.msra.mxu0 0
    %2610 = vmatprep.subr.bf16.mxu0 0
    %2611 = vmatpush1.bf16.msra.mxu0 0
    %2612 = vmatprep.subr.bf16.mxu0 0
    %2613 = vmatpush1.bf16.msra.mxu0 0
    %2614 = vmatprep.subr.bf16.mxu0 0
    %2615 = vmatpush1.bf16.msra.mxu0 0
    %2616 = vmatprep.subr.bf16.mxu0 0
    %2617 = vmatpush1.bf16.msra.mxu0 0
    %2618 = vmatprep.subr.bf16.mxu0 0
    %2619 = vmatpush1.bf16.msra.mxu0 0
    %2620 = vmatprep.subr.bf16.mxu0 0
    %2621 = vmatpush1.bf16.msra.mxu0 0
    %2622 = vmatprep.subr.bf16.mxu0 0
    %2623 = vmatpush1.bf16.msra.mxu0 0
    %2624 = vmatprep.mubr.bf16.mxu0 0
    %2625 = vmatmul.mubr.bf16.gmra.mrb[0].mxu0 %v2590
    %v2626 = vpop.f32.mrb[0].mxu0
    %v2627 = vadd.f32 %v2564, %v2626
    %v2628 = vpop.f32.mrb[0].mxu0
    %v2629 = vpop.f32.mrb[0].mxu0
    %v2630 = vadd.f32 %v2564, %v2629
    %v2631 = vpop.f32.mrb[0].mxu0
    %2632 = vdwg.mxu0
    %v2633 = vadd.f32 %v2443, %v2627
    %v2634 = vadd.f32 %v2444, %v2630
    %v2635 = vld [vmem:[%s7] sm:$0x1]
    %v2636 = vld [vmem:[%s7 + $0x1] sm:$0x1]
    %v2637 = vsel %vm66, %v2633, 0.0
    %2638 = vadd.xlane.f32.xlu0 %v2637
    %v2639 = vpop.xlane.xlu0 %2638
    %v2640 = vsel %vm66, %v2634, 0.0
    %2641 = vadd.xlane.f32.xlu0 %v2640
    %v2642 = vpop.xlane.xlu0 %2641
    %v2643 = vmul.f32 %v2639, %v73
    %v2644 = vmul.f32 %v2642, %v73
    %v2645 = vsub.f32 %v2633, %v2643
    %v2646 = vsub.f32 %v2634, %v2644
    %v2647 = vmul.f32 %v2645, %v2645
    %v2648 = vmul.f32 %v2646, %v2646
    %v2649 = vsel %vm66, %v2647, 0.0
    %2650 = vadd.xlane.f32.xlu0 %v2649
    %v2651 = vpop.xlane.xlu0 %2650
    %v2652 = vsel %vm66, %v2648, 0.0
    %2653 = vadd.xlane.f32.xlu0 %v2652
    %v2654 = vpop.xlane.xlu0 %2653
    %v2655 = vmul.f32 %v2651, %v73
    %v2656 = vmul.f32 %v2654, %v73
    %v2657 = vadd.f32 %v2655, 1e-06
    %v2658 = vadd.f32 %v2656, 1e-06
    %v2659 = vrsqrt.pop %v2657
    %v2660 = vrsqrt.pop %v2658
    %v2661 = vmul.f32 %v2645, %v2659
    %v2662 = vmul.f32 %v2646, %v2660
    %v2663 = vlaneseq
    %v2664 = vshrl.u32 %v2663, 7
    %v2665 = vsub.s32 0, %v2664
    %v2666 = vrot.slane %v2635, %v2665
    %v2667 = vmul.f32 %v2661, %v2666
    %v2668 = vmul.f32 %v2662, %v2666
    %v2669 = vlaneseq
    %v2670 = vshrl.u32 %v2669, 7
    %v2671 = vsub.s32 0, %v2670
    %v2672 = vrot.slane %v2636, %v2671
    %v2673 = vadd.f32 %v2667, %v2672
    %v2674 = vadd.f32 %v2668, %v2672
    %2675 = vst.msk [vmem:[#allocation7] sm:$0xff] %vm66, %v2673
    %2676 = vst.msk [vmem:[#allocation7 + $0x8] sm:$0xff] %vm66, %v2674
    // Predicated region
    $region42: #{tpu_custom_call.1} parent=1 // pred_check
      _
    $region43: #{tpu_custom_call.1} parent=1 // pred_check_branch
      %2678 = sbr.rel (0) target = $region45
    $region44: #{tpu_custom_call.1} parent=1 // pred_region
      %s2680 = ssub.s32 256, 256
      %2681 = vsyncadd [#allocation4], %s2680
      %s2682 = sshll.u32 [#allocation7], 4
      %s2683 = int_to_ptr.vmem [resolvable:$true] %s2682
      %2688 = dma.vmem_to_hbm [thread:$0]  %s2683, 256, %s8, [#allocation4], 128, 128, 8
    $region45: #{tpu_custom_call.1} parent=1 // pred_fallthru
      _
    // Predicated region
    $region46: #{tpu_custom_call.1} parent=1 // pred_check
      _
    $region47: #{tpu_custom_call.1} parent=1 // pred_check_branch
      %2690 = sbr.rel (0) target = $region49
    $region48: #{tpu_custom_call.1} parent=1 // pred_region
      %2691 = dma.done [#allocation4], 256
    $region49: #{tpu_custom_call.1} parent=1 // pred_fallthru
      _
    %2692 = vsyncpa [#allocation3], 1
    %2693 = vsyncpa [#allocation6], 1
    %2694 = vsyncpa [#allocation4], 1

</llo_original>
